<compile_context>
chip_gen: v6e
topology: v6e:2x2x1
jax: 0.10.0
libtpu: 0.0.40
codegen_flags: <defaults>
</compile_context>

<pallas_src>
import jax
import jax.numpy as jnp
from jax.experimental import pallas as pl
from jax.experimental.pallas import tpu as pltpu

# ---------------------------------------------------------------------------
# Config (mirrors cfg.input_dim / cfg.para_maps / cfg.depth)
# ---------------------------------------------------------------------------
T = 8
INPUT_DIM = 2 * T          # cfg.input_dim  (2*T channels)
PARA_MAPS = 4              # cfg.para_maps
DEPTH = 2                  # cfg.depth (value not provided; small default)

# TODO(synk): the ed_coder() class body is not provided; it is assumed to be an
# encoder/decoder stack of 1x1 convolutions (a channel-MLP) with ReLU between
# layers and no activation on the last layer of each stack.
ENC_CHANNELS = [128, 64, 16, 16, 8, 8, 8, 4, 4]
DEC_CHANNELS = [4, 4, 8, 8, 8, 16, 16, 64, 128]

MAX_C = 128                # widest channel count -> lane width of the weight slab


def _layer_dims(c_in, c_out, hidden):
    dims = [c_in] + list(hidden) + [c_out]
    return [(dims[i], dims[i + 1]) for i in range(len(dims) - 1)]


def _round8(n):
    return (n + 7) // 8 * 8


def _build_layout(layers, base):
    """Static (row_offset, c_out, c_in) table into the packed weight slab."""
    table, off = [], base
    for (ci, co) in layers:
        table.append((off, co, ci))
        off += _round8(co)      # 8-aligned rows keep in-kernel slices tile-friendly
    return table, off


ENC_LAYERS = _layer_dims(INPUT_DIM, PARA_MAPS, ENC_CHANNELS)
DEC_LAYERS = _layer_dims(PARA_MAPS, INPUT_DIM, DEC_CHANNELS)
ENC_LAYOUT, _ENC_END = _build_layout(ENC_LAYERS, 0)
DEC_LAYOUT, TOTAL_ROWS = _build_layout(DEC_LAYERS, _ENC_END)   # rows per ed_coder
ALL_ROWS = DEPTH * TOTAL_ROWS                                  # rows for full stack


# ---------------------------------------------------------------------------
# Fused depth-stack kernel: DEPTH x (encoder + decoder), channel-major [C, P]
# ---------------------------------------------------------------------------
def _ed_stack_kernel(x_ref, w_ref, b_ref, xrec_ref, xmap_ref):
    """x_ref:    [1, INPUT_DIM, TILE_P]           f32 input tile
       w_ref:    [ALL_ROWS, MAX_C]                bf16 packed weights (pre-transposed)
       b_ref:    [ALL_ROWS, 1]                    f32 packed biases
       xrec_ref: [1, INPUT_DIM, TILE_P]           f32 reconstruction (last depth)
       xmap_ref: [DEPTH, 1, PARA_MAPS, TILE_P]    f32 per-depth parameter maps"""

    def chain(h_bf16, layout, base):
        out = None
        n = len(layout)
        for li, (off, c_out, c_in) in enumerate(layout):
            row = base + off                                  # static, 8-aligned
            wt = w_ref[pl.ds(row, c_out), pl.ds(0, c_in)]     # bf16 [c_out, c_in]
            b = b_ref[pl.ds(row, c_out), :]                   # f32  [c_out, 1]
            out = jnp.dot(wt, h_bf16,
                          preferred_element_type=jnp.float32) + b
            if li < n - 1:                                    # ReLU between layers
                h_bf16 = jnp.maximum(out, 0.0).astype(jnp.bfloat16)
        return out                                            # f32, no final act

    h = x_ref[0].astype(jnp.bfloat16)                         # [INPUT_DIM, TILE_P]
    recon = None
    for d in range(DEPTH):
        base = d * TOTAL_ROWS
        bottleneck = chain(h, ENC_LAYOUT, base)               # [PARA_MAPS, TILE_P]
        xmap_ref[d, 0] = bottleneck.astype(xmap_ref.dtype)
        recon = chain(bottleneck.astype(jnp.bfloat16), DEC_LAYOUT, base)
        # TODO(synk): cp_list[d] (CP_lowrank) and dc_list[d] (data consistency)
        # are constructor-injected modules whose definitions are not provided;
        # x passes through to the next depth unchanged.
        h = recon.astype(jnp.bfloat16)
    xrec_ref[0] = recon.astype(xrec_ref.dtype)                # [INPUT_DIM, TILE_P]


def _choose_tile(hw):
    for t in (256, 128):        # bf16 activations keep TILE_P=256 spill-free
        if hw % t == 0:
            return t, 0
    return 128, (-hw) % 128     # ragged fallback (not taken in the demo)


def ed_stack_forward(x_nchw, w_all, b_all):
    """Full ed_coder stack: NCHW in -> (x_recon NCHW, x_map [DEPTH,B,Pm,H,W])."""
    B, C, H, W = x_nchw.shape
    assert C == INPUT_DIM
    hw = H * W
    tile, pad = _choose_tile(hw)
    x3 = x_nchw.reshape(B, C, hw)                 # free reshape, stays channel-major
    if pad:
        x3 = jnp.pad(x3, ((0, 0), (0, 0), (0, pad)))
    hwp = hw + pad

    xrec3, xmap4 = pl.pallas_call(
        _ed_stack_kernel,
        out_shape=(
            jax.ShapeDtypeStruct((B, INPUT_DIM, hwp), jnp.float32),
            jax.ShapeDtypeStruct((DEPTH, B, PARA_MAPS, hwp), jnp.float32),
        ),
        grid_spec=pltpu.PrefetchScalarGridSpec(
            num_scalar_prefetch=0,
            grid=(B, hwp // tile),                # fully parallel grid
            in_specs=[
                pl.BlockSpec((1, INPUT_DIM, tile), lambda b, p: (b, 0, p)),
                pl.BlockSpec((ALL_ROWS, MAX_C), lambda b, p: (0, 0)),
                pl.BlockSpec((ALL_ROWS, 1), lambda b, p: (0, 0)),
            ],
            out_specs=[
                pl.BlockSpec((1, INPUT_DIM, tile), lambda b, p: (b, 0, p)),
                pl.BlockSpec((DEPTH, 1, PARA_MAPS, tile), lambda b, p: (0, b, 0, p)),
            ],
        ),
        compiler_params=pltpu.CompilerParams(
            dimension_semantics=("parallel", "parallel")),
    )(x3, w_all, b_all)

    if pad:
        xrec3 = xrec3[..., :hw]
        xmap4 = xmap4[..., :hw]
    return (xrec3.reshape(B, INPUT_DIM, H, W),
            xmap4.reshape(DEPTH, B, PARA_MAPS, H, W))


# ---------------------------------------------------------------------------
# final_map: Sequential(conv1x1(groups=Pm), BN, ELU) x2, conv1x1(groups=Pm),
# Softmax(dim=0).  Tiny (~4K elements) and couples across the depth*batch axis
# via Softmax(dim=0) -> plain JAX glue.
# ---------------------------------------------------------------------------
def _final_map(x_map, fp):
    # Grouped 1x1 convs with groups == channels are per-channel scale + bias.
    # BatchNorm2d evaluated in inference mode with initialized parameters
    # (weight=1, bias=0, running_mean=0, running_var=1).
    h = x_map
    inv_std = 1.0 / jnp.sqrt(1.0 + 1e-5)
    for i in range(3):
        w = fp["conv_w"][i][None, :, None, None]
        b = fp["conv_b"][i][None, :, None, None]
        h = h * w + b
        if i < 2:
            h = h * inv_std                          # BatchNorm2d (eval, init stats)
            h = jnp.where(h > 0, h, jnp.expm1(h))    # ELU(alpha=1)
    return jax.nn.softmax(h, axis=0)


# ---------------------------------------------------------------------------
# TLR_BM_NET.forward
# ---------------------------------------------------------------------------
def tlr_bm_net_forward(atb, ed_params, final_params):
    x = atb * 1.0
    w_all, b_all = ed_params
    x, xmap_d = ed_stack_forward(x, w_all, b_all)    # fused Pallas kernel
    B = atb.shape[0]
    # torch.cat(out_map, dim=0) is depth-major: [d0 batch..., d1 batch...]
    x_map = xmap_d.reshape(DEPTH * B, PARA_MAPS, *atb.shape[2:])
    ata_x = []  # TODO(synk): dc() (data-consistency) definition not provided; ata_x left empty.
    weight_map = _final_map(x_map, final_params)     # softmax over dim 0
    x_map = jnp.sum(x_map * weight_map, axis=0, keepdims=True)
    return x, x_map, ata_x


# ---------------------------------------------------------------------------
# Deterministic parameter construction
# ---------------------------------------------------------------------------
def _init_packed_params(key):
    """Pack all DEPTH ed_coders' layer weights (pre-transposed [c_out, c_in],
    bf16) and biases (f32) into two slabs."""
    w_buf = jnp.zeros((ALL_ROWS, MAX_C), jnp.float32)
    b_buf = jnp.zeros((ALL_ROWS, 1), jnp.float32)
    for d in range(DEPTH):
        base = d * TOTAL_ROWS
        for (off, c_out, c_in) in ENC_LAYOUT + DEC_LAYOUT:
            key, sub = jax.random.split(key)
            # torch trunc_normal_(std=0.02) truncates at |x|<=2 (=100 sigma), i.e.
            # effectively an untruncated N(0, 0.02^2).
            w = 0.02 * jax.random.normal(sub, (c_out, c_in), dtype=jnp.float32)
            w_buf = w_buf.at[base + off:base + off + c_out, :c_in].set(w)
            # conv biases are zero-initialized (constant_(bias, 0))
    return w_buf.astype(jnp.bfloat16), b_buf, key


def _init_final_params(key):
    conv_w, conv_b = [], []
    for _ in range(3):
        key, sub = jax.random.split(key)
        conv_w.append(0.02 * jax.random.normal(sub, (PARA_MAPS,), dtype=jnp.float32))
        conv_b.append(jnp.zeros((PARA_MAPS,), dtype=jnp.float32))
    return {"conv_w": conv_w, "conv_b": conv_b}, key


if __name__ == "__main__":
    key = jax.random.PRNGKey(0)

    batch, Nx, Ny = 2, 16, 16
    key, sub = jax.random.split(key)
    atb = jax.random.normal(sub, (batch, INPUT_DIM, Nx, Ny), dtype=jnp.float32)

    w_all, b_all, key = _init_packed_params(key)
    final_params, key = _init_final_params(key)

    fwd = jax.jit(tlr_bm_net_forward)
    x, x_map, ata_x = fwd(atb, (w_all, b_all), final_params)
    jax.block_until_ready((x, x_map))

    assert x.shape == (batch, INPUT_DIM, Nx, Ny)
    assert x_map.shape == (1, PARA_MAPS, Nx, Ny)
    print("KERNEL_OK")
</pallas_src>

<mosaic_0001>
module attributes {stable_mosaic.version = 11 : i64} {
  func.func @_ed_stack_kernel(%arg0: i32, %arg1: i32, %arg2: memref<1x16x256xf32, #tpu.memory_space<vmem>>, %arg3: memref<1104x128xbf16, #tpu.memory_space<vmem>>, %arg4: memref<1104x1xf32, #tpu.memory_space<vmem>>, %arg5: memref<1x16x256xf32, #tpu.memory_space<vmem>>, %arg6: memref<2x1x4x256xf32, #tpu.memory_space<vmem>>) attributes {dimension_semantics = [#tpu.dimension_semantics<parallel>, #tpu.dimension_semantics<parallel>], iteration_bounds = array<i64: 2, 1>, scalar_prefetch = 0 : i64, scratch_operands = 0 : i64, tpu.core_type = #tpu.core_type<tc>, window_params = [{transform_indices = @transform_0, window_bounds = array<i64: 1, 16, 256>}, {pipeline_mode = #tpu.pipeline_mode<synchronous>, transform_indices = @transform_1, window_bounds = array<i64: 1104, 128>}, {pipeline_mode = #tpu.pipeline_mode<synchronous>, transform_indices = @transform_2, window_bounds = array<i64: 1104, 1>}, {transform_indices = @transform_3, window_bounds = array<i64: 1, 16, 256>}, {transform_indices = @transform_4, window_bounds = array<i64: 2, 1, 4, 256>}]} {
    %c0 = arith.constant 0 : index
    %c0_0 = arith.constant 0 : index
    %c0_1 = arith.constant 0 : index
    %0 = vector.load %arg2[%c0, %c0_0, %c0_1] : memref<1x16x256xf32, #tpu.memory_space<vmem>>, vector<1x16x256xf32>
    %1 = vector.shape_cast %0 : vector<1x16x256xf32> to vector<16x256xf32>
    %2 = arith.truncf %1 : vector<16x256xf32> to vector<16x256xbf16>
    %c0_2 = arith.constant 0 : index
    %c0_3 = arith.constant 0 : index
    %3 = vector.load %arg3[%c0_2, %c0_3] : memref<1104x128xbf16, #tpu.memory_space<vmem>>, vector<128x16xbf16>
    %c0_4 = arith.constant 0 : index
    %c0_5 = arith.constant 0 : index
    %4 = vector.load %arg4[%c0_4, %c0_5] : memref<1104x1xf32, #tpu.memory_space<vmem>>, vector<128x1xf32>
    %cst = arith.constant dense<0.000000e+00> : vector<128x256xf32>
    %5 = tpu.matmul %3, %2, %cst {dimension_numbers = #tpu.dot_dimension_numbers<[1], [0], [0], [1], [0, 0, 1, 1], [], []>} : vector<128x16xbf16>, vector<16x256xbf16>, vector<128x256xf32> -> vector<128x256xf32>
    %6 = vector.broadcast %4 : vector<128x1xf32> to vector<128x256xf32>
    %7 = arith.addf %5, %6 : vector<128x256xf32>
    %cst_6 = arith.constant 0.000000e+00 : f32
    %8 = vector.broadcast %cst_6 : f32 to vector<128x256xf32>
    %9 = arith.maximumf %7, %8 : vector<128x256xf32>
    %10 = arith.truncf %9 : vector<128x256xf32> to vector<128x256xbf16>
    %c128 = arith.constant 128 : index
    %c0_7 = arith.constant 0 : index
    %11 = vector.load %arg3[%c128, %c0_7] : memref<1104x128xbf16, #tpu.memory_space<vmem>>, vector<64x128xbf16>
    %c128_8 = arith.constant 128 : index
    %c0_9 = arith.constant 0 : index
    %12 = vector.load %arg4[%c128_8, %c0_9] : memref<1104x1xf32, #tpu.memory_space<vmem>>, vector<64x1xf32>
    %cst_10 = arith.constant dense<0.000000e+00> : vector<64x256xf32>
    %13 = tpu.matmul %11, %10, %cst_10 {dimension_numbers = #tpu.dot_dimension_numbers<[1], [0], [0], [1], [0, 0, 1, 1], [], []>} : vector<64x128xbf16>, vector<128x256xbf16>, vector<64x256xf32> -> vector<64x256xf32>
    %14 = vector.broadcast %12 : vector<64x1xf32> to vector<64x256xf32>
    %15 = arith.addf %13, %14 : vector<64x256xf32>
    %cst_11 = arith.constant 0.000000e+00 : f32
    %16 = vector.broadcast %cst_11 : f32 to vector<64x256xf32>
    %17 = arith.maximumf %15, %16 : vector<64x256xf32>
    %18 = arith.truncf %17 : vector<64x256xf32> to vector<64x256xbf16>
    %c192 = arith.constant 192 : index
    %c0_12 = arith.constant 0 : index
    %19 = vector.load %arg3[%c192, %c0_12] : memref<1104x128xbf16, #tpu.memory_space<vmem>>, vector<16x64xbf16>
    %c192_13 = arith.constant 192 : index
    %c0_14 = arith.constant 0 : index
    %20 = vector.load %arg4[%c192_13, %c0_14] : memref<1104x1xf32, #tpu.memory_space<vmem>>, vector<16x1xf32>
    %cst_15 = arith.constant dense<0.000000e+00> : vector<16x256xf32>
    %21 = tpu.matmul %19, %18, %cst_15 {dimension_numbers = #tpu.dot_dimension_numbers<[1], [0], [0], [1], [0, 0, 1, 1], [], []>} : vector<16x64xbf16>, vector<64x256xbf16>, vector<16x256xf32> -> vector<16x256xf32>
    %22 = vector.broadcast %20 : vector<16x1xf32> to vector<16x256xf32>
    %23 = arith.addf %21, %22 : vector<16x256xf32>
    %cst_16 = arith.constant 0.000000e+00 : f32
    %24 = vector.broadcast %cst_16 : f32 to vector<16x256xf32>
    %25 = arith.maximumf %23, %24 : vector<16x256xf32>
    %26 = arith.truncf %25 : vector<16x256xf32> to vector<16x256xbf16>
    %c208 = arith.constant 208 : index
    %c0_17 = arith.constant 0 : index
    %27 = vector.load %arg3[%c208, %c0_17] : memref<1104x128xbf16, #tpu.memory_space<vmem>>, vector<16x16xbf16>
    %c208_18 = arith.constant 208 : index
    %c0_19 = arith.constant 0 : index
    %28 = vector.load %arg4[%c208_18, %c0_19] : memref<1104x1xf32, #tpu.memory_space<vmem>>, vector<16x1xf32>
    %cst_20 = arith.constant dense<0.000000e+00> : vector<16x256xf32>
    %29 = tpu.matmul %27, %26, %cst_20 {dimension_numbers = #tpu.dot_dimension_numbers<[1], [0], [0], [1], [0, 0, 1, 1], [], []>} : vector<16x16xbf16>, vector<16x256xbf16>, vector<16x256xf32> -> vector<16x256xf32>
    %30 = vector.broadcast %28 : vector<16x1xf32> to vector<16x256xf32>
    %31 = arith.addf %29, %30 : vector<16x256xf32>
    %cst_21 = arith.constant 0.000000e+00 : f32
    %32 = vector.broadcast %cst_21 : f32 to vector<16x256xf32>
    %33 = arith.maximumf %31, %32 : vector<16x256xf32>
    %34 = arith.truncf %33 : vector<16x256xf32> to vector<16x256xbf16>
    %c224 = arith.constant 224 : index
    %c0_22 = arith.constant 0 : index
    %35 = vector.load %arg3[%c224, %c0_22] : memref<1104x128xbf16, #tpu.memory_space<vmem>>, vector<8x16xbf16>
    %c224_23 = arith.constant 224 : index
    %c0_24 = arith.constant 0 : index
    %36 = vector.load %arg4[%c224_23, %c0_24] : memref<1104x1xf32, #tpu.memory_space<vmem>>, vector<8x1xf32>
    %cst_25 = arith.constant dense<0.000000e+00> : vector<8x256xf32>
    %37 = tpu.matmul %35, %34, %cst_25 {dimension_numbers = #tpu.dot_dimension_numbers<[1], [0], [0], [1], [0, 0, 1, 1], [], []>} : vector<8x16xbf16>, vector<16x256xbf16>, vector<8x256xf32> -> vector<8x256xf32>
    %38 = vector.broadcast %36 : vector<8x1xf32> to vector<8x256xf32>
    %39 = arith.addf %37, %38 : vector<8x256xf32>
    %cst_26 = arith.constant 0.000000e+00 : f32
    %40 = vector.broadcast %cst_26 : f32 to vector<8x256xf32>
    %41 = arith.maximumf %39, %40 : vector<8x256xf32>
    %42 = arith.truncf %41 : vector<8x256xf32> to vector<8x256xbf16>
    %c232 = arith.constant 232 : index
    %c0_27 = arith.constant 0 : index
    %43 = vector.load %arg3[%c232, %c0_27] : memref<1104x128xbf16, #tpu.memory_space<vmem>>, vector<8x8xbf16>
    %c232_28 = arith.constant 232 : index
    %c0_29 = arith.constant 0 : index
    %44 = vector.load %arg4[%c232_28, %c0_29] : memref<1104x1xf32, #tpu.memory_space<vmem>>, vector<8x1xf32>
    %cst_30 = arith.constant dense<0.000000e+00> : vector<8x256xf32>
    %45 = tpu.matmul %43, %42, %cst_30 {dimension_numbers = #tpu.dot_dimension_numbers<[1], [0], [0], [1], [0, 0, 1, 1], [], []>} : vector<8x8xbf16>, vector<8x256xbf16>, vector<8x256xf32> -> vector<8x256xf32>
    %46 = vector.broadcast %44 : vector<8x1xf32> to vector<8x256xf32>
    %47 = arith.addf %45, %46 : vector<8x256xf32>
    %cst_31 = arith.constant 0.000000e+00 : f32
    %48 = vector.broadcast %cst_31 : f32 to vector<8x256xf32>
    %49 = arith.maximumf %47, %48 : vector<8x256xf32>
    %50 = arith.truncf %49 : vector<8x256xf32> to vector<8x256xbf16>
    %c240 = arith.constant 240 : index
    %c0_32 = arith.constant 0 : index
    %51 = vector.load %arg3[%c240, %c0_32] : memref<1104x128xbf16, #tpu.memory_space<vmem>>, vector<8x8xbf16>
    %c240_33 = arith.constant 240 : index
    %c0_34 = arith.constant 0 : index
    %52 = vector.load %arg4[%c240_33, %c0_34] : memref<1104x1xf32, #tpu.memory_space<vmem>>, vector<8x1xf32>
    %cst_35 = arith.constant dense<0.000000e+00> : vector<8x256xf32>
    %53 = tpu.matmul %51, %50, %cst_35 {dimension_numbers = #tpu.dot_dimension_numbers<[1], [0], [0], [1], [0, 0, 1, 1], [], []>} : vector<8x8xbf16>, vector<8x256xbf16>, vector<8x256xf32> -> vector<8x256xf32>
    %54 = vector.broadcast %52 : vector<8x1xf32> to vector<8x256xf32>
    %55 = arith.addf %53, %54 : vector<8x256xf32>
    %cst_36 = arith.constant 0.000000e+00 : f32
    %56 = vector.broadcast %cst_36 : f32 to vector<8x256xf32>
    %57 = arith.maximumf %55, %56 : vector<8x256xf32>
    %58 = arith.truncf %57 : vector<8x256xf32> to vector<8x256xbf16>
    %c248 = arith.constant 248 : index
    %c0_37 = arith.constant 0 : index
    %59 = vector.load %arg3[%c248, %c0_37] : memref<1104x128xbf16, #tpu.memory_space<vmem>>, vector<4x8xbf16>
    %c248_38 = arith.constant 248 : index
    %c0_39 = arith.constant 0 : index
    %60 = vector.load %arg4[%c248_38, %c0_39] : memref<1104x1xf32, #tpu.memory_space<vmem>>, vector<4x1xf32>
    %cst_40 = arith.constant dense<0.000000e+00> : vector<4x256xf32>
    %61 = tpu.matmul %59, %58, %cst_40 {dimension_numbers = #tpu.dot_dimension_numbers<[1], [0], [0], [1], [0, 0, 1, 1], [], []>} : vector<4x8xbf16>, vector<8x256xbf16>, vector<4x256xf32> -> vector<4x256xf32>
    %62 = vector.broadcast %60 : vector<4x1xf32> to vector<4x256xf32>
    %63 = arith.addf %61, %62 : vector<4x256xf32>
    %cst_41 = arith.constant 0.000000e+00 : f32
    %64 = vector.broadcast %cst_41 : f32 to vector<4x256xf32>
    %65 = arith.maximumf %63, %64 : vector<4x256xf32>
    %66 = arith.truncf %65 : vector<4x256xf32> to vector<4x256xbf16>
    %c256 = arith.constant 256 : index
    %c0_42 = arith.constant 0 : index
    %67 = vector.load %arg3[%c256, %c0_42] : memref<1104x128xbf16, #tpu.memory_space<vmem>>, vector<4x4xbf16>
    %c256_43 = arith.constant 256 : index
    %c0_44 = arith.constant 0 : index
    %68 = vector.load %arg4[%c256_43, %c0_44] : memref<1104x1xf32, #tpu.memory_space<vmem>>, vector<4x1xf32>
    %cst_45 = arith.constant dense<0.000000e+00> : vector<4x256xf32>
    %69 = tpu.matmul %67, %66, %cst_45 {dimension_numbers = #tpu.dot_dimension_numbers<[1], [0], [0], [1], [0, 0, 1, 1], [], []>} : vector<4x4xbf16>, vector<4x256xbf16>, vector<4x256xf32> -> vector<4x256xf32>
    %70 = vector.broadcast %68 : vector<4x1xf32> to vector<4x256xf32>
    %71 = arith.addf %69, %70 : vector<4x256xf32>
    %cst_46 = arith.constant 0.000000e+00 : f32
    %72 = vector.broadcast %cst_46 : f32 to vector<4x256xf32>
    %73 = arith.maximumf %71, %72 : vector<4x256xf32>
    %74 = arith.truncf %73 : vector<4x256xf32> to vector<4x256xbf16>
    %c264 = arith.constant 264 : index
    %c0_47 = arith.constant 0 : index
    %75 = vector.load %arg3[%c264, %c0_47] : memref<1104x128xbf16, #tpu.memory_space<vmem>>, vector<4x4xbf16>
    %c264_48 = arith.constant 264 : index
    %c0_49 = arith.constant 0 : index
    %76 = vector.load %arg4[%c264_48, %c0_49] : memref<1104x1xf32, #tpu.memory_space<vmem>>, vector<4x1xf32>
    %cst_50 = arith.constant dense<0.000000e+00> : vector<4x256xf32>
    %77 = tpu.matmul %75, %74, %cst_50 {dimension_numbers = #tpu.dot_dimension_numbers<[1], [0], [0], [1], [0, 0, 1, 1], [], []>} : vector<4x4xbf16>, vector<4x256xbf16>, vector<4x256xf32> -> vector<4x256xf32>
    %78 = vector.broadcast %76 : vector<4x1xf32> to vector<4x256xf32>
    %79 = arith.addf %77, %78 : vector<4x256xf32>
    %c0_51 = arith.constant 0 : index
    %c0_52 = arith.constant 0 : index
    %c0_53 = arith.constant 0 : index
    %c0_54 = arith.constant 0 : index
    %80 = vector.load %arg6[%c0_51, %c0_52, %c0_53, %c0_54] : memref<2x1x4x256xf32, #tpu.memory_space<vmem>>, vector<1x1x4x256xf32>
    %81 = vector.shape_cast %80 : vector<1x1x4x256xf32> to vector<4x256xf32>
    %82 = vector.shape_cast %79 : vector<4x256xf32> to vector<1x1x4x256xf32>
    tpu.vector_store %arg6[%c0_51, %c0_52, %c0_53, %c0_54], %82 {strides = array<i32>} : memref<2x1x4x256xf32, #tpu.memory_space<vmem>>, vector<1x1x4x256xf32>,
    %83 = arith.truncf %79 : vector<4x256xf32> to vector<4x256xbf16>
    %c272 = arith.constant 272 : index
    %c0_55 = arith.constant 0 : index
    %84 = vector.load %arg3[%c272, %c0_55] : memref<1104x128xbf16, #tpu.memory_space<vmem>>, vector<4x4xbf16>
    %c272_56 = arith.constant 272 : index
    %c0_57 = arith.constant 0 : index
    %85 = vector.load %arg4[%c272_56, %c0_57] : memref<1104x1xf32, #tpu.memory_space<vmem>>, vector<4x1xf32>
    %cst_58 = arith.constant dense<0.000000e+00> : vector<4x256xf32>
    %86 = tpu.matmul %84, %83, %cst_58 {dimension_numbers = #tpu.dot_dimension_numbers<[1], [0], [0], [1], [0, 0, 1, 1], [], []>} : vector<4x4xbf16>, vector<4x256xbf16>, vector<4x256xf32> -> vector<4x256xf32>
    %87 = vector.broadcast %85 : vector<4x1xf32> to vector<4x256xf32>
    %88 = arith.addf %86, %87 : vector<4x256xf32>
    %cst_59 = arith.constant 0.000000e+00 : f32
    %89 = vector.broadcast %cst_59 : f32 to vector<4x256xf32>
    %90 = arith.maximumf %88, %89 : vector<4x256xf32>
    %91 = arith.truncf %90 : vector<4x256xf32> to vector<4x256xbf16>
    %c280 = arith.constant 280 : index
    %c0_60 = arith.constant 0 : index
    %92 = vector.load %arg3[%c280, %c0_60] : memref<1104x128xbf16, #tpu.memory_space<vmem>>, vector<4x4xbf16>
    %c280_61 = arith.constant 280 : index
    %c0_62 = arith.constant 0 : index
    %93 = vector.load %arg4[%c280_61, %c0_62] : memref<1104x1xf32, #tpu.memory_space<vmem>>, vector<4x1xf32>
    %cst_63 = arith.constant dense<0.000000e+00> : vector<4x256xf32>
    %94 = tpu.matmul %92, %91, %cst_63 {dimension_numbers = #tpu.dot_dimension_numbers<[1], [0], [0], [1], [0, 0, 1, 1], [], []>} : vector<4x4xbf16>, vector<4x256xbf16>, vector<4x256xf32> -> vector<4x256xf32>
    %95 = vector.broadcast %93 : vector<4x1xf32> to vector<4x256xf32>
    %96 = arith.addf %94, %95 : vector<4x256xf32>
    %cst_64 = arith.constant 0.000000e+00 : f32
    %97 = vector.broadcast %cst_64 : f32 to vector<4x256xf32>
    %98 = arith.maximumf %96, %97 : vector<4x256xf32>
    %99 = arith.truncf %98 : vector<4x256xf32> to vector<4x256xbf16>
    %c288 = arith.constant 288 : index
    %c0_65 = arith.constant 0 : index
    %100 = vector.load %arg3[%c288, %c0_65] : memref<1104x128xbf16, #tpu.memory_space<vmem>>, vector<8x4xbf16>
    %c288_66 = arith.constant 288 : index
    %c0_67 = arith.constant 0 : index
    %101 = vector.load %arg4[%c288_66, %c0_67] : memref<1104x1xf32, #tpu.memory_space<vmem>>, vector<8x1xf32>
    %cst_68 = arith.constant dense<0.000000e+00> : vector<8x256xf32>
    %102 = tpu.matmul %100, %99, %cst_68 {dimension_numbers = #tpu.dot_dimension_numbers<[1], [0], [0], [1], [0, 0, 1, 1], [], []>} : vector<8x4xbf16>, vector<4x256xbf16>, vector<8x256xf32> -> vector<8x256xf32>
    %103 = vector.broadcast %101 : vector<8x1xf32> to vector<8x256xf32>
    %104 = arith.addf %102, %103 : vector<8x256xf32>
    %cst_69 = arith.constant 0.000000e+00 : f32
    %105 = vector.broadcast %cst_69 : f32 to vector<8x256xf32>
    %106 = arith.maximumf %104, %105 : vector<8x256xf32>
    %107 = arith.truncf %106 : vector<8x256xf32> to vector<8x256xbf16>
    %c296 = arith.constant 296 : index
    %c0_70 = arith.constant 0 : index
    %108 = vector.load %arg3[%c296, %c0_70] : memref<1104x128xbf16, #tpu.memory_space<vmem>>, vector<8x8xbf16>
    %c296_71 = arith.constant 296 : index
    %c0_72 = arith.constant 0 : index
    %109 = vector.load %arg4[%c296_71, %c0_72] : memref<1104x1xf32, #tpu.memory_space<vmem>>, vector<8x1xf32>
    %cst_73 = arith.constant dense<0.000000e+00> : vector<8x256xf32>
    %110 = tpu.matmul %108, %107, %cst_73 {dimension_numbers = #tpu.dot_dimension_numbers<[1], [0], [0], [1], [0, 0, 1, 1], [], []>} : vector<8x8xbf16>, vector<8x256xbf16>, vector<8x256xf32> -> vector<8x256xf32>
    %111 = vector.broadcast %109 : vector<8x1xf32> to vector<8x256xf32>
    %112 = arith.addf %110, %111 : vector<8x256xf32>
    %cst_74 = arith.constant 0.000000e+00 : f32
    %113 = vector.broadcast %cst_74 : f32 to vector<8x256xf32>
    %114 = arith.maximumf %112, %113 : vector<8x256xf32>
    %115 = arith.truncf %114 : vector<8x256xf32> to vector<8x256xbf16>
    %c304 = arith.constant 304 : index
    %c0_75 = arith.constant 0 : index
    %116 = vector.load %arg3[%c304, %c0_75] : memref<1104x128xbf16, #tpu.memory_space<vmem>>, vector<8x8xbf16>
    %c304_76 = arith.constant 304 : index
    %c0_77 = arith.constant 0 : index
    %117 = vector.load %arg4[%c304_76, %c0_77] : memref<1104x1xf32, #tpu.memory_space<vmem>>, vector<8x1xf32>
    %cst_78 = arith.constant dense<0.000000e+00> : vector<8x256xf32>
    %118 = tpu.matmul %116, %115, %cst_78 {dimension_numbers = #tpu.dot_dimension_numbers<[1], [0], [0], [1], [0, 0, 1, 1], [], []>} : vector<8x8xbf16>, vector<8x256xbf16>, vector<8x256xf32> -> vector<8x256xf32>
    %119 = vector.broadcast %117 : vector<8x1xf32> to vector<8x256xf32>
    %120 = arith.addf %118, %119 : vector<8x256xf32>
    %cst_79 = arith.constant 0.000000e+00 : f32
    %121 = vector.broadcast %cst_79 : f32 to vector<8x256xf32>
    %122 = arith.maximumf %120, %121 : vector<8x256xf32>
    %123 = arith.truncf %122 : vector<8x256xf32> to vector<8x256xbf16>
    %c312 = arith.constant 312 : index
    %c0_80 = arith.constant 0 : index
    %124 = vector.load %arg3[%c312, %c0_80] : memref<1104x128xbf16, #tpu.memory_space<vmem>>, vector<16x8xbf16>
    %c312_81 = arith.constant 312 : index
    %c0_82 = arith.constant 0 : index
    %125 = vector.load %arg4[%c312_81, %c0_82] : memref<1104x1xf32, #tpu.memory_space<vmem>>, vector<16x1xf32>
    %cst_83 = arith.constant dense<0.000000e+00> : vector<16x256xf32>
    %126 = tpu.matmul %124, %123, %cst_83 {dimension_numbers = #tpu.dot_dimension_numbers<[1], [0], [0], [1], [0, 0, 1, 1], [], []>} : vector<16x8xbf16>, vector<8x256xbf16>, vector<16x256xf32> -> vector<16x256xf32>
    %127 = vector.broadcast %125 : vector<16x1xf32> to vector<16x256xf32>
    %128 = arith.addf %126, %127 : vector<16x256xf32>
    %cst_84 = arith.constant 0.000000e+00 : f32
    %129 = vector.broadcast %cst_84 : f32 to vector<16x256xf32>
    %130 = arith.maximumf %128, %129 : vector<16x256xf32>
    %131 = arith.truncf %130 : vector<16x256xf32> to vector<16x256xbf16>
    %c328 = arith.constant 328 : index
    %c0_85 = arith.constant 0 : index
    %132 = vector.load %arg3[%c328, %c0_85] : memref<1104x128xbf16, #tpu.memory_space<vmem>>, vector<16x16xbf16>
    %c328_86 = arith.constant 328 : index
    %c0_87 = arith.constant 0 : index
    %133 = vector.load %arg4[%c328_86, %c0_87] : memref<1104x1xf32, #tpu.memory_space<vmem>>, vector<16x1xf32>
    %cst_88 = arith.constant dense<0.000000e+00> : vector<16x256xf32>
    %134 = tpu.matmul %132, %131, %cst_88 {dimension_numbers = #tpu.dot_dimension_numbers<[1], [0], [0], [1], [0, 0, 1, 1], [], []>} : vector<16x16xbf16>, vector<16x256xbf16>, vector<16x256xf32> -> vector<16x256xf32>
    %135 = vector.broadcast %133 : vector<16x1xf32> to vector<16x256xf32>
    %136 = arith.addf %134, %135 : vector<16x256xf32>
    %cst_89 = arith.constant 0.000000e+00 : f32
    %137 = vector.broadcast %cst_89 : f32 to vector<16x256xf32>
    %138 = arith.maximumf %136, %137 : vector<16x256xf32>
    %139 = arith.truncf %138 : vector<16x256xf32> to vector<16x256xbf16>
    %c344 = arith.constant 344 : index
    %c0_90 = arith.constant 0 : index
    %140 = vector.load %arg3[%c344, %c0_90] : memref<1104x128xbf16, #tpu.memory_space<vmem>>, vector<64x16xbf16>
    %c344_91 = arith.constant 344 : index
    %c0_92 = arith.constant 0 : index
    %141 = vector.load %arg4[%c344_91, %c0_92] : memref<1104x1xf32, #tpu.memory_space<vmem>>, vector<64x1xf32>
    %cst_93 = arith.constant dense<0.000000e+00> : vector<64x256xf32>
    %142 = tpu.matmul %140, %139, %cst_93 {dimension_numbers = #tpu.dot_dimension_numbers<[1], [0], [0], [1], [0, 0, 1, 1], [], []>} : vector<64x16xbf16>, vector<16x256xbf16>, vector<64x256xf32> -> vector<64x256xf32>
    %143 = vector.broadcast %141 : vector<64x1xf32> to vector<64x256xf32>
    %144 = arith.addf %142, %143 : vector<64x256xf32>
    %cst_94 = arith.constant 0.000000e+00 : f32
    %145 = vector.broadcast %cst_94 : f32 to vector<64x256xf32>
    %146 = arith.maximumf %144, %145 : vector<64x256xf32>
    %147 = arith.truncf %146 : vector<64x256xf32> to vector<64x256xbf16>
    %c408 = arith.constant 408 : index
    %c0_95 = arith.constant 0 : index
    %148 = vector.load %arg3[%c408, %c0_95] : memref<1104x128xbf16, #tpu.memory_space<vmem>>, vector<128x64xbf16>
    %c408_96 = arith.constant 408 : index
    %c0_97 = arith.constant 0 : index
    %149 = vector.load %arg4[%c408_96, %c0_97] : memref<1104x1xf32, #tpu.memory_space<vmem>>, vector<128x1xf32>
    %cst_98 = arith.constant dense<0.000000e+00> : vector<128x256xf32>
    %150 = tpu.matmul %148, %147, %cst_98 {dimension_numbers = #tpu.dot_dimension_numbers<[1], [0], [0], [1], [0, 0, 1, 1], [], []>} : vector<128x64xbf16>, vector<64x256xbf16>, vector<128x256xf32> -> vector<128x256xf32>
    %151 = vector.broadcast %149 : vector<128x1xf32> to vector<128x256xf32>
    %152 = arith.addf %150, %151 : vector<128x256xf32>
    %cst_99 = arith.constant 0.000000e+00 : f32
    %153 = vector.broadcast %cst_99 : f32 to vector<128x256xf32>
    %154 = arith.maximumf %152, %153 : vector<128x256xf32>
    %155 = arith.truncf %154 : vector<128x256xf32> to vector<128x256xbf16>
    %c536 = arith.constant 536 : index
    %c0_100 = arith.constant 0 : index
    %156 = vector.load %arg3[%c536, %c0_100] : memref<1104x128xbf16, #tpu.memory_space<vmem>>, vector<16x128xbf16>
    %c536_101 = arith.constant 536 : index
    %c0_102 = arith.constant 0 : index
    %157 = vector.load %arg4[%c536_101, %c0_102] : memref<1104x1xf32, #tpu.memory_space<vmem>>, vector<16x1xf32>
    %cst_103 = arith.constant dense<0.000000e+00> : vector<16x256xf32>
    %158 = tpu.matmul %156, %155, %cst_103 {dimension_numbers = #tpu.dot_dimension_numbers<[1], [0], [0], [1], [0, 0, 1, 1], [], []>} : vector<16x128xbf16>, vector<128x256xbf16>, vector<16x256xf32> -> vector<16x256xf32>
    %159 = vector.broadcast %157 : vector<16x1xf32> to vector<16x256xf32>
    %160 = arith.addf %158, %159 : vector<16x256xf32>
    %161 = arith.truncf %160 : vector<16x256xf32> to vector<16x256xbf16>
    %c552 = arith.constant 552 : index
    %c0_104 = arith.constant 0 : index
    %162 = vector.load %arg3[%c552, %c0_104] : memref<1104x128xbf16, #tpu.memory_space<vmem>>, vector<128x16xbf16>
    %c552_105 = arith.constant 552 : index
    %c0_106 = arith.constant 0 : index
    %163 = vector.load %arg4[%c552_105, %c0_106] : memref<1104x1xf32, #tpu.memory_space<vmem>>, vector<128x1xf32>
    %cst_107 = arith.constant dense<0.000000e+00> : vector<128x256xf32>
    %164 = tpu.matmul %162, %161, %cst_107 {dimension_numbers = #tpu.dot_dimension_numbers<[1], [0], [0], [1], [0, 0, 1, 1], [], []>} : vector<128x16xbf16>, vector<16x256xbf16>, vector<128x256xf32> -> vector<128x256xf32>
    %165 = vector.broadcast %163 : vector<128x1xf32> to vector<128x256xf32>
    %166 = arith.addf %164, %165 : vector<128x256xf32>
    %cst_108 = arith.constant 0.000000e+00 : f32
    %167 = vector.broadcast %cst_108 : f32 to vector<128x256xf32>
    %168 = arith.maximumf %166, %167 : vector<128x256xf32>
    %169 = arith.truncf %168 : vector<128x256xf32> to vector<128x256xbf16>
    %c680 = arith.constant 680 : index
    %c0_109 = arith.constant 0 : index
    %170 = vector.load %arg3[%c680, %c0_109] : memref<1104x128xbf16, #tpu.memory_space<vmem>>, vector<64x128xbf16>
    %c680_110 = arith.constant 680 : index
    %c0_111 = arith.constant 0 : index
    %171 = vector.load %arg4[%c680_110, %c0_111] : memref<1104x1xf32, #tpu.memory_space<vmem>>, vector<64x1xf32>
    %cst_112 = arith.constant dense<0.000000e+00> : vector<64x256xf32>
    %172 = tpu.matmul %170, %169, %cst_112 {dimension_numbers = #tpu.dot_dimension_numbers<[1], [0], [0], [1], [0, 0, 1, 1], [], []>} : vector<64x128xbf16>, vector<128x256xbf16>, vector<64x256xf32> -> vector<64x256xf32>
    %173 = vector.broadcast %171 : vector<64x1xf32> to vector<64x256xf32>
    %174 = arith.addf %172, %173 : vector<64x256xf32>
    %cst_113 = arith.constant 0.000000e+00 : f32
    %175 = vector.broadcast %cst_113 : f32 to vector<64x256xf32>
    %176 = arith.maximumf %174, %175 : vector<64x256xf32>
    %177 = arith.truncf %176 : vector<64x256xf32> to vector<64x256xbf16>
    %c744 = arith.constant 744 : index
    %c0_114 = arith.constant 0 : index
    %178 = vector.load %arg3[%c744, %c0_114] : memref<1104x128xbf16, #tpu.memory_space<vmem>>, vector<16x64xbf16>
    %c744_115 = arith.constant 744 : index
    %c0_116 = arith.constant 0 : index
    %179 = vector.load %arg4[%c744_115, %c0_116] : memref<1104x1xf32, #tpu.memory_space<vmem>>, vector<16x1xf32>
    %cst_117 = arith.constant dense<0.000000e+00> : vector<16x256xf32>
    %180 = tpu.matmul %178, %177, %cst_117 {dimension_numbers = #tpu.dot_dimension_numbers<[1], [0], [0], [1], [0, 0, 1, 1], [], []>} : vector<16x64xbf16>, vector<64x256xbf16>, vector<16x256xf32> -> vector<16x256xf32>
    %181 = vector.broadcast %179 : vector<16x1xf32> to vector<16x256xf32>
    %182 = arith.addf %180, %181 : vector<16x256xf32>
    %cst_118 = arith.constant 0.000000e+00 : f32
    %183 = vector.broadcast %cst_118 : f32 to vector<16x256xf32>
    %184 = arith.maximumf %182, %183 : vector<16x256xf32>
    %185 = arith.truncf %184 : vector<16x256xf32> to vector<16x256xbf16>
    %c760 = arith.constant 760 : index
    %c0_119 = arith.constant 0 : index
    %186 = vector.load %arg3[%c760, %c0_119] : memref<1104x128xbf16, #tpu.memory_space<vmem>>, vector<16x16xbf16>
    %c760_120 = arith.constant 760 : index
    %c0_121 = arith.constant 0 : index
    %187 = vector.load %arg4[%c760_120, %c0_121] : memref<1104x1xf32, #tpu.memory_space<vmem>>, vector<16x1xf32>
    %cst_122 = arith.constant dense<0.000000e+00> : vector<16x256xf32>
    %188 = tpu.matmul %186, %185, %cst_122 {dimension_numbers = #tpu.dot_dimension_numbers<[1], [0], [0], [1], [0, 0, 1, 1], [], []>} : vector<16x16xbf16>, vector<16x256xbf16>, vector<16x256xf32> -> vector<16x256xf32>
    %189 = vector.broadcast %187 : vector<16x1xf32> to vector<16x256xf32>
    %190 = arith.addf %188, %189 : vector<16x256xf32>
    %cst_123 = arith.constant 0.000000e+00 : f32
    %191 = vector.broadcast %cst_123 : f32 to vector<16x256xf32>
    %192 = arith.maximumf %190, %191 : vector<16x256xf32>
    %193 = arith.truncf %192 : vector<16x256xf32> to vector<16x256xbf16>
    %c776 = arith.constant 776 : index
    %c0_124 = arith.constant 0 : index
    %194 = vector.load %arg3[%c776, %c0_124] : memref<1104x128xbf16, #tpu.memory_space<vmem>>, vector<8x16xbf16>
    %c776_125 = arith.constant 776 : index
    %c0_126 = arith.constant 0 : index
    %195 = vector.load %arg4[%c776_125, %c0_126] : memref<1104x1xf32, #tpu.memory_space<vmem>>, vector<8x1xf32>
    %cst_127 = arith.constant dense<0.000000e+00> : vector<8x256xf32>
    %196 = tpu.matmul %194, %193, %cst_127 {dimension_numbers = #tpu.dot_dimension_numbers<[1], [0], [0], [1], [0, 0, 1, 1], [], []>} : vector<8x16xbf16>, vector<16x256xbf16>, vector<8x256xf32> -> vector<8x256xf32>
    %197 = vector.broadcast %195 : vector<8x1xf32> to vector<8x256xf32>
    %198 = arith.addf %196, %197 : vector<8x256xf32>
    %cst_128 = arith.constant 0.000000e+00 : f32
    %199 = vector.broadcast %cst_128 : f32 to vector<8x256xf32>
    %200 = arith.maximumf %198, %199 : vector<8x256xf32>
    %201 = arith.truncf %200 : vector<8x256xf32> to vector<8x256xbf16>
    %c784 = arith.constant 784 : index
    %c0_129 = arith.constant 0 : index
    %202 = vector.load %arg3[%c784, %c0_129] : memref<1104x128xbf16, #tpu.memory_space<vmem>>, vector<8x8xbf16>
    %c784_130 = arith.constant 784 : index
    %c0_131 = arith.constant 0 : index
    %203 = vector.load %arg4[%c784_130, %c0_131] : memref<1104x1xf32, #tpu.memory_space<vmem>>, vector<8x1xf32>
    %cst_132 = arith.constant dense<0.000000e+00> : vector<8x256xf32>
    %204 = tpu.matmul %202, %201, %cst_132 {dimension_numbers = #tpu.dot_dimension_numbers<[1], [0], [0], [1], [0, 0, 1, 1], [], []>} : vector<8x8xbf16>, vector<8x256xbf16>, vector<8x256xf32> -> vector<8x256xf32>
    %205 = vector.broadcast %203 : vector<8x1xf32> to vector<8x256xf32>
    %206 = arith.addf %204, %205 : vector<8x256xf32>
    %cst_133 = arith.constant 0.000000e+00 : f32
    %207 = vector.broadcast %cst_133 : f32 to vector<8x256xf32>
    %208 = arith.maximumf %206, %207 : vector<8x256xf32>
    %209 = arith.truncf %208 : vector<8x256xf32> to vector<8x256xbf16>
    %c792 = arith.constant 792 : index
    %c0_134 = arith.constant 0 : index
    %210 = vector.load %arg3[%c792, %c0_134] : memref<1104x128xbf16, #tpu.memory_space<vmem>>, vector<8x8xbf16>
    %c792_135 = arith.constant 792 : index
    %c0_136 = arith.constant 0 : index
    %211 = vector.load %arg4[%c792_135, %c0_136] : memref<1104x1xf32, #tpu.memory_space<vmem>>, vector<8x1xf32>
    %cst_137 = arith.constant dense<0.000000e+00> : vector<8x256xf32>
    %212 = tpu.matmul %210, %209, %cst_137 {dimension_numbers = #tpu.dot_dimension_numbers<[1], [0], [0], [1], [0, 0, 1, 1], [], []>} : vector<8x8xbf16>, vector<8x256xbf16>, vector<8x256xf32> -> vector<8x256xf32>
    %213 = vector.broadcast %211 : vector<8x1xf32> to vector<8x256xf32>
    %214 = arith.addf %212, %213 : vector<8x256xf32>
    %cst_138 = arith.constant 0.000000e+00 : f32
    %215 = vector.broadcast %cst_138 : f32 to vector<8x256xf32>
    %216 = arith.maximumf %214, %215 : vector<8x256xf32>
    %217 = arith.truncf %216 : vector<8x256xf32> to vector<8x256xbf16>
    %c800 = arith.constant 800 : index
    %c0_139 = arith.constant 0 : index
    %218 = vector.load %arg3[%c800, %c0_139] : memref<1104x128xbf16, #tpu.memory_space<vmem>>, vector<4x8xbf16>
    %c800_140 = arith.constant 800 : index
    %c0_141 = arith.constant 0 : index
    %219 = vector.load %arg4[%c800_140, %c0_141] : memref<1104x1xf32, #tpu.memory_space<vmem>>, vector<4x1xf32>
    %cst_142 = arith.constant dense<0.000000e+00> : vector<4x256xf32>
    %220 = tpu.matmul %218, %217, %cst_142 {dimension_numbers = #tpu.dot_dimension_numbers<[1], [0], [0], [1], [0, 0, 1, 1], [], []>} : vector<4x8xbf16>, vector<8x256xbf16>, vector<4x256xf32> -> vector<4x256xf32>
    %221 = vector.broadcast %219 : vector<4x1xf32> to vector<4x256xf32>
    %222 = arith.addf %220, %221 : vector<4x256xf32>
    %cst_143 = arith.constant 0.000000e+00 : f32
    %223 = vector.broadcast %cst_143 : f32 to vector<4x256xf32>
    %224 = arith.maximumf %222, %223 : vector<4x256xf32>
    %225 = arith.truncf %224 : vector<4x256xf32> to vector<4x256xbf16>
    %c808 = arith.constant 808 : index
    %c0_144 = arith.constant 0 : index
    %226 = vector.load %arg3[%c808, %c0_144] : memref<1104x128xbf16, #tpu.memory_space<vmem>>, vector<4x4xbf16>
    %c808_145 = arith.constant 808 : index
    %c0_146 = arith.constant 0 : index
    %227 = vector.load %arg4[%c808_145, %c0_146] : memref<1104x1xf32, #tpu.memory_space<vmem>>, vector<4x1xf32>
    %cst_147 = arith.constant dense<0.000000e+00> : vector<4x256xf32>
    %228 = tpu.matmul %226, %225, %cst_147 {dimension_numbers = #tpu.dot_dimension_numbers<[1], [0], [0], [1], [0, 0, 1, 1], [], []>} : vector<4x4xbf16>, vector<4x256xbf16>, vector<4x256xf32> -> vector<4x256xf32>
    %229 = vector.broadcast %227 : vector<4x1xf32> to vector<4x256xf32>
    %230 = arith.addf %228, %229 : vector<4x256xf32>
    %cst_148 = arith.constant 0.000000e+00 : f32
    %231 = vector.broadcast %cst_148 : f32 to vector<4x256xf32>
    %232 = arith.maximumf %230, %231 : vector<4x256xf32>
    %233 = arith.truncf %232 : vector<4x256xf32> to vector<4x256xbf16>
    %c816 = arith.constant 816 : index
    %c0_149 = arith.constant 0 : index
    %234 = vector.load %arg3[%c816, %c0_149] : memref<1104x128xbf16, #tpu.memory_space<vmem>>, vector<4x4xbf16>
    %c816_150 = arith.constant 816 : index
    %c0_151 = arith.constant 0 : index
    %235 = vector.load %arg4[%c816_150, %c0_151] : memref<1104x1xf32, #tpu.memory_space<vmem>>, vector<4x1xf32>
    %cst_152 = arith.constant dense<0.000000e+00> : vector<4x256xf32>
    %236 = tpu.matmul %234, %233, %cst_152 {dimension_numbers = #tpu.dot_dimension_numbers<[1], [0], [0], [1], [0, 0, 1, 1], [], []>} : vector<4x4xbf16>, vector<4x256xbf16>, vector<4x256xf32> -> vector<4x256xf32>
    %237 = vector.broadcast %235 : vector<4x1xf32> to vector<4x256xf32>
    %238 = arith.addf %236, %237 : vector<4x256xf32>
    %c1 = arith.constant 1 : index
    %c0_153 = arith.constant 0 : index
    %c0_154 = arith.constant 0 : index
    %c0_155 = arith.constant 0 : index
    %239 = vector.load %arg6[%c1, %c0_153, %c0_154, %c0_155] : memref<2x1x4x256xf32, #tpu.memory_space<vmem>>, vector<1x1x4x256xf32>
    %240 = vector.shape_cast %239 : vector<1x1x4x256xf32> to vector<4x256xf32>
    %241 = vector.shape_cast %238 : vector<4x256xf32> to vector<1x1x4x256xf32>
    tpu.vector_store %arg6[%c1, %c0_153, %c0_154, %c0_155], %241 {strides = array<i32>} : memref<2x1x4x256xf32, #tpu.memory_space<vmem>>, vector<1x1x4x256xf32>,
    %242 = arith.truncf %238 : vector<4x256xf32> to vector<4x256xbf16>
    %c824 = arith.constant 824 : index
    %c0_156 = arith.constant 0 : index
    %243 = vector.load %arg3[%c824, %c0_156] : memref<1104x128xbf16, #tpu.memory_space<vmem>>, vector<4x4xbf16>
    %c824_157 = arith.constant 824 : index
    %c0_158 = arith.constant 0 : index
    %244 = vector.load %arg4[%c824_157, %c0_158] : memref<1104x1xf32, #tpu.memory_space<vmem>>, vector<4x1xf32>
    %cst_159 = arith.constant dense<0.000000e+00> : vector<4x256xf32>
    %245 = tpu.matmul %243, %242, %cst_159 {dimension_numbers = #tpu.dot_dimension_numbers<[1], [0], [0], [1], [0, 0, 1, 1], [], []>} : vector<4x4xbf16>, vector<4x256xbf16>, vector<4x256xf32> -> vector<4x256xf32>
    %246 = vector.broadcast %244 : vector<4x1xf32> to vector<4x256xf32>
    %247 = arith.addf %245, %246 : vector<4x256xf32>
    %cst_160 = arith.constant 0.000000e+00 : f32
    %248 = vector.broadcast %cst_160 : f32 to vector<4x256xf32>
    %249 = arith.maximumf %247, %248 : vector<4x256xf32>
    %250 = arith.truncf %249 : vector<4x256xf32> to vector<4x256xbf16>
    %c832 = arith.constant 832 : index
    %c0_161 = arith.constant 0 : index
    %251 = vector.load %arg3[%c832, %c0_161] : memref<1104x128xbf16, #tpu.memory_space<vmem>>, vector<4x4xbf16>
    %c832_162 = arith.constant 832 : index
    %c0_163 = arith.constant 0 : index
    %252 = vector.load %arg4[%c832_162, %c0_163] : memref<1104x1xf32, #tpu.memory_space<vmem>>, vector<4x1xf32>
    %cst_164 = arith.constant dense<0.000000e+00> : vector<4x256xf32>
    %253 = tpu.matmul %251, %250, %cst_164 {dimension_numbers = #tpu.dot_dimension_numbers<[1], [0], [0], [1], [0, 0, 1, 1], [], []>} : vector<4x4xbf16>, vector<4x256xbf16>, vector<4x256xf32> -> vector<4x256xf32>
    %254 = vector.broadcast %252 : vector<4x1xf32> to vector<4x256xf32>
    %255 = arith.addf %253, %254 : vector<4x256xf32>
    %cst_165 = arith.constant 0.000000e+00 : f32
    %256 = vector.broadcast %cst_165 : f32 to vector<4x256xf32>
    %257 = arith.maximumf %255, %256 : vector<4x256xf32>
    %258 = arith.truncf %257 : vector<4x256xf32> to vector<4x256xbf16>
    %c840 = arith.constant 840 : index
    %c0_166 = arith.constant 0 : index
    %259 = vector.load %arg3[%c840, %c0_166] : memref<1104x128xbf16, #tpu.memory_space<vmem>>, vector<8x4xbf16>
    %c840_167 = arith.constant 840 : index
    %c0_168 = arith.constant 0 : index
    %260 = vector.load %arg4[%c840_167, %c0_168] : memref<1104x1xf32, #tpu.memory_space<vmem>>, vector<8x1xf32>
    %cst_169 = arith.constant dense<0.000000e+00> : vector<8x256xf32>
    %261 = tpu.matmul %259, %258, %cst_169 {dimension_numbers = #tpu.dot_dimension_numbers<[1], [0], [0], [1], [0, 0, 1, 1], [], []>} : vector<8x4xbf16>, vector<4x256xbf16>, vector<8x256xf32> -> vector<8x256xf32>
    %262 = vector.broadcast %260 : vector<8x1xf32> to vector<8x256xf32>
    %263 = arith.addf %261, %262 : vector<8x256xf32>
    %cst_170 = arith.constant 0.000000e+00 : f32
    %264 = vector.broadcast %cst_170 : f32 to vector<8x256xf32>
    %265 = arith.maximumf %263, %264 : vector<8x256xf32>
    %266 = arith.truncf %265 : vector<8x256xf32> to vector<8x256xbf16>
    %c848 = arith.constant 848 : index
    %c0_171 = arith.constant 0 : index
    %267 = vector.load %arg3[%c848, %c0_171] : memref<1104x128xbf16, #tpu.memory_space<vmem>>, vector<8x8xbf16>
    %c848_172 = arith.constant 848 : index
    %c0_173 = arith.constant 0 : index
    %268 = vector.load %arg4[%c848_172, %c0_173] : memref<1104x1xf32, #tpu.memory_space<vmem>>, vector<8x1xf32>
    %cst_174 = arith.constant dense<0.000000e+00> : vector<8x256xf32>
    %269 = tpu.matmul %267, %266, %cst_174 {dimension_numbers = #tpu.dot_dimension_numbers<[1], [0], [0], [1], [0, 0, 1, 1], [], []>} : vector<8x8xbf16>, vector<8x256xbf16>, vector<8x256xf32> -> vector<8x256xf32>
    %270 = vector.broadcast %268 : vector<8x1xf32> to vector<8x256xf32>
    %271 = arith.addf %269, %270 : vector<8x256xf32>
    %cst_175 = arith.constant 0.000000e+00 : f32
    %272 = vector.broadcast %cst_175 : f32 to vector<8x256xf32>
    %273 = arith.maximumf %271, %272 : vector<8x256xf32>
    %274 = arith.truncf %273 : vector<8x256xf32> to vector<8x256xbf16>
    %c856 = arith.constant 856 : index
    %c0_176 = arith.constant 0 : index
    %275 = vector.load %arg3[%c856, %c0_176] : memref<1104x128xbf16, #tpu.memory_space<vmem>>, vector<8x8xbf16>
    %c856_177 = arith.constant 856 : index
    %c0_178 = arith.constant 0 : index
    %276 = vector.load %arg4[%c856_177, %c0_178] : memref<1104x1xf32, #tpu.memory_space<vmem>>, vector<8x1xf32>
    %cst_179 = arith.constant dense<0.000000e+00> : vector<8x256xf32>
    %277 = tpu.matmul %275, %274, %cst_179 {dimension_numbers = #tpu.dot_dimension_numbers<[1], [0], [0], [1], [0, 0, 1, 1], [], []>} : vector<8x8xbf16>, vector<8x256xbf16>, vector<8x256xf32> -> vector<8x256xf32>
    %278 = vector.broadcast %276 : vector<8x1xf32> to vector<8x256xf32>
    %279 = arith.addf %277, %278 : vector<8x256xf32>
    %cst_180 = arith.constant 0.000000e+00 : f32
    %280 = vector.broadcast %cst_180 : f32 to vector<8x256xf32>
    %281 = arith.maximumf %279, %280 : vector<8x256xf32>
    %282 = arith.truncf %281 : vector<8x256xf32> to vector<8x256xbf16>
    %c864 = arith.constant 864 : index
    %c0_181 = arith.constant 0 : index
    %283 = vector.load %arg3[%c864, %c0_181] : memref<1104x128xbf16, #tpu.memory_space<vmem>>, vector<16x8xbf16>
    %c864_182 = arith.constant 864 : index
    %c0_183 = arith.constant 0 : index
    %284 = vector.load %arg4[%c864_182, %c0_183] : memref<1104x1xf32, #tpu.memory_space<vmem>>, vector<16x1xf32>
    %cst_184 = arith.constant dense<0.000000e+00> : vector<16x256xf32>
    %285 = tpu.matmul %283, %282, %cst_184 {dimension_numbers = #tpu.dot_dimension_numbers<[1], [0], [0], [1], [0, 0, 1, 1], [], []>} : vector<16x8xbf16>, vector<8x256xbf16>, vector<16x256xf32> -> vector<16x256xf32>
    %286 = vector.broadcast %284 : vector<16x1xf32> to vector<16x256xf32>
    %287 = arith.addf %285, %286 : vector<16x256xf32>
    %cst_185 = arith.constant 0.000000e+00 : f32
    %288 = vector.broadcast %cst_185 : f32 to vector<16x256xf32>
    %289 = arith.maximumf %287, %288 : vector<16x256xf32>
    %290 = arith.truncf %289 : vector<16x256xf32> to vector<16x256xbf16>
    %c880 = arith.constant 880 : index
    %c0_186 = arith.constant 0 : index
    %291 = vector.load %arg3[%c880, %c0_186] : memref<1104x128xbf16, #tpu.memory_space<vmem>>, vector<16x16xbf16>
    %c880_187 = arith.constant 880 : index
    %c0_188 = arith.constant 0 : index
    %292 = vector.load %arg4[%c880_187, %c0_188] : memref<1104x1xf32, #tpu.memory_space<vmem>>, vector<16x1xf32>
    %cst_189 = arith.constant dense<0.000000e+00> : vector<16x256xf32>
    %293 = tpu.matmul %291, %290, %cst_189 {dimension_numbers = #tpu.dot_dimension_numbers<[1], [0], [0], [1], [0, 0, 1, 1], [], []>} : vector<16x16xbf16>, vector<16x256xbf16>, vector<16x256xf32> -> vector<16x256xf32>
    %294 = vector.broadcast %292 : vector<16x1xf32> to vector<16x256xf32>
    %295 = arith.addf %293, %294 : vector<16x256xf32>
    %cst_190 = arith.constant 0.000000e+00 : f32
    %296 = vector.broadcast %cst_190 : f32 to vector<16x256xf32>
    %297 = arith.maximumf %295, %296 : vector<16x256xf32>
    %298 = arith.truncf %297 : vector<16x256xf32> to vector<16x256xbf16>
    %c896 = arith.constant 896 : index
    %c0_191 = arith.constant 0 : index
    %299 = vector.load %arg3[%c896, %c0_191] : memref<1104x128xbf16, #tpu.memory_space<vmem>>, vector<64x16xbf16>
    %c896_192 = arith.constant 896 : index
    %c0_193 = arith.constant 0 : index
    %300 = vector.load %arg4[%c896_192, %c0_193] : memref<1104x1xf32, #tpu.memory_space<vmem>>, vector<64x1xf32>
    %cst_194 = arith.constant dense<0.000000e+00> : vector<64x256xf32>
    %301 = tpu.matmul %299, %298, %cst_194 {dimension_numbers = #tpu.dot_dimension_numbers<[1], [0], [0], [1], [0, 0, 1, 1], [], []>} : vector<64x16xbf16>, vector<16x256xbf16>, vector<64x256xf32> -> vector<64x256xf32>
    %302 = vector.broadcast %300 : vector<64x1xf32> to vector<64x256xf32>
    %303 = arith.addf %301, %302 : vector<64x256xf32>
    %cst_195 = arith.constant 0.000000e+00 : f32
    %304 = vector.broadcast %cst_195 : f32 to vector<64x256xf32>
    %305 = arith.maximumf %303, %304 : vector<64x256xf32>
    %306 = arith.truncf %305 : vector<64x256xf32> to vector<64x256xbf16>
    %c960 = arith.constant 960 : index
    %c0_196 = arith.constant 0 : index
    %307 = vector.load %arg3[%c960, %c0_196] : memref<1104x128xbf16, #tpu.memory_space<vmem>>, vector<128x64xbf16>
    %c960_197 = arith.constant 960 : index
    %c0_198 = arith.constant 0 : index
    %308 = vector.load %arg4[%c960_197, %c0_198] : memref<1104x1xf32, #tpu.memory_space<vmem>>, vector<128x1xf32>
    %cst_199 = arith.constant dense<0.000000e+00> : vector<128x256xf32>
    %309 = tpu.matmul %307, %306, %cst_199 {dimension_numbers = #tpu.dot_dimension_numbers<[1], [0], [0], [1], [0, 0, 1, 1], [], []>} : vector<128x64xbf16>, vector<64x256xbf16>, vector<128x256xf32> -> vector<128x256xf32>
    %310 = vector.broadcast %308 : vector<128x1xf32> to vector<128x256xf32>
    %311 = arith.addf %309, %310 : vector<128x256xf32>
    %cst_200 = arith.constant 0.000000e+00 : f32
    %312 = vector.broadcast %cst_200 : f32 to vector<128x256xf32>
    %313 = arith.maximumf %311, %312 : vector<128x256xf32>
    %314 = arith.truncf %313 : vector<128x256xf32> to vector<128x256xbf16>
    %c1088 = arith.constant 1088 : index
    %c0_201 = arith.constant 0 : index
    %315 = vector.load %arg3[%c1088, %c0_201] : memref<1104x128xbf16, #tpu.memory_space<vmem>>, vector<16x128xbf16>
    %c1088_202 = arith.constant 1088 : index
    %c0_203 = arith.constant 0 : index
    %316 = vector.load %arg4[%c1088_202, %c0_203] : memref<1104x1xf32, #tpu.memory_space<vmem>>, vector<16x1xf32>
    %cst_204 = arith.constant dense<0.000000e+00> : vector<16x256xf32>
    %317 = tpu.matmul %315, %314, %cst_204 {dimension_numbers = #tpu.dot_dimension_numbers<[1], [0], [0], [1], [0, 0, 1, 1], [], []>} : vector<16x128xbf16>, vector<128x256xbf16>, vector<16x256xf32> -> vector<16x256xf32>
    %318 = vector.broadcast %316 : vector<16x1xf32> to vector<16x256xf32>
    %319 = arith.addf %317, %318 : vector<16x256xf32>
    %c0_205 = arith.constant 0 : index
    %c0_206 = arith.constant 0 : index
    %c0_207 = arith.constant 0 : index
    %320 = vector.load %arg5[%c0_205, %c0_206, %c0_207] : memref<1x16x256xf32, #tpu.memory_space<vmem>>, vector<1x16x256xf32>
    %321 = vector.shape_cast %320 : vector<1x16x256xf32> to vector<16x256xf32>
    %322 = vector.shape_cast %319 : vector<16x256xf32> to vector<1x16x256xf32>
    tpu.vector_store %arg5[%c0_205, %c0_206, %c0_207], %322 {strides = array<i32>} : memref<1x16x256xf32, #tpu.memory_space<vmem>>, vector<1x16x256xf32>,
    return
  }
  func.func @transform_0(%arg0: i32, %arg1: i32) -> (i32, i32, i32) {
    %c0_i32 = arith.constant 0 : i32
    %c0_i32_0 = arith.constant 0 : i32
    return %arg0, %c0_i32, %arg1 : i32, i32, i32
  }
  func.func @transform_1(%arg0: i32, %arg1: i32) -> (i32, i32) {
    %c0_i32 = arith.constant 0 : i32
    %c0_i32_0 = arith.constant 0 : i32
    %c0_i32_1 = arith.constant 0 : i32
    return %c0_i32, %c0_i32_0 : i32, i32
  }
  func.func @transform_2(%arg0: i32, %arg1: i32) -> (i32, i32) {
    %c0_i32 = arith.constant 0 : i32
    %c0_i32_0 = arith.constant 0 : i32
    %c0_i32_1 = arith.constant 0 : i32
    return %c0_i32, %c0_i32_0 : i32, i32
  }
  func.func @transform_3(%arg0: i32, %arg1: i32) -> (i32, i32, i32) {
    %c0_i32 = arith.constant 0 : i32
    %c0_i32_0 = arith.constant 0 : i32
    return %arg0, %c0_i32, %arg1 : i32, i32, i32
  }
  func.func @transform_4(%arg0: i32, %arg1: i32) -> (i32, i32, i32, i32) {
    %c0_i32 = arith.constant 0 : i32
    %c0_i32_0 = arith.constant 0 : i32
    %c0_i32_1 = arith.constant 0 : i32
    return %c0_i32, %arg0, %c0_i32_0, %arg1 : i32, i32, i32, i32
  }
}

</mosaic_0001>

<llo_original>
// kernel: tlr_bm_net_forward.1
$region0: #{tlr_bm_net_forward.1}
  #allocation0 [shape = 'u32[]', space=smem, size = 0x4, offset = 0x4, fixed_abs, tag = 'smem constant byte address 0x4 - core index']
  #allocation1 [shape = 'u32[144,128]{1,0:T(1,128)}', space=vmem, size = 0x12000, scoped, tag = 'internal scratch']
  %s0 = inlined_call_operand.vmem [shape: f32[2,16,256], index: 0, kind: input, shape index: {}]
  %s1 = inlined_call_operand.vmem [shape: bf16[1104,128], index: 1, kind: input, shape index: {}]
  %s2 = inlined_call_operand.vmem [shape: f32[1104,1], index: 2, kind: input, shape index: {}]
  %s3 = inlined_call_operand.vmem [shape: f32[2,16,256], index: 3, kind: output, shape index: {0}]
  %s4 = inlined_call_operand.vmem [shape: f32[2,2,4,256], index: 4, kind: output, shape index: {1}]
  %5 = xla_tuple %s3, %s4
  %s6 = sld [smem:[#allocation0]]
  $region87: #{tlr_bm_net_forward.1} parent=0
    _
  %s8 = ssub.s32 1, %s6
  %s9 = scalar_select 0, %s8, %s6
  $region1: #{tlr_bm_net_forward.1} parent=0
    #allocation2 [shape = 'u8[16384]{0}', space=vmem, size = 0x4000, scoped, tag = 'output window, operand 1']
    loop: start=0, step=1, limit=4
    $region2: #{tlr_bm_net_forward.1} parent=1 // loop_pre_header
      _
    $region3: #{tlr_bm_net_forward.1} parent=1 // loop_header
      %s11 = sphi 0, %s15
      %p12 = scmp.ge.s32.totalorder %s11, 4
      %s18 = sphi 0, %s30
      %s19 = sphi 0, %s26
      %s20 = sphi 0, %s18
      %s21 = sphi 0, %s19
      %s22 = sphi 0, %s20
      %s23 = sphi 0, %s21
      %s35 = sphi 0, %s37
      %s38 = sphi 0, %s35
      %s39 = sphi 0, %s38
      %s55 = sphi 0, %s39
      %s59 = sphi 0, %s59
      %s61 = sphi 0, %s59
      %s62 = sphi 0, %s61
      %s76 = sphi 0, %s62
      %s80 = sphi 0, %s80
      %s82 = sphi 0, %s80
      %s83 = sphi 0, %s82
      %s97 = sphi 0, %s83
      %s105 = sphi 0, %s107
      %s108 = sphi 0, %s105
      %s109 = sphi 0, %s108
      %s125 = sphi 0, %s109
      %s133 = sphi 0, %s135
      %s136 = sphi 0, %s133
      %s137 = sphi 0, %s136
      %s153 = sphi 0, %s137
    $region4: #{tlr_bm_net_forward.1} parent=1 // loop_header_branch
      %14 = sbr.rel (%p12) target = $region8
    $region5: #{tlr_bm_net_forward.1} parent=1 // loop_body
      %s16 = ssub.s32 %s11, 1
      %s17 = ssub.s32 %s11, 2
      %s24 = sadd.s32 1, %s19
      %p25 = scmp.ge.s32.totalorder %s24, 1
      %s26 = scalar_select %p25, 0, %s24
      %s27 = sadd.s32 1, %s18
      %s28 = scalar_select %p25, %s27, %s18
      %p29 = scmp.ge.s32.totalorder %s28, 2
      %s30 = scalar_select %p29, 0, %s28
      %s31 = ssub.s32 %s18, %s30
      %s32 = ssub.s32 %s19, %s26
      %s33 = sor.u32 %s31, %s32
      %p34 = scmp.eq.s32.totalorder %s33, 0
      %s36 = sadd.s32 %s35, 1
      %s37 = scalar_select %p34, %s35, %s36
      %p40 = pneg %p34
      %p41 = scmp.eq.s32.totalorder %s11, 1
      %p42 = por %p40, %p41
      %p43 = scmp.ne.s32.totalorder %s35, %s38
      %p44 = scmp.eq.s32.totalorder %s11, 0
      %p45 = por %p43, %p44
      %p46 = scmp.ne.s32.totalorder %s35, %s38
      %p47 = scmp.eq.s32.totalorder %s16, 1
      %p48 = por %p46, %p47
      %p49 = scmp.ne.s32.totalorder %s38, %s39
      %p50 = scmp.eq.s32.totalorder %s16, 0
      %p51 = por %p49, %p50
      %p52 = scmp.ne.s32.totalorder %s38, %s39
      %p53 = scmp.eq.s32.totalorder %s17, 1
      %p54 = por %p52, %p53
      %p56 = scmp.ne.s32.totalorder %s39, %s55
      %p57 = scmp.eq.s32.totalorder %s17, 0
      %p58 = por %p56, %p57
      %s60 = sadd.s32 %s59, 1
      %p63 = scmp.eq.s32.totalorder %s11, 1
      %p64 = scmp.ne.s32.totalorder %s59, %s61
      %p65 = scmp.eq.s32.totalorder %s11, 0
      %p66 = por %p64, %p65
      %p67 = scmp.ne.s32.totalorder %s59, %s61
      %p68 = scmp.eq.s32.totalorder %s16, 1
      %p69 = por %p67, %p68
      %p70 = scmp.ne.s32.totalorder %s61, %s62
      %p71 = scmp.eq.s32.totalorder %s16, 0
      %p72 = por %p70, %p71
      %p73 = scmp.ne.s32.totalorder %s61, %s62
      %p74 = scmp.eq.s32.totalorder %s17, 1
      %p75 = por %p73, %p74
      %p77 = scmp.ne.s32.totalorder %s62, %s76
      %p78 = scmp.eq.s32.totalorder %s17, 0
      %p79 = por %p77, %p78
      %s81 = sadd.s32 %s80, 1
      %p84 = scmp.eq.s32.totalorder %s11, 1
      %p85 = scmp.ne.s32.totalorder %s80, %s82
      %p86 = scmp.eq.s32.totalorder %s11, 0
      %p87 = por %p85, %p86
      %p88 = scmp.ne.s32.totalorder %s80, %s82
      %p89 = scmp.eq.s32.totalorder %s16, 1
      %p90 = por %p88, %p89
      %p91 = scmp.ne.s32.totalorder %s82, %s83
      %p92 = scmp.eq.s32.totalorder %s16, 0
      %p93 = por %p91, %p92
      %p94 = scmp.ne.s32.totalorder %s82, %s83
      %p95 = scmp.eq.s32.totalorder %s17, 1
      %p96 = por %p94, %p95
      %p98 = scmp.ne.s32.totalorder %s83, %s97
      %p99 = scmp.eq.s32.totalorder %s17, 0
      %p100 = por %p98, %p99
      %s101 = ssub.s32 %s18, %s30
      %s102 = ssub.s32 %s19, %s26
      %s103 = sor.u32 %s101, %s102
      %p104 = scmp.eq.s32.totalorder %s103, 0
      %s106 = sadd.s32 %s105, 1
      %s107 = scalar_select %p104, %s105, %s106
      %p110 = pneg %p104
      %p111 = scmp.eq.s32.totalorder %s11, 1
      %p112 = por %p110, %p111
      %p113 = scmp.ne.s32.totalorder %s105, %s108
      %p114 = scmp.eq.s32.totalorder %s11, 0
      %p115 = por %p113, %p114
      %p116 = scmp.ne.s32.totalorder %s105, %s108
      %p117 = scmp.eq.s32.totalorder %s16, 1
      %p118 = por %p116, %p117
      %p119 = scmp.ne.s32.totalorder %s108, %s109
      %p120 = scmp.eq.s32.totalorder %s16, 0
      %p121 = por %p119, %p120
      %p122 = scmp.ne.s32.totalorder %s108, %s109
      %p123 = scmp.eq.s32.totalorder %s17, 1
      %p124 = por %p122, %p123
      %p126 = scmp.ne.s32.totalorder %s109, %s125
      %p127 = scmp.eq.s32.totalorder %s17, 0
      %p128 = por %p126, %p127
      %s129 = ssub.s32 %s18, %s30
      %s130 = ssub.s32 %s19, %s26
      %s131 = sor.u32 %s129, %s130
      %p132 = scmp.eq.s32.totalorder %s131, 0
      %s134 = sadd.s32 %s133, 1
      %s135 = scalar_select %p132, %s133, %s134
      %p138 = pneg %p132
      %p139 = scmp.eq.s32.totalorder %s11, 1
      %p140 = por %p138, %p139
      %p141 = scmp.ne.s32.totalorder %s133, %s136
      %p142 = scmp.eq.s32.totalorder %s11, 0
      %p143 = por %p141, %p142
      %p144 = scmp.ne.s32.totalorder %s133, %s136
      %p145 = scmp.eq.s32.totalorder %s16, 1
      %p146 = por %p144, %p145
      %p147 = scmp.ne.s32.totalorder %s136, %s137
      %p148 = scmp.eq.s32.totalorder %s16, 0
      %p149 = por %p147, %p148
      %p150 = scmp.ne.s32.totalorder %s136, %s137
      %p151 = scmp.eq.s32.totalorder %s17, 1
      %p152 = por %p150, %p151
      %p154 = scmp.ne.s32.totalorder %s137, %s153
      %p155 = scmp.eq.s32.totalorder %s17, 0
      %p156 = por %p154, %p155
      %p157 = scmp.le.s32.totalorder 1, %s11
      %p158 = scmp.lt.s32.totalorder %s11, 3
      %p159 = pnand %p157, %p158
      %p160 = pneg %p159
      // Predicated region
      $region9: #{tlr_bm_net_forward.1} parent=5 // pred_check
        _
      $region10: #{tlr_bm_net_forward.1} parent=5 // pred_check_branch
        %162 = sbr.rel (%p159) target = $region12
      $region11: #{tlr_bm_net_forward.1} parent=5 // pred_region
        %s163 = ssub.s32 %s11, 1
        // Predicated region
        $region13: #{tlr_bm_net_forward.1} parent=11 // pred_check
          %p164 = pneg %p72
        $region14: #{tlr_bm_net_forward.1} parent=11 // pred_check_branch
          %166 = sbr.rel (%p164) target = $region16
        $region15: #{tlr_bm_net_forward.1} parent=11 // pred_region
          _
        $region16: #{tlr_bm_net_forward.1} parent=11 // pred_fallthru
          _
        // Predicated region
        $region17: #{tlr_bm_net_forward.1} parent=11 // pred_check
          %p167 = pneg %p93
        $region18: #{tlr_bm_net_forward.1} parent=11 // pred_check_branch
          %169 = sbr.rel (%p167) target = $region20
        $region19: #{tlr_bm_net_forward.1} parent=11 // pred_region
          _
        $region20: #{tlr_bm_net_forward.1} parent=11 // pred_fallthru
          _
      $region12: #{tlr_bm_net_forward.1} parent=5 // pred_fallthru
        _
      %p170 = scmp.lt.s32.totalorder %s11, 2
      // Predicated region
      $region21: #{tlr_bm_net_forward.1} parent=5 // pred_check
        %p171 = pneg %p170
      $region22: #{tlr_bm_net_forward.1} parent=5 // pred_check_branch
        %173 = sbr.rel (%p171) target = $region24
      $region23: #{tlr_bm_net_forward.1} parent=5 // pred_region
        // Predicated region
        $region25: #{tlr_bm_net_forward.1} parent=23 // pred_check
          %p174 = pneg %p45
        $region26: #{tlr_bm_net_forward.1} parent=23 // pred_check_branch
          %176 = sbr.rel (%p174) target = $region28
        $region27: #{tlr_bm_net_forward.1} parent=23 // pred_region
          %s177 = smul.u32 2, %s19
          %p178 = scmp.lt.s32.totalorder %s18, 1
          %s179 = scalar_select %p178, %s18, 1
          %p180 = scmp.lt.s32.totalorder %s177, 1
          %s181 = scalar_select %p180, %s177, 1
          %s182 = smul.addr %s179, 4
          %s183 = sadd.s32 %s181, %s182
          %s184 = smul.addr %s183, 8
          %s185 = scalar_lea.vmem %s0, %s184
          %s186 = smul.u32 2, %s19
        $region28: #{tlr_bm_net_forward.1} parent=23 // pred_fallthru
          _
      $region24: #{tlr_bm_net_forward.1} parent=5 // pred_fallthru
        _
      %p187 = scmp.le.s32.totalorder 1, %s11
      %p188 = scmp.lt.s32.totalorder %s11, 3
      %p189 = pnand %p187, %p188
      %p190 = pneg %p189
      // Predicated region
      $region29: #{tlr_bm_net_forward.1} parent=5 // pred_check
        _
      $region30: #{tlr_bm_net_forward.1} parent=5 // pred_check_branch
        %192 = sbr.rel (%p189) target = $region32
      $region31: #{tlr_bm_net_forward.1} parent=5 // pred_region
        %s193 = ssub.s32 %s11, 1
        %s194 = smul.u32 2, %s21
        %p195 = scmp.lt.s32.totalorder %s20, 1
        %s196 = scalar_select %p195, %s20, 1
        %p197 = scmp.lt.s32.totalorder %s194, 1
        %s198 = scalar_select %p197, %s194, 1
        %s199 = smul.addr %s196, 4
        %s200 = sadd.s32 %s198, %s199
        %s201 = smul.addr %s200, 8
        %s202 = scalar_lea.vmem %s0, %s201
        %p203 = pneg %p51
        %p204 = pneg %p48
        %p205 = pneg %p72
        %p206 = pneg %p69
        %p207 = pneg %p93
        %p208 = pneg %p90
        %p209 = pneg %p121
        %p210 = pneg %p118
        %s211 = smul.u32 2, %s21
        %p212 = scmp.lt.s32.totalorder %s20, 1
        %s213 = scalar_select %p212, %s20, 1
        %p214 = scmp.lt.s32.totalorder %s211, 1
        %s215 = scalar_select %p214, %s211, 1
        %s216 = smul.addr %s213, 4
        %s217 = sadd.s32 %s215, %s216
        %s218 = smul.addr %s217, 8
        %s219 = scalar_lea.vmem %s3, %s218
        %p220 = pneg %p149
        %p221 = pneg %p146
        %s222 = sand.u32 %s136, 1
        %s223 = sand.u32 %s136, 1
        %s224 = smul.addr %s223, 16
        %s225 = scalar_lea.vmem [#allocation2], %s224
        %s226 = smul.u32 2, %s21
        %p227 = scmp.lt.s32.totalorder %s20, 1
        %s228 = scalar_select %p227, %s20, 1
        %p229 = scmp.lt.s32.totalorder %s226, 1
        %s230 = scalar_select %p229, %s226, 1
        %s231 = smul.addr %s228, 4
        %s232 = sadd.s32 %s230, %s231
        %s233 = smul.addr %s232, 8
        %s234 = scalar_lea.vmem %s0, %s233
        %s235 = smul.u32 2, %s21
        %s236 = smul.u32 2, %s21
        %p237 = scmp.lt.s32.totalorder %s20, 1
        %s238 = scalar_select %p237, %s20, 1
        %p239 = scmp.lt.s32.totalorder %s236, 1
        %s240 = scalar_select %p239, %s236, 1
        %s241 = smul.addr %s238, 4
        %s242 = sadd.s32 %s240, %s241
        %s243 = smul.addr %s242, 8
        %s244 = scalar_lea.vmem %s3, %s243
        %s245 = smul.u32 2, %s21
        %s246 = smul.u32 2, %s21
        %v248 = vld [vmem:[%s234] sm:$0xff]
        %v249 = vld [vmem:[%s234 + $0x8] sm:$0xff]
        %v250 = vld [vmem:[%s234 + $0x10] sm:$0xff]
        %v251 = vld [vmem:[%s234 + $0x18] sm:$0xff]
        %v252 = vpack.c.bf16 %v250, %v248
        %v253 = vpack.c.bf16 %v251, %v249
        %v254 = vld [vmem:[%s1] sm:$0xf]
        %v255 = vld [vmem:[%s1 + $0x4] sm:$0xf]
        %v256 = vld [vmem:[%s1 + $0x8] sm:$0xf]
        %v257 = vld [vmem:[%s1 + $0xc] sm:$0xf]
        %v258 = vld [vmem:[%s1 + $0x10] sm:$0xf]
        %v259 = vld [vmem:[%s1 + $0x14] sm:$0xf]
        %v260 = vld [vmem:[%s1 + $0x18] sm:$0xf]
        %v261 = vld [vmem:[%s1 + $0x1c] sm:$0xf]
        %v262 = vld [vmem:[%s1 + $0x20] sm:$0xf]
        %v263 = vld [vmem:[%s1 + $0x24] sm:$0xf]
        %v264 = vld [vmem:[%s1 + $0x28] sm:$0xf]
        %v265 = vld [vmem:[%s1 + $0x2c] sm:$0xf]
        %v266 = vld [vmem:[%s1 + $0x30] sm:$0xf]
        %v267 = vld [vmem:[%s1 + $0x34] sm:$0xf]
        %v268 = vld [vmem:[%s1 + $0x38] sm:$0xf]
        %v269 = vld [vmem:[%s1 + $0x3c] sm:$0xf]
        %v270 = vld [vmem:[%s2] sm:$0xff]
        %v271 = vld [vmem:[%s2 + $0x8] sm:$0xff]
        %v272 = vld [vmem:[%s2 + $0x10] sm:$0xff]
        %v273 = vld [vmem:[%s2 + $0x18] sm:$0xff]
        %v274 = vld [vmem:[%s2 + $0x20] sm:$0xff]
        %v275 = vld [vmem:[%s2 + $0x28] sm:$0xff]
        %v276 = vld [vmem:[%s2 + $0x30] sm:$0xff]
        %v277 = vld [vmem:[%s2 + $0x38] sm:$0xff]
        %v278 = vld [vmem:[%s2 + $0x40] sm:$0xff]
        %v279 = vld [vmem:[%s2 + $0x48] sm:$0xff]
        %v280 = vld [vmem:[%s2 + $0x50] sm:$0xff]
        %v281 = vld [vmem:[%s2 + $0x58] sm:$0xff]
        %v282 = vld [vmem:[%s2 + $0x60] sm:$0xff]
        %v283 = vld [vmem:[%s2 + $0x68] sm:$0xff]
        %v284 = vld [vmem:[%s2 + $0x70] sm:$0xff]
        %v285 = vld [vmem:[%s2 + $0x78] sm:$0xff]
        %287 = vset.pattern.permute.xlu0 0
        %288 = vperm.xlu0 %287, %v270
        %v289 = vpop.permute.xlu0 %288
        %292 = vset.pattern.permute.xlu0 0
        %293 = vperm.xlu0 %292, %v271
        %v294 = vpop.permute.xlu0 %293
        %297 = vset.pattern.permute.xlu0 0
        %298 = vperm.xlu0 %297, %v272
        %v299 = vpop.permute.xlu0 %298
        %302 = vset.pattern.permute.xlu0 0
        %303 = vperm.xlu0 %302, %v273
        %v304 = vpop.permute.xlu0 %303
        %307 = vset.pattern.permute.xlu0 0
        %308 = vperm.xlu0 %307, %v274
        %v309 = vpop.permute.xlu0 %308
        %312 = vset.pattern.permute.xlu0 0
        %313 = vperm.xlu0 %312, %v275
        %v314 = vpop.permute.xlu0 %313
        %317 = vset.pattern.permute.xlu0 0
        %318 = vperm.xlu0 %317, %v276
        %v319 = vpop.permute.xlu0 %318
        %322 = vset.pattern.permute.xlu0 0
        %323 = vperm.xlu0 %322, %v277
        %v324 = vpop.permute.xlu0 %323
        %327 = vset.pattern.permute.xlu0 0
        %328 = vperm.xlu0 %327, %v278
        %v329 = vpop.permute.xlu0 %328
        %332 = vset.pattern.permute.xlu0 0
        %333 = vperm.xlu0 %332, %v279
        %v334 = vpop.permute.xlu0 %333
        %337 = vset.pattern.permute.xlu0 0
        %338 = vperm.xlu0 %337, %v280
        %v339 = vpop.permute.xlu0 %338
        %342 = vset.pattern.permute.xlu0 0
        %343 = vperm.xlu0 %342, %v281
        %v344 = vpop.permute.xlu0 %343
        %347 = vset.pattern.permute.xlu0 0
        %348 = vperm.xlu0 %347, %v282
        %v349 = vpop.permute.xlu0 %348
        %352 = vset.pattern.permute.xlu0 0
        %353 = vperm.xlu0 %352, %v283
        %v354 = vpop.permute.xlu0 %353
        %357 = vset.pattern.permute.xlu0 0
        %358 = vperm.xlu0 %357, %v284
        %v359 = vpop.permute.xlu0 %358
        %362 = vset.pattern.permute.xlu0 0
        %363 = vperm.xlu0 %362, %v285
        %v364 = vpop.permute.xlu0 %363
        %v382 = vunpack.c.l.b16 %v254
        %v383 = vunpack.c.l.b16 %v255
        %v384 = vunpack.c.l.b16 %v256
        %v385 = vunpack.c.l.b16 %v257
        %v386 = vunpack.c.l.b16 %v258
        %v387 = vunpack.c.l.b16 %v259
        %v388 = vunpack.c.l.b16 %v260
        %v389 = vunpack.c.l.b16 %v261
        %v390 = vunpack.c.l.b16 %v262
        %v391 = vunpack.c.l.b16 %v263
        %v392 = vunpack.c.l.b16 %v264
        %v393 = vunpack.c.l.b16 %v265
        %v394 = vunpack.c.l.b16 %v266
        %v395 = vunpack.c.l.b16 %v267
        %v396 = vunpack.c.l.b16 %v268
        %v397 = vunpack.c.l.b16 %v269
        %v398 = vpack.c.b16 %v383, %v382
        %v399 = vpack.c.b16 %v385, %v384
        %v400 = vpack.c.b16 %v387, %v386
        %v401 = vpack.c.b16 %v389, %v388
        %v402 = vpack.c.b16 %v391, %v390
        %v403 = vpack.c.b16 %v393, %v392
        %v404 = vpack.c.b16 %v395, %v394
        %v405 = vpack.c.b16 %v397, %v396
        %vm406 = vcmask 130048
        %v408 = vsel %vm406, %v398, 0
        %v411 = vsel %vm406, %v399, 0
        %v414 = vsel %vm406, %v400, 0
        %v417 = vsel %vm406, %v401, 0
        %v420 = vsel %vm406, %v402, 0
        %v423 = vsel %vm406, %v403, 0
        %v426 = vsel %vm406, %v404, 0
        %v429 = vsel %vm406, %v405, 0
        %431 = vmatprep.subr.bf16.mxu0 0
        %432 = vmatpush1.bf16.msra.mxu0 0
        %433 = vmatprep.subr.bf16.mxu0 0
        %434 = vmatpush1.bf16.msra.mxu0 0
        %435 = vmatprep.subr.bf16.mxu0 0
        %436 = vmatpush1.bf16.msra.mxu0 0
        %437 = vmatprep.subr.bf16.mxu0 0
        %438 = vmatpush1.bf16.msra.mxu0 0
        %439 = vmatprep.subr.bf16.mxu0 0
        %440 = vmatpush1.bf16.msra.mxu0 0
        %441 = vmatprep.subr.bf16.mxu0 0
        %442 = vmatpush1.bf16.msra.mxu0 0
        %443 = vmatprep.subr.bf16.mxu0 0
        %444 = vmatpush1.bf16.msra.mxu0 0
        %445 = vmatprep.subr.bf16.mxu0 %v253
        %446 = vmatpush1.bf16.msra.mxu0 %v252
        %447 = vmatprep.subr.bf16.mxu0 0
        %448 = vmatpush2.bf16.msra.mxu0 0
        %449 = vmatprep.subr.bf16.mxu0 0
        %450 = vmatpush2.bf16.msra.mxu0 0
        %451 = vmatprep.subr.bf16.mxu0 0
        %452 = vmatpush2.bf16.msra.mxu0 0
        %453 = vmatprep.subr.bf16.mxu0 0
        %454 = vmatpush2.bf16.msra.mxu0 0
        %455 = vmatprep.subr.bf16.mxu0 0
        %456 = vmatpush2.bf16.msra.mxu0 0
        %457 = vmatprep.subr.bf16.mxu0 0
        %458 = vmatpush2.bf16.msra.mxu0 0
        %459 = vmatprep.subr.bf16.mxu0 0
        %460 = vmatpush2.bf16.msra.mxu0 0
        %461 = vmatprep.subr.bf16.mxu0 0
        %462 = vmatpush2.bf16.msra.mxu0 0
        %463 = vmatprep.mubr.bf16.mxu0 0
        %464 = vmatmul.mubr.bf16.gmra.mxu0 %v408
        %v465 = vpop.f32.mrf.mxu0
        %v466 = vadd.f32 %v289, %v465
        %v467 = vpop.f32.mrf.mxu0
        %v468 = vadd.f32 %v289, %v467
        %v469 = vpop.f32.mrf.mxu0
        %v470 = vadd.f32 %v294, %v469
        %v471 = vpop.f32.mrf.mxu0
        %v472 = vadd.f32 %v294, %v471
        %473 = vmatprep.mubr.bf16.mxu0 0
        %474 = vmatmul.mubr.bf16.gmra.mxu0 %v411
        %v475 = vpop.f32.mrf.mxu0
        %v476 = vadd.f32 %v299, %v475
        %v477 = vpop.f32.mrf.mxu0
        %v478 = vadd.f32 %v299, %v477
        %v479 = vpop.f32.mrf.mxu0
        %v480 = vadd.f32 %v304, %v479
        %v481 = vpop.f32.mrf.mxu0
        %v482 = vadd.f32 %v304, %v481
        %483 = vmatprep.mubr.bf16.mxu0 0
        %484 = vmatmul.mubr.bf16.gmra.mxu0 %v414
        %v485 = vpop.f32.mrf.mxu0
        %v486 = vadd.f32 %v309, %v485
        %v487 = vpop.f32.mrf.mxu0
        %v488 = vadd.f32 %v309, %v487
        %v489 = vpop.f32.mrf.mxu0
        %v490 = vadd.f32 %v314, %v489
        %v491 = vpop.f32.mrf.mxu0
        %v492 = vadd.f32 %v314, %v491
        %493 = vmatprep.mubr.bf16.mxu0 0
        %494 = vmatmul.mubr.bf16.gmra.mxu0 %v417
        %v495 = vpop.f32.mrf.mxu0
        %v496 = vadd.f32 %v319, %v495
        %v497 = vpop.f32.mrf.mxu0
        %v498 = vadd.f32 %v319, %v497
        %v499 = vpop.f32.mrf.mxu0
        %v500 = vadd.f32 %v324, %v499
        %v501 = vpop.f32.mrf.mxu0
        %v502 = vadd.f32 %v324, %v501
        %503 = vmatprep.mubr.bf16.mxu0 0
        %504 = vmatmul.mubr.bf16.gmra.mxu0 %v420
        %v505 = vpop.f32.mrf.mxu0
        %v506 = vadd.f32 %v329, %v505
        %v507 = vpop.f32.mrf.mxu0
        %v508 = vadd.f32 %v329, %v507
        %v509 = vpop.f32.mrf.mxu0
        %v510 = vadd.f32 %v334, %v509
        %v511 = vpop.f32.mrf.mxu0
        %v512 = vadd.f32 %v334, %v511
        %513 = vmatprep.mubr.bf16.mxu0 0
        %514 = vmatmul.mubr.bf16.gmra.mxu0 %v423
        %v515 = vpop.f32.mrf.mxu0
        %v516 = vadd.f32 %v339, %v515
        %v517 = vpop.f32.mrf.mxu0
        %v518 = vadd.f32 %v339, %v517
        %v519 = vpop.f32.mrf.mxu0
        %v520 = vadd.f32 %v344, %v519
        %v521 = vpop.f32.mrf.mxu0
        %v522 = vadd.f32 %v344, %v521
        %523 = vmatprep.mubr.bf16.mxu0 0
        %524 = vmatmul.mubr.bf16.gmra.mxu0 %v426
        %v525 = vpop.f32.mrf.mxu0
        %v526 = vadd.f32 %v349, %v525
        %v527 = vpop.f32.mrf.mxu0
        %v528 = vadd.f32 %v349, %v527
        %v529 = vpop.f32.mrf.mxu0
        %v530 = vadd.f32 %v354, %v529
        %v531 = vpop.f32.mrf.mxu0
        %v532 = vadd.f32 %v354, %v531
        %533 = vmatprep.mubr.bf16.mxu0 0
        %534 = vmatmul.mubr.bf16.gmra.mxu0 %v429
        %v535 = vpop.f32.mrf.mxu0
        %v536 = vadd.f32 %v359, %v535
        %v537 = vpop.f32.mrf.mxu0
        %v538 = vadd.f32 %v359, %v537
        %v539 = vpop.f32.mrf.mxu0
        %v540 = vadd.f32 %v364, %v539
        %v541 = vpop.f32.mrf.mxu0
        %v542 = vadd.f32 %v364, %v541
        %543 = vdwg.mxu0
        %v544 = vmax.f32 %v466, 0.0
        %v545 = vmax.f32 %v468, 0.0
        %v546 = vmax.f32 %v470, 0.0
        %v547 = vmax.f32 %v472, 0.0
        %v548 = vmax.f32 %v476, 0.0
        %v549 = vmax.f32 %v478, 0.0
        %v550 = vmax.f32 %v480, 0.0
        %v551 = vmax.f32 %v482, 0.0
        %v552 = vmax.f32 %v486, 0.0
        %v553 = vmax.f32 %v488, 0.0
        %v554 = vmax.f32 %v490, 0.0
        %v555 = vmax.f32 %v492, 0.0
        %v556 = vmax.f32 %v496, 0.0
        %v557 = vmax.f32 %v498, 0.0
        %v558 = vmax.f32 %v500, 0.0
        %v559 = vmax.f32 %v502, 0.0
        %v560 = vmax.f32 %v506, 0.0
        %v561 = vmax.f32 %v508, 0.0
        %v562 = vmax.f32 %v510, 0.0
        %v563 = vmax.f32 %v512, 0.0
        %v564 = vmax.f32 %v516, 0.0
        %v565 = vmax.f32 %v518, 0.0
        %v566 = vmax.f32 %v520, 0.0
        %v567 = vmax.f32 %v522, 0.0
        %v568 = vmax.f32 %v526, 0.0
        %v569 = vmax.f32 %v528, 0.0
        %v570 = vmax.f32 %v530, 0.0
        %v571 = vmax.f32 %v532, 0.0
        %v572 = vmax.f32 %v536, 0.0
        %v573 = vmax.f32 %v538, 0.0
        %v574 = vmax.f32 %v540, 0.0
        %v575 = vmax.f32 %v542, 0.0
        %v576 = vpack.c.bf16 %v546, %v544
        %v577 = vpack.c.bf16 %v547, %v545
        %v578 = vpack.c.bf16 %v550, %v548
        %v579 = vpack.c.bf16 %v551, %v549
        %v580 = vpack.c.bf16 %v554, %v552
        %v581 = vpack.c.bf16 %v555, %v553
        %v582 = vpack.c.bf16 %v558, %v556
        %v583 = vpack.c.bf16 %v559, %v557
        %v584 = vpack.c.bf16 %v562, %v560
        %v585 = vpack.c.bf16 %v563, %v561
        %v586 = vpack.c.bf16 %v566, %v564
        %v587 = vpack.c.bf16 %v567, %v565
        %v588 = vpack.c.bf16 %v570, %v568
        %v589 = vpack.c.bf16 %v571, %v569
        %v590 = vpack.c.bf16 %v574, %v572
        %v591 = vpack.c.bf16 %v575, %v573
        %v592 = vld [vmem:[%s1 + $0x40] sm:$0xf]
        %v593 = vld [vmem:[%s1 + $0x44] sm:$0xf]
        %v594 = vld [vmem:[%s1 + $0x48] sm:$0xf]
        %v595 = vld [vmem:[%s1 + $0x4c] sm:$0xf]
        %v596 = vld [vmem:[%s1 + $0x50] sm:$0xf]
        %v597 = vld [vmem:[%s1 + $0x54] sm:$0xf]
        %v598 = vld [vmem:[%s1 + $0x58] sm:$0xf]
        %v599 = vld [vmem:[%s1 + $0x5c] sm:$0xf]
        %v600 = vld [vmem:[%s2 + $0x80] sm:$0xff]
        %v601 = vld [vmem:[%s2 + $0x88] sm:$0xff]
        %v602 = vld [vmem:[%s2 + $0x90] sm:$0xff]
        %v603 = vld [vmem:[%s2 + $0x98] sm:$0xff]
        %v604 = vld [vmem:[%s2 + $0xa0] sm:$0xff]
        %v605 = vld [vmem:[%s2 + $0xa8] sm:$0xff]
        %v606 = vld [vmem:[%s2 + $0xb0] sm:$0xff]
        %v607 = vld [vmem:[%s2 + $0xb8] sm:$0xff]
        %609 = vset.pattern.permute.xlu0 0
        %610 = vperm.xlu0 %609, %v600
        %v611 = vpop.permute.xlu0 %610
        %614 = vset.pattern.permute.xlu0 0
        %615 = vperm.xlu0 %614, %v601
        %v616 = vpop.permute.xlu0 %615
        %619 = vset.pattern.permute.xlu0 0
        %620 = vperm.xlu0 %619, %v602
        %v621 = vpop.permute.xlu0 %620
        %624 = vset.pattern.permute.xlu0 0
        %625 = vperm.xlu0 %624, %v603
        %v626 = vpop.permute.xlu0 %625
        %629 = vset.pattern.permute.xlu0 0
        %630 = vperm.xlu0 %629, %v604
        %v631 = vpop.permute.xlu0 %630
        %634 = vset.pattern.permute.xlu0 0
        %635 = vperm.xlu0 %634, %v605
        %v636 = vpop.permute.xlu0 %635
        %639 = vset.pattern.permute.xlu0 0
        %640 = vperm.xlu0 %639, %v606
        %v641 = vpop.permute.xlu0 %640
        %644 = vset.pattern.permute.xlu0 0
        %645 = vperm.xlu0 %644, %v607
        %v646 = vpop.permute.xlu0 %645
        %v656 = vunpack.c.l.b16 %v592
        %v657 = vunpack.c.l.b16 %v593
        %v658 = vunpack.c.l.b16 %v594
        %v659 = vunpack.c.l.b16 %v595
        %v660 = vunpack.c.l.b16 %v596
        %v661 = vunpack.c.l.b16 %v597
        %v662 = vunpack.c.l.b16 %v598
        %v663 = vunpack.c.l.b16 %v599
        %v664 = vpack.c.b16 %v657, %v656
        %v665 = vpack.c.b16 %v659, %v658
        %v666 = vpack.c.b16 %v661, %v660
        %v667 = vpack.c.b16 %v663, %v662
        %672 = vmatprep.subr.bf16.mxu0 %v591
        %673 = vmatpush1.bf16.msra.mxu0 %v590
        %674 = vmatprep.subr.bf16.mxu0 %v589
        %675 = vmatpush1.bf16.msra.mxu0 %v588
        %676 = vmatprep.subr.bf16.mxu0 %v587
        %677 = vmatpush1.bf16.msra.mxu0 %v586
        %678 = vmatprep.subr.bf16.mxu0 %v585
        %679 = vmatpush1.bf16.msra.mxu0 %v584
        %680 = vmatprep.subr.bf16.mxu0 %v583
        %681 = vmatpush1.bf16.msra.mxu0 %v582
        %682 = vmatprep.subr.bf16.mxu0 %v581
        %683 = vmatpush1.bf16.msra.mxu0 %v580
        %684 = vmatprep.subr.bf16.mxu0 %v579
        %685 = vmatpush1.bf16.msra.mxu0 %v578
        %686 = vmatprep.subr.bf16.mxu0 %v577
        %687 = vmatpush1.bf16.msra.mxu0 %v576
        %688 = vmatprep.subr.bf16.mxu0 0
        %689 = vmatpush2.bf16.msra.mxu0 0
        %690 = vmatprep.subr.bf16.mxu0 0
        %691 = vmatpush2.bf16.msra.mxu0 0
        %692 = vmatprep.subr.bf16.mxu0 0
        %693 = vmatpush2.bf16.msra.mxu0 0
        %694 = vmatprep.subr.bf16.mxu0 0
        %695 = vmatpush2.bf16.msra.mxu0 0
        %696 = vmatprep.subr.bf16.mxu0 0
        %697 = vmatpush2.bf16.msra.mxu0 0
        %698 = vmatprep.subr.bf16.mxu0 0
        %699 = vmatpush2.bf16.msra.mxu0 0
        %700 = vmatprep.subr.bf16.mxu0 0
        %701 = vmatpush2.bf16.msra.mxu0 0
        %702 = vmatprep.subr.bf16.mxu0 0
        %703 = vmatpush2.bf16.msra.mxu0 0
        %704 = vmatprep.mubr.bf16.mxu0 0
        %705 = vmatmul.mubr.bf16.gmra.mxu0 %v664
        %v706 = vpop.f32.mrf.mxu0
        %v707 = vadd.f32 %v611, %v706
        %v708 = vpop.f32.mrf.mxu0
        %v709 = vadd.f32 %v611, %v708
        %v710 = vpop.f32.mrf.mxu0
        %v711 = vadd.f32 %v616, %v710
        %v712 = vpop.f32.mrf.mxu0
        %v713 = vadd.f32 %v616, %v712
        %714 = vmatprep.mubr.bf16.mxu0 0
        %715 = vmatmul.mubr.bf16.gmra.mxu0 %v665
        %v716 = vpop.f32.mrf.mxu0
        %v717 = vadd.f32 %v621, %v716
        %v718 = vpop.f32.mrf.mxu0
        %v719 = vadd.f32 %v621, %v718
        %v720 = vpop.f32.mrf.mxu0
        %v721 = vadd.f32 %v626, %v720
        %v722 = vpop.f32.mrf.mxu0
        %v723 = vadd.f32 %v626, %v722
        %724 = vmatprep.mubr.bf16.mxu0 0
        %725 = vmatmul.mubr.bf16.gmra.mxu0 %v666
        %v726 = vpop.f32.mrf.mxu0
        %v727 = vadd.f32 %v631, %v726
        %v728 = vpop.f32.mrf.mxu0
        %v729 = vadd.f32 %v631, %v728
        %v730 = vpop.f32.mrf.mxu0
        %v731 = vadd.f32 %v636, %v730
        %v732 = vpop.f32.mrf.mxu0
        %v733 = vadd.f32 %v636, %v732
        %734 = vmatprep.mubr.bf16.mxu0 0
        %735 = vmatmul.mubr.bf16.gmra.mxu0 %v667
        %v736 = vpop.f32.mrf.mxu0
        %v737 = vadd.f32 %v641, %v736
        %v738 = vpop.f32.mrf.mxu0
        %v739 = vadd.f32 %v641, %v738
        %v740 = vpop.f32.mrf.mxu0
        %v741 = vadd.f32 %v646, %v740
        %v742 = vpop.f32.mrf.mxu0
        %v743 = vadd.f32 %v646, %v742
        %744 = vdwg.mxu0
        %v745 = vmax.f32 %v707, 0.0
        %v746 = vmax.f32 %v709, 0.0
        %v747 = vmax.f32 %v711, 0.0
        %v748 = vmax.f32 %v713, 0.0
        %v749 = vmax.f32 %v717, 0.0
        %v750 = vmax.f32 %v719, 0.0
        %v751 = vmax.f32 %v721, 0.0
        %v752 = vmax.f32 %v723, 0.0
        %v753 = vmax.f32 %v727, 0.0
        %v754 = vmax.f32 %v729, 0.0
        %v755 = vmax.f32 %v731, 0.0
        %v756 = vmax.f32 %v733, 0.0
        %v757 = vmax.f32 %v737, 0.0
        %v758 = vmax.f32 %v739, 0.0
        %v759 = vmax.f32 %v741, 0.0
        %v760 = vmax.f32 %v743, 0.0
        %v761 = vpack.c.bf16 %v747, %v745
        %v762 = vpack.c.bf16 %v748, %v746
        %v763 = vpack.c.bf16 %v751, %v749
        %v764 = vpack.c.bf16 %v752, %v750
        %v765 = vpack.c.bf16 %v755, %v753
        %v766 = vpack.c.bf16 %v756, %v754
        %v767 = vpack.c.bf16 %v759, %v757
        %v768 = vpack.c.bf16 %v760, %v758
        %v769 = vld [vmem:[%s1 + $0x60] sm:$0xf]
        %v770 = vld [vmem:[%s1 + $0x64] sm:$0xf]
        %v771 = vld [vmem:[%s2 + $0xc0] sm:$0xff]
        %v772 = vld [vmem:[%s2 + $0xc8] sm:$0xff]
        %774 = vset.pattern.permute.xlu0 0
        %775 = vperm.xlu0 %774, %v771
        %v776 = vpop.permute.xlu0 %775
        %779 = vset.pattern.permute.xlu0 0
        %780 = vperm.xlu0 %779, %v772
        %v781 = vpop.permute.xlu0 %780
        %v785 = vunpack.c.l.b16 %v769
        %v786 = vunpack.c.l.b16 %v770
        %v787 = vpack.c.b16 %v786, %v785
        %vm788 = vcmask 523264
        %v790 = vsel %vm788, %v787, 0
        %792 = vmatprep.subr.bf16.mxu0 0
        %793 = vmatpush1.bf16.msra.mxu0 0
        %794 = vmatprep.subr.bf16.mxu0 0
        %795 = vmatpush1.bf16.msra.mxu0 0
        %796 = vmatprep.subr.bf16.mxu0 0
        %797 = vmatpush1.bf16.msra.mxu0 0
        %798 = vmatprep.subr.bf16.mxu0 0
        %799 = vmatpush1.bf16.msra.mxu0 0
        %800 = vmatprep.subr.bf16.mxu0 %v768
        %801 = vmatpush1.bf16.msra.mxu0 %v767
        %802 = vmatprep.subr.bf16.mxu0 %v766
        %803 = vmatpush1.bf16.msra.mxu0 %v765
        %804 = vmatprep.subr.bf16.mxu0 %v764
        %805 = vmatpush1.bf16.msra.mxu0 %v763
        %806 = vmatprep.subr.bf16.mxu0 %v762
        %807 = vmatpush1.bf16.msra.mxu0 %v761
        %808 = vmatprep.subr.bf16.mxu0 0
        %809 = vmatpush2.bf16.msra.mxu0 0
        %810 = vmatprep.subr.bf16.mxu0 0
        %811 = vmatpush2.bf16.msra.mxu0 0
        %812 = vmatprep.subr.bf16.mxu0 0
        %813 = vmatpush2.bf16.msra.mxu0 0
        %814 = vmatprep.subr.bf16.mxu0 0
        %815 = vmatpush2.bf16.msra.mxu0 0
        %816 = vmatprep.subr.bf16.mxu0 0
        %817 = vmatpush2.bf16.msra.mxu0 0
        %818 = vmatprep.subr.bf16.mxu0 0
        %819 = vmatpush2.bf16.msra.mxu0 0
        %820 = vmatprep.subr.bf16.mxu0 0
        %821 = vmatpush2.bf16.msra.mxu0 0
        %822 = vmatprep.subr.bf16.mxu0 0
        %823 = vmatpush2.bf16.msra.mxu0 0
        %824 = vmatprep.mubr.bf16.mxu0 0
        %825 = vmatmul.mubr.bf16.gmra.mxu0 %v790
        %v826 = vpop.f32.mrf.mxu0
        %v827 = vadd.f32 %v776, %v826
        %v828 = vpop.f32.mrf.mxu0
        %v829 = vadd.f32 %v776, %v828
        %v830 = vpop.f32.mrf.mxu0
        %v831 = vadd.f32 %v781, %v830
        %v832 = vpop.f32.mrf.mxu0
        %v833 = vadd.f32 %v781, %v832
        %834 = vdwg.mxu0
        %v835 = vmax.f32 %v827, 0.0
        %v836 = vmax.f32 %v829, 0.0
        %v837 = vmax.f32 %v831, 0.0
        %v838 = vmax.f32 %v833, 0.0
        %v839 = vpack.c.bf16 %v837, %v835
        %v840 = vpack.c.bf16 %v838, %v836
        %v841 = vld [vmem:[%s1 + $0x68] sm:$0xf]
        %v842 = vld [vmem:[%s1 + $0x6c] sm:$0xf]
        %v843 = vld [vmem:[%s2 + $0xd0] sm:$0xff]
        %v844 = vld [vmem:[%s2 + $0xd8] sm:$0xff]
        %846 = vset.pattern.permute.xlu0 0
        %847 = vperm.xlu0 %846, %v843
        %v848 = vpop.permute.xlu0 %847
        %851 = vset.pattern.permute.xlu0 0
        %852 = vperm.xlu0 %851, %v844
        %v853 = vpop.permute.xlu0 %852
        %v857 = vunpack.c.l.b16 %v841
        %v858 = vunpack.c.l.b16 %v842
        %v859 = vpack.c.b16 %v858, %v857
        %v861 = vsel %vm406, %v859, 0
        %863 = vmatprep.subr.bf16.mxu0 0
        %864 = vmatpush1.bf16.msra.mxu0 0
        %865 = vmatprep.subr.bf16.mxu0 0
        %866 = vmatpush1.bf16.msra.mxu0 0
        %867 = vmatprep.subr.bf16.mxu0 0
        %868 = vmatpush1.bf16.msra.mxu0 0
        %869 = vmatprep.subr.bf16.mxu0 0
        %870 = vmatpush1.bf16.msra.mxu0 0
        %871 = vmatprep.subr.bf16.mxu0 0
        %872 = vmatpush1.bf16.msra.mxu0 0
        %873 = vmatprep.subr.bf16.mxu0 0
        %874 = vmatpush1.bf16.msra.mxu0 0
        %875 = vmatprep.subr.bf16.mxu0 0
        %876 = vmatpush1.bf16.msra.mxu0 0
        %877 = vmatprep.subr.bf16.mxu0 %v840
        %878 = vmatpush1.bf16.msra.mxu0 %v839
        %879 = vmatprep.subr.bf16.mxu0 0
        %880 = vmatpush2.bf16.msra.mxu0 0
        %881 = vmatprep.subr.bf16.mxu0 0
        %882 = vmatpush2.bf16.msra.mxu0 0
        %883 = vmatprep.subr.bf16.mxu0 0
        %884 = vmatpush2.bf16.msra.mxu0 0
        %885 = vmatprep.subr.bf16.mxu0 0
        %886 = vmatpush2.bf16.msra.mxu0 0
        %887 = vmatprep.subr.bf16.mxu0 0
        %888 = vmatpush2.bf16.msra.mxu0 0
        %889 = vmatprep.subr.bf16.mxu0 0
        %890 = vmatpush2.bf16.msra.mxu0 0
        %891 = vmatprep.subr.bf16.mxu0 0
        %892 = vmatpush2.bf16.msra.mxu0 0
        %893 = vmatprep.subr.bf16.mxu0 0
        %894 = vmatpush2.bf16.msra.mxu0 0
        %895 = vmatprep.mubr.bf16.mxu0 0
        %896 = vmatmul.mubr.bf16.gmra.mxu0 %v861
        %v897 = vpop.f32.mrf.mxu0
        %v898 = vadd.f32 %v848, %v897
        %v899 = vpop.f32.mrf.mxu0
        %v900 = vadd.f32 %v848, %v899
        %v901 = vpop.f32.mrf.mxu0
        %v902 = vadd.f32 %v853, %v901
        %v903 = vpop.f32.mrf.mxu0
        %v904 = vadd.f32 %v853, %v903
        %905 = vdwg.mxu0
        %v906 = vmax.f32 %v898, 0.0
        %v907 = vmax.f32 %v900, 0.0
        %v908 = vmax.f32 %v902, 0.0
        %v909 = vmax.f32 %v904, 0.0
        %v910 = vpack.c.bf16 %v908, %v906
        %v911 = vpack.c.bf16 %v909, %v907
        %v912 = vld [vmem:[%s1 + $0x70] sm:$0xf]
        %v913 = vld [vmem:[%s2 + $0xe0] sm:$0xff]
        %915 = vset.pattern.permute.xlu0 0
        %916 = vperm.xlu0 %915, %v913
        %v917 = vpop.permute.xlu0 %916
        %v920 = vsel %vm406, %v912, 0
        %922 = vmatprep.subr.bf16.mxu0 0
        %923 = vmatpush1.bf16.msra.mxu0 0
        %924 = vmatprep.subr.bf16.mxu0 0
        %925 = vmatpush1.bf16.msra.mxu0 0
        %926 = vmatprep.subr.bf16.mxu0 0
        %927 = vmatpush1.bf16.msra.mxu0 0
        %928 = vmatprep.subr.bf16.mxu0 0
        %929 = vmatpush1.bf16.msra.mxu0 0
        %930 = vmatprep.subr.bf16.mxu0 0
        %931 = vmatpush1.bf16.msra.mxu0 0
        %932 = vmatprep.subr.bf16.mxu0 0
        %933 = vmatpush1.bf16.msra.mxu0 0
        %934 = vmatprep.subr.bf16.mxu0 0
        %935 = vmatpush1.bf16.msra.mxu0 0
        %936 = vmatprep.subr.bf16.mxu0 %v911
        %937 = vmatpush1.bf16.msra.mxu0 %v910
        %938 = vmatprep.subr.bf16.mxu0 0
        %939 = vmatpush2.bf16.msra.mxu0 0
        %940 = vmatprep.subr.bf16.mxu0 0
        %941 = vmatpush2.bf16.msra.mxu0 0
        %942 = vmatprep.subr.bf16.mxu0 0
        %943 = vmatpush2.bf16.msra.mxu0 0
        %944 = vmatprep.subr.bf16.mxu0 0
        %945 = vmatpush2.bf16.msra.mxu0 0
        %946 = vmatprep.subr.bf16.mxu0 0
        %947 = vmatpush2.bf16.msra.mxu0 0
        %948 = vmatprep.subr.bf16.mxu0 0
        %949 = vmatpush2.bf16.msra.mxu0 0
        %950 = vmatprep.subr.bf16.mxu0 0
        %951 = vmatpush2.bf16.msra.mxu0 0
        %952 = vmatprep.subr.bf16.mxu0 0
        %953 = vmatpush2.bf16.msra.mxu0 0
        %954 = vmatprep.mubr.bf16.mxu0 0
        %955 = vmatmul.mubr.bf16.gmra.mxu0 %v920
        %v956 = vpop.f32.mrf.mxu0
        %v957 = vadd.f32 %v917, %v956
        %v958 = vpop.f32.mrf.mxu0
        %v959 = vadd.f32 %v917, %v958
        %v960 = vpop.f32.mrf.mxu0
        %v961 = vpop.f32.mrf.mxu0
        %962 = vdwg.mxu0
        %v963 = vmax.f32 %v957, 0.0
        %v964 = vmax.f32 %v959, 0.0
        %v965 = vpack.c.bf16 %v963, %v963
        %v966 = vpack.c.bf16 %v964, %v964
        %v967 = vld [vmem:[%s1 + $0x74] sm:$0xf]
        %v968 = vld [vmem:[%s2 + $0xe8] sm:$0xff]
        %970 = vset.pattern.permute.xlu0 0
        %971 = vperm.xlu0 %970, %v968
        %v972 = vpop.permute.xlu0 %971
        %vm974 = vcmask 64512
        %v976 = vsel %vm974, %v967, 0
        %vm978 = vcmask 1043456
        %v980 = vsel %vm978, %v965, 0
        %v983 = vsel %vm978, %v966, 0
        %985 = vmatprep.subr.bf16.mxu0 0
        %986 = vmatpush1.bf16.msra.mxu0 0
        %987 = vmatprep.subr.bf16.mxu0 0
        %988 = vmatpush1.bf16.msra.mxu0 0
        %989 = vmatprep.subr.bf16.mxu0 0
        %990 = vmatpush1.bf16.msra.mxu0 0
        %991 = vmatprep.subr.bf16.mxu0 0
        %992 = vmatpush1.bf16.msra.mxu0 0
        %993 = vmatprep.subr.bf16.mxu0 0
        %994 = vmatpush1.bf16.msra.mxu0 0
        %995 = vmatprep.subr.bf16.mxu0 0
        %996 = vmatpush1.bf16.msra.mxu0 0
        %997 = vmatprep.subr.bf16.mxu0 0
        %998 = vmatpush1.bf16.msra.mxu0 0
        %999 = vmatprep.subr.bf16.mxu0 %v983
        %1000 = vmatpush1.bf16.msra.mxu0 %v980
        %1001 = vmatprep.subr.bf16.mxu0 0
        %1002 = vmatpush2.bf16.msra.mxu0 0
        %1003 = vmatprep.subr.bf16.mxu0 0
        %1004 = vmatpush2.bf16.msra.mxu0 0
        %1005 = vmatprep.subr.bf16.mxu0 0
        %1006 = vmatpush2.bf16.msra.mxu0 0
        %1007 = vmatprep.subr.bf16.mxu0 0
        %1008 = vmatpush2.bf16.msra.mxu0 0
        %1009 = vmatprep.subr.bf16.mxu0 0
        %1010 = vmatpush2.bf16.msra.mxu0 0
        %1011 = vmatprep.subr.bf16.mxu0 0
        %1012 = vmatpush2.bf16.msra.mxu0 0
        %1013 = vmatprep.subr.bf16.mxu0 0
        %1014 = vmatpush2.bf16.msra.mxu0 0
        %1015 = vmatprep.subr.bf16.mxu0 0
        %1016 = vmatpush2.bf16.msra.mxu0 0
        %1017 = vmatprep.mubr.bf16.mxu0 0
        %1018 = vmatmul.mubr.bf16.gmra.mxu0 %v976
        %v1019 = vpop.f32.mrf.mxu0
        %v1020 = vadd.f32 %v972, %v1019
        %v1021 = vpop.f32.mrf.mxu0
        %v1022 = vadd.f32 %v972, %v1021
        %v1023 = vpop.f32.mrf.mxu0
        %v1024 = vpop.f32.mrf.mxu0
        %1025 = vdwg.mxu0
        %v1026 = vmax.f32 %v1020, 0.0
        %v1027 = vmax.f32 %v1022, 0.0
        %v1028 = vpack.c.bf16 %v1026, %v1026
        %v1029 = vpack.c.bf16 %v1027, %v1027
        %v1030 = vld [vmem:[%s1 + $0x78] sm:$0xf]
        %v1031 = vld [vmem:[%s2 + $0xf0] sm:$0xff]
        %1033 = vset.pattern.permute.xlu0 0
        %1034 = vperm.xlu0 %1033, %v1031
        %v1035 = vpop.permute.xlu0 %1034
        %v1038 = vsel %vm974, %v1030, 0
        %v1041 = vsel %vm978, %v1028, 0
        %v1044 = vsel %vm978, %v1029, 0
        %1046 = vmatprep.subr.bf16.mxu0 0
        %1047 = vmatpush1.bf16.msra.mxu0 0
        %1048 = vmatprep.subr.bf16.mxu0 0
        %1049 = vmatpush1.bf16.msra.mxu0 0
        %1050 = vmatprep.subr.bf16.mxu0 0
        %1051 = vmatpush1.bf16.msra.mxu0 0
        %1052 = vmatprep.subr.bf16.mxu0 0
        %1053 = vmatpush1.bf16.msra.mxu0 0
        %1054 = vmatprep.subr.bf16.mxu0 0
        %1055 = vmatpush1.bf16.msra.mxu0 0
        %1056 = vmatprep.subr.bf16.mxu0 0
        %1057 = vmatpush1.bf16.msra.mxu0 0
        %1058 = vmatprep.subr.bf16.mxu0 0
        %1059 = vmatpush1.bf16.msra.mxu0 0
        %1060 = vmatprep.subr.bf16.mxu0 %v1044
        %1061 = vmatpush1.bf16.msra.mxu0 %v1041
        %1062 = vmatprep.subr.bf16.mxu0 0
        %1063 = vmatpush2.bf16.msra.mxu0 0
        %1064 = vmatprep.subr.bf16.mxu0 0
        %1065 = vmatpush2.bf16.msra.mxu0 0
        %1066 = vmatprep.subr.bf16.mxu0 0
        %1067 = vmatpush2.bf16.msra.mxu0 0
        %1068 = vmatprep.subr.bf16.mxu0 0
        %1069 = vmatpush2.bf16.msra.mxu0 0
        %1070 = vmatprep.subr.bf16.mxu0 0
        %1071 = vmatpush2.bf16.msra.mxu0 0
        %1072 = vmatprep.subr.bf16.mxu0 0
        %1073 = vmatpush2.bf16.msra.mxu0 0
        %1074 = vmatprep.subr.bf16.mxu0 0
        %1075 = vmatpush2.bf16.msra.mxu0 0
        %1076 = vmatprep.subr.bf16.mxu0 0
        %1077 = vmatpush2.bf16.msra.mxu0 0
        %1078 = vmatprep.mubr.bf16.mxu0 0
        %1079 = vmatmul.mubr.bf16.gmra.mxu0 %v1038
        %v1080 = vpop.f32.mrf.mxu0
        %v1081 = vadd.f32 %v1035, %v1080
        %v1082 = vpop.f32.mrf.mxu0
        %v1083 = vadd.f32 %v1035, %v1082
        %v1084 = vpop.f32.mrf.mxu0
        %v1085 = vpop.f32.mrf.mxu0
        %1086 = vdwg.mxu0
        %v1087 = vmax.f32 %v1081, 0.0
        %v1088 = vmax.f32 %v1083, 0.0
        %v1089 = vpack.c.bf16 %v1087, %v1087
        %v1090 = vpack.c.bf16 %v1088, %v1088
        %v1091 = vld [vmem:[%s1 + $0x7c] sm:$0x3]
        %v1092 = vld [vmem:[%s2 + $0xf8] sm:$0xf]
        %1094 = vset.pattern.permute.xlu0 0
        %1095 = vperm.xlu0 %1094, %v1092
        %v1096 = vpop.permute.xlu0 %1095
        %v1099 = vsel %vm974, %v1091, 0
        %v1102 = vsel %vm978, %v1089, 0
        %v1105 = vsel %vm978, %v1090, 0
        %1107 = vmatprep.subr.bf16.mxu0 0
        %1108 = vmatpush1.bf16.msra.mxu0 0
        %1109 = vmatprep.subr.bf16.mxu0 0
        %1110 = vmatpush1.bf16.msra.mxu0 0
        %1111 = vmatprep.subr.bf16.mxu0 0
        %1112 = vmatpush1.bf16.msra.mxu0 0
        %1113 = vmatprep.subr.bf16.mxu0 0
        %1114 = vmatpush1.bf16.msra.mxu0 0
        %1115 = vmatprep.subr.bf16.mxu0 0
        %1116 = vmatpush1.bf16.msra.mxu0 0
        %1117 = vmatprep.subr.bf16.mxu0 0
        %1118 = vmatpush1.bf16.msra.mxu0 0
        %1119 = vmatprep.subr.bf16.mxu0 0
        %1120 = vmatpush1.bf16.msra.mxu0 0
        %1121 = vmatprep.subr.bf16.mxu0 %v1105
        %1122 = vmatpush1.bf16.msra.mxu0 %v1102
        %1123 = vmatprep.subr.bf16.mxu0 0
        %1124 = vmatpush2.bf16.msra.mxu0 0
        %1125 = vmatprep.subr.bf16.mxu0 0
        %1126 = vmatpush2.bf16.msra.mxu0 0
        %1127 = vmatprep.subr.bf16.mxu0 0
        %1128 = vmatpush2.bf16.msra.mxu0 0
        %1129 = vmatprep.subr.bf16.mxu0 0
        %1130 = vmatpush2.bf16.msra.mxu0 0
        %1131 = vmatprep.subr.bf16.mxu0 0
        %1132 = vmatpush2.bf16.msra.mxu0 0
        %1133 = vmatprep.subr.bf16.mxu0 0
        %1134 = vmatpush2.bf16.msra.mxu0 0
        %1135 = vmatprep.subr.bf16.mxu0 0
        %1136 = vmatpush2.bf16.msra.mxu0 0
        %1137 = vmatprep.subr.bf16.mxu0 0
        %1138 = vmatpush2.bf16.msra.mxu0 0
        %1139 = vmatprep.mubr.bf16.mxu0 0
        %1140 = vmatmul.mubr.bf16.gmra.mxu0 %v1099
        %v1141 = vpop.f32.mrf.mxu0
        %v1142 = vadd.f32 %v1096, %v1141
        %v1143 = vpop.f32.mrf.mxu0
        %v1144 = vadd.f32 %v1096, %v1143
        %v1145 = vpop.f32.mrf.mxu0
        %v1146 = vpop.f32.mrf.mxu0
        %1147 = vdwg.mxu0
        %v1148 = vmax.f32 %v1142, 0.0
        %v1149 = vmax.f32 %v1144, 0.0
        %v1150 = vpack.c.bf16 %v1148, %v1148
        %v1151 = vpack.c.bf16 %v1149, %v1149
        %v1152 = vld [vmem:[%s1 + $0x80] sm:$0x3]
        %v1153 = vld [vmem:[%s2 + $0x100] sm:$0xf]
        %1155 = vset.pattern.permute.xlu0 0
        %1156 = vperm.xlu0 %1155, %v1153
        %v1157 = vpop.permute.xlu0 %1156
        %vm1159 = vcmask 31744
        %v1161 = vsel %vm1159, %v1152, 0
        %vm1163 = vcmask 1041408
        %v1165 = vsel %vm1163, %v1150, 0
        %v1168 = vsel %vm1163, %v1151, 0
        %1170 = vmatprep.subr.bf16.mxu0 0
        %1171 = vmatpush1.bf16.msra.mxu0 0
        %1172 = vmatprep.subr.bf16.mxu0 0
        %1173 = vmatpush1.bf16.msra.mxu0 0
        %1174 = vmatprep.subr.bf16.mxu0 0
        %1175 = vmatpush1.bf16.msra.mxu0 0
        %1176 = vmatprep.subr.bf16.mxu0 0
        %1177 = vmatpush1.bf16.msra.mxu0 0
        %1178 = vmatprep.subr.bf16.mxu0 0
        %1179 = vmatpush1.bf16.msra.mxu0 0
        %1180 = vmatprep.subr.bf16.mxu0 0
        %1181 = vmatpush1.bf16.msra.mxu0 0
        %1182 = vmatprep.subr.bf16.mxu0 0
        %1183 = vmatpush1.bf16.msra.mxu0 0
        %1184 = vmatprep.subr.bf16.mxu0 %v1168
        %1185 = vmatpush1.bf16.msra.mxu0 %v1165
        %1186 = vmatprep.subr.bf16.mxu0 0
        %1187 = vmatpush2.bf16.msra.mxu0 0
        %1188 = vmatprep.subr.bf16.mxu0 0
        %1189 = vmatpush2.bf16.msra.mxu0 0
        %1190 = vmatprep.subr.bf16.mxu0 0
        %1191 = vmatpush2.bf16.msra.mxu0 0
        %1192 = vmatprep.subr.bf16.mxu0 0
        %1193 = vmatpush2.bf16.msra.mxu0 0
        %1194 = vmatprep.subr.bf16.mxu0 0
        %1195 = vmatpush2.bf16.msra.mxu0 0
        %1196 = vmatprep.subr.bf16.mxu0 0
        %1197 = vmatpush2.bf16.msra.mxu0 0
        %1198 = vmatprep.subr.bf16.mxu0 0
        %1199 = vmatpush2.bf16.msra.mxu0 0
        %1200 = vmatprep.subr.bf16.mxu0 0
        %1201 = vmatpush2.bf16.msra.mxu0 0
        %1202 = vmatprep.mubr.bf16.mxu0 0
        %1203 = vmatmul.mubr.bf16.gmra.mxu0 %v1161
        %v1204 = vpop.f32.mrf.mxu0
        %v1205 = vadd.f32 %v1157, %v1204
        %v1206 = vpop.f32.mrf.mxu0
        %v1207 = vadd.f32 %v1157, %v1206
        %v1208 = vpop.f32.mrf.mxu0
        %v1209 = vpop.f32.mrf.mxu0
        %1210 = vdwg.mxu0
        %v1211 = vmax.f32 %v1205, 0.0
        %v1212 = vmax.f32 %v1207, 0.0
        %v1213 = vpack.c.bf16 %v1211, %v1211
        %v1214 = vpack.c.bf16 %v1212, %v1212
        %v1215 = vld [vmem:[%s1 + $0x84] sm:$0x3]
        %v1216 = vld [vmem:[%s2 + $0x108] sm:$0xf]
        %1218 = vset.pattern.permute.xlu0 0
        %1219 = vperm.xlu0 %1218, %v1216
        %v1220 = vpop.permute.xlu0 %1219
        %v1223 = vsel %vm1159, %v1215, 0
        %v1226 = vsel %vm1163, %v1213, 0
        %v1229 = vsel %vm1163, %v1214, 0
        %1231 = vmatprep.subr.bf16.mxu0 0
        %1232 = vmatpush1.bf16.msra.mxu0 0
        %1233 = vmatprep.subr.bf16.mxu0 0
        %1234 = vmatpush1.bf16.msra.mxu0 0
        %1235 = vmatprep.subr.bf16.mxu0 0
        %1236 = vmatpush1.bf16.msra.mxu0 0
        %1237 = vmatprep.subr.bf16.mxu0 0
        %1238 = vmatpush1.bf16.msra.mxu0 0
        %1239 = vmatprep.subr.bf16.mxu0 0
        %1240 = vmatpush1.bf16.msra.mxu0 0
        %1241 = vmatprep.subr.bf16.mxu0 0
        %1242 = vmatpush1.bf16.msra.mxu0 0
        %1243 = vmatprep.subr.bf16.mxu0 0
        %1244 = vmatpush1.bf16.msra.mxu0 0
        %1245 = vmatprep.subr.bf16.mxu0 %v1229
        %1246 = vmatpush1.bf16.msra.mxu0 %v1226
        %1247 = vmatprep.subr.bf16.mxu0 0
        %1248 = vmatpush2.bf16.msra.mxu0 0
        %1249 = vmatprep.subr.bf16.mxu0 0
        %1250 = vmatpush2.bf16.msra.mxu0 0
        %1251 = vmatprep.subr.bf16.mxu0 0
        %1252 = vmatpush2.bf16.msra.mxu0 0
        %1253 = vmatprep.subr.bf16.mxu0 0
        %1254 = vmatpush2.bf16.msra.mxu0 0
        %1255 = vmatprep.subr.bf16.mxu0 0
        %1256 = vmatpush2.bf16.msra.mxu0 0
        %1257 = vmatprep.subr.bf16.mxu0 0
        %1258 = vmatpush2.bf16.msra.mxu0 0
        %1259 = vmatprep.subr.bf16.mxu0 0
        %1260 = vmatpush2.bf16.msra.mxu0 0
        %1261 = vmatprep.subr.bf16.mxu0 0
        %1262 = vmatpush2.bf16.msra.mxu0 0
        %1263 = vmatprep.mubr.bf16.mxu0 0
        %1264 = vmatmul.mubr.bf16.gmra.mxu0 %v1223
        %v1265 = vpop.f32.mrf.mxu0
        %v1266 = vadd.f32 %v1220, %v1265
        %v1267 = vpop.f32.mrf.mxu0
        %v1268 = vadd.f32 %v1220, %v1267
        %v1269 = vpop.f32.mrf.mxu0
        %v1270 = vpop.f32.mrf.mxu0
        %1271 = vdwg.mxu0
        %v1274 = vcombine.low %v1266, %v1268
        %1276 = vst [vmem:[%s225] sm:$0xff] %v1274
        %v1277 = vpack.c.bf16 %v1266, %v1266
        %v1278 = vpack.c.bf16 %v1268, %v1268
        %v1279 = vld [vmem:[%s1 + $0x88] sm:$0x3]
        %v1280 = vld [vmem:[%s2 + $0x110] sm:$0xf]
        %1282 = vset.pattern.permute.xlu0 0
        %1283 = vperm.xlu0 %1282, %v1280
        %v1284 = vpop.permute.xlu0 %1283
        %v1287 = vsel %vm1159, %v1279, 0
        %v1290 = vsel %vm1163, %v1277, 0
        %v1293 = vsel %vm1163, %v1278, 0
        %1295 = vmatprep.subr.bf16.mxu0 0
        %1296 = vmatpush1.bf16.msra.mxu0 0
        %1297 = vmatprep.subr.bf16.mxu0 0
        %1298 = vmatpush1.bf16.msra.mxu0 0
        %1299 = vmatprep.subr.bf16.mxu0 0
        %1300 = vmatpush1.bf16.msra.mxu0 0
        %1301 = vmatprep.subr.bf16.mxu0 0
        %1302 = vmatpush1.bf16.msra.mxu0 0
        %1303 = vmatprep.subr.bf16.mxu0 0
        %1304 = vmatpush1.bf16.msra.mxu0 0
        %1305 = vmatprep.subr.bf16.mxu0 0
        %1306 = vmatpush1.bf16.msra.mxu0 0
        %1307 = vmatprep.subr.bf16.mxu0 0
        %1308 = vmatpush1.bf16.msra.mxu0 0
        %1309 = vmatprep.subr.bf16.mxu0 %v1293
        %1310 = vmatpush1.bf16.msra.mxu0 %v1290
        %1311 = vmatprep.subr.bf16.mxu0 0
        %1312 = vmatpush2.bf16.msra.mxu0 0
        %1313 = vmatprep.subr.bf16.mxu0 0
        %1314 = vmatpush2.bf16.msra.mxu0 0
        %1315 = vmatprep.subr.bf16.mxu0 0
        %1316 = vmatpush2.bf16.msra.mxu0 0
        %1317 = vmatprep.subr.bf16.mxu0 0
        %1318 = vmatpush2.bf16.msra.mxu0 0
        %1319 = vmatprep.subr.bf16.mxu0 0
        %1320 = vmatpush2.bf16.msra.mxu0 0
        %1321 = vmatprep.subr.bf16.mxu0 0
        %1322 = vmatpush2.bf16.msra.mxu0 0
        %1323 = vmatprep.subr.bf16.mxu0 0
        %1324 = vmatpush2.bf16.msra.mxu0 0
        %1325 = vmatprep.subr.bf16.mxu0 0
        %1326 = vmatpush2.bf16.msra.mxu0 0
        %1327 = vmatprep.mubr.bf16.mxu0 0
        %1328 = vmatmul.mubr.bf16.gmra.mxu0 %v1287
        %v1329 = vpop.f32.mrf.mxu0
        %v1330 = vadd.f32 %v1284, %v1329
        %v1331 = vpop.f32.mrf.mxu0
        %v1332 = vadd.f32 %v1284, %v1331
        %v1333 = vpop.f32.mrf.mxu0
        %v1334 = vpop.f32.mrf.mxu0
        %1335 = vdwg.mxu0
        %v1336 = vmax.f32 %v1330, 0.0
        %v1337 = vmax.f32 %v1332, 0.0
        %v1338 = vpack.c.bf16 %v1336, %v1336
        %v1339 = vpack.c.bf16 %v1337, %v1337
        %v1340 = vld [vmem:[%s1 + $0x8c] sm:$0x3]
        %v1341 = vld [vmem:[%s2 + $0x118] sm:$0xf]
        %1343 = vset.pattern.permute.xlu0 0
        %1344 = vperm.xlu0 %1343, %v1341
        %v1345 = vpop.permute.xlu0 %1344
        %v1348 = vsel %vm1159, %v1340, 0
        %v1351 = vsel %vm1163, %v1338, 0
        %v1354 = vsel %vm1163, %v1339, 0
        %1356 = vmatprep.subr.bf16.mxu0 0
        %1357 = vmatpush1.bf16.msra.mxu0 0
        %1358 = vmatprep.subr.bf16.mxu0 0
        %1359 = vmatpush1.bf16.msra.mxu0 0
        %1360 = vmatprep.subr.bf16.mxu0 0
        %1361 = vmatpush1.bf16.msra.mxu0 0
        %1362 = vmatprep.subr.bf16.mxu0 0
        %1363 = vmatpush1.bf16.msra.mxu0 0
        %1364 = vmatprep.subr.bf16.mxu0 0
        %1365 = vmatpush1.bf16.msra.mxu0 0
        %1366 = vmatprep.subr.bf16.mxu0 0
        %1367 = vmatpush1.bf16.msra.mxu0 0
        %1368 = vmatprep.subr.bf16.mxu0 0
        %1369 = vmatpush1.bf16.msra.mxu0 0
        %1370 = vmatprep.subr.bf16.mxu0 %v1354
        %1371 = vmatpush1.bf16.msra.mxu0 %v1351
        %1372 = vmatprep.subr.bf16.mxu0 0
        %1373 = vmatpush2.bf16.msra.mxu0 0
        %1374 = vmatprep.subr.bf16.mxu0 0
        %1375 = vmatpush2.bf16.msra.mxu0 0
        %1376 = vmatprep.subr.bf16.mxu0 0
        %1377 = vmatpush2.bf16.msra.mxu0 0
        %1378 = vmatprep.subr.bf16.mxu0 0
        %1379 = vmatpush2.bf16.msra.mxu0 0
        %1380 = vmatprep.subr.bf16.mxu0 0
        %1381 = vmatpush2.bf16.msra.mxu0 0
        %1382 = vmatprep.subr.bf16.mxu0 0
        %1383 = vmatpush2.bf16.msra.mxu0 0
        %1384 = vmatprep.subr.bf16.mxu0 0
        %1385 = vmatpush2.bf16.msra.mxu0 0
        %1386 = vmatprep.subr.bf16.mxu0 0
        %1387 = vmatpush2.bf16.msra.mxu0 0
        %1388 = vmatprep.mubr.bf16.mxu0 0
        %1389 = vmatmul.mubr.bf16.gmra.mxu0 %v1348
        %v1390 = vpop.f32.mrf.mxu0
        %v1391 = vadd.f32 %v1345, %v1390
        %v1392 = vpop.f32.mrf.mxu0
        %v1393 = vadd.f32 %v1345, %v1392
        %v1394 = vpop.f32.mrf.mxu0
        %v1395 = vpop.f32.mrf.mxu0
        %1396 = vdwg.mxu0
        %v1397 = vmax.f32 %v1391, 0.0
        %v1398 = vmax.f32 %v1393, 0.0
        %v1399 = vpack.c.bf16 %v1397, %v1397
        %v1400 = vpack.c.bf16 %v1398, %v1398
        %v1401 = vld [vmem:[%s1 + $0x90] sm:$0xf]
        %v1402 = vld [vmem:[%s2 + $0x120] sm:$0xff]
        %1404 = vset.pattern.permute.xlu0 0
        %1405 = vperm.xlu0 %1404, %v1402
        %v1406 = vpop.permute.xlu0 %1405
        %v1409 = vsel %vm1159, %v1401, 0
        %v1412 = vsel %vm1163, %v1399, 0
        %v1415 = vsel %vm1163, %v1400, 0
        %1417 = vmatprep.subr.bf16.mxu0 0
        %1418 = vmatpush1.bf16.msra.mxu0 0
        %1419 = vmatprep.subr.bf16.mxu0 0
        %1420 = vmatpush1.bf16.msra.mxu0 0
        %1421 = vmatprep.subr.bf16.mxu0 0
        %1422 = vmatpush1.bf16.msra.mxu0 0
        %1423 = vmatprep.subr.bf16.mxu0 0
        %1424 = vmatpush1.bf16.msra.mxu0 0
        %1425 = vmatprep.subr.bf16.mxu0 0
        %1426 = vmatpush1.bf16.msra.mxu0 0
        %1427 = vmatprep.subr.bf16.mxu0 0
        %1428 = vmatpush1.bf16.msra.mxu0 0
        %1429 = vmatprep.subr.bf16.mxu0 0
        %1430 = vmatpush1.bf16.msra.mxu0 0
        %1431 = vmatprep.subr.bf16.mxu0 %v1415
        %1432 = vmatpush1.bf16.msra.mxu0 %v1412
        %1433 = vmatprep.subr.bf16.mxu0 0
        %1434 = vmatpush2.bf16.msra.mxu0 0
        %1435 = vmatprep.subr.bf16.mxu0 0
        %1436 = vmatpush2.bf16.msra.mxu0 0
        %1437 = vmatprep.subr.bf16.mxu0 0
        %1438 = vmatpush2.bf16.msra.mxu0 0
        %1439 = vmatprep.subr.bf16.mxu0 0
        %1440 = vmatpush2.bf16.msra.mxu0 0
        %1441 = vmatprep.subr.bf16.mxu0 0
        %1442 = vmatpush2.bf16.msra.mxu0 0
        %1443 = vmatprep.subr.bf16.mxu0 0
        %1444 = vmatpush2.bf16.msra.mxu0 0
        %1445 = vmatprep.subr.bf16.mxu0 0
        %1446 = vmatpush2.bf16.msra.mxu0 0
        %1447 = vmatprep.subr.bf16.mxu0 0
        %1448 = vmatpush2.bf16.msra.mxu0 0
        %1449 = vmatprep.mubr.bf16.mxu0 0
        %1450 = vmatmul.mubr.bf16.gmra.mxu0 %v1409
        %v1451 = vpop.f32.mrf.mxu0
        %v1452 = vadd.f32 %v1406, %v1451
        %v1453 = vpop.f32.mrf.mxu0
        %v1454 = vadd.f32 %v1406, %v1453
        %v1455 = vpop.f32.mrf.mxu0
        %v1456 = vpop.f32.mrf.mxu0
        %1457 = vdwg.mxu0
        %v1458 = vmax.f32 %v1452, 0.0
        %v1459 = vmax.f32 %v1454, 0.0
        %v1460 = vpack.c.bf16 %v1458, %v1458
        %v1461 = vpack.c.bf16 %v1459, %v1459
        %v1462 = vld [vmem:[%s1 + $0x94] sm:$0xf]
        %v1463 = vld [vmem:[%s2 + $0x128] sm:$0xff]
        %1465 = vset.pattern.permute.xlu0 0
        %1466 = vperm.xlu0 %1465, %v1463
        %v1467 = vpop.permute.xlu0 %1466
        %v1470 = vsel %vm974, %v1462, 0
        %v1473 = vsel %vm978, %v1460, 0
        %v1476 = vsel %vm978, %v1461, 0
        %1478 = vmatprep.subr.bf16.mxu0 0
        %1479 = vmatpush1.bf16.msra.mxu0 0
        %1480 = vmatprep.subr.bf16.mxu0 0
        %1481 = vmatpush1.bf16.msra.mxu0 0
        %1482 = vmatprep.subr.bf16.mxu0 0
        %1483 = vmatpush1.bf16.msra.mxu0 0
        %1484 = vmatprep.subr.bf16.mxu0 0
        %1485 = vmatpush1.bf16.msra.mxu0 0
        %1486 = vmatprep.subr.bf16.mxu0 0
        %1487 = vmatpush1.bf16.msra.mxu0 0
        %1488 = vmatprep.subr.bf16.mxu0 0
        %1489 = vmatpush1.bf16.msra.mxu0 0
        %1490 = vmatprep.subr.bf16.mxu0 0
        %1491 = vmatpush1.bf16.msra.mxu0 0
        %1492 = vmatprep.subr.bf16.mxu0 %v1476
        %1493 = vmatpush1.bf16.msra.mxu0 %v1473
        %1494 = vmatprep.subr.bf16.mxu0 0
        %1495 = vmatpush2.bf16.msra.mxu0 0
        %1496 = vmatprep.subr.bf16.mxu0 0
        %1497 = vmatpush2.bf16.msra.mxu0 0
        %1498 = vmatprep.subr.bf16.mxu0 0
        %1499 = vmatpush2.bf16.msra.mxu0 0
        %1500 = vmatprep.subr.bf16.mxu0 0
        %1501 = vmatpush2.bf16.msra.mxu0 0
        %1502 = vmatprep.subr.bf16.mxu0 0
        %1503 = vmatpush2.bf16.msra.mxu0 0
        %1504 = vmatprep.subr.bf16.mxu0 0
        %1505 = vmatpush2.bf16.msra.mxu0 0
        %1506 = vmatprep.subr.bf16.mxu0 0
        %1507 = vmatpush2.bf16.msra.mxu0 0
        %1508 = vmatprep.subr.bf16.mxu0 0
        %1509 = vmatpush2.bf16.msra.mxu0 0
        %1510 = vmatprep.mubr.bf16.mxu0 0
        %1511 = vmatmul.mubr.bf16.gmra.mxu0 %v1470
        %v1512 = vpop.f32.mrf.mxu0
        %v1513 = vadd.f32 %v1467, %v1512
        %v1514 = vpop.f32.mrf.mxu0
        %v1515 = vadd.f32 %v1467, %v1514
        %v1516 = vpop.f32.mrf.mxu0
        %v1517 = vpop.f32.mrf.mxu0
        %1518 = vdwg.mxu0
        %v1519 = vmax.f32 %v1513, 0.0
        %v1520 = vmax.f32 %v1515, 0.0
        %v1521 = vpack.c.bf16 %v1519, %v1519
        %v1522 = vpack.c.bf16 %v1520, %v1520
        %v1523 = vld [vmem:[%s1 + $0x98] sm:$0xf]
        %v1524 = vld [vmem:[%s2 + $0x130] sm:$0xff]
        %1526 = vset.pattern.permute.xlu0 0
        %1527 = vperm.xlu0 %1526, %v1524
        %v1528 = vpop.permute.xlu0 %1527
        %v1531 = vsel %vm974, %v1523, 0
        %v1534 = vsel %vm978, %v1521, 0
        %v1537 = vsel %vm978, %v1522, 0
        %1539 = vmatprep.subr.bf16.mxu0 0
        %1540 = vmatpush1.bf16.msra.mxu0 0
        %1541 = vmatprep.subr.bf16.mxu0 0
        %1542 = vmatpush1.bf16.msra.mxu0 0
        %1543 = vmatprep.subr.bf16.mxu0 0
        %1544 = vmatpush1.bf16.msra.mxu0 0
        %1545 = vmatprep.subr.bf16.mxu0 0
        %1546 = vmatpush1.bf16.msra.mxu0 0
        %1547 = vmatprep.subr.bf16.mxu0 0
        %1548 = vmatpush1.bf16.msra.mxu0 0
        %1549 = vmatprep.subr.bf16.mxu0 0
        %1550 = vmatpush1.bf16.msra.mxu0 0
        %1551 = vmatprep.subr.bf16.mxu0 0
        %1552 = vmatpush1.bf16.msra.mxu0 0
        %1553 = vmatprep.subr.bf16.mxu0 %v1537
        %1554 = vmatpush1.bf16.msra.mxu0 %v1534
        %1555 = vmatprep.subr.bf16.mxu0 0
        %1556 = vmatpush2.bf16.msra.mxu0 0
        %1557 = vmatprep.subr.bf16.mxu0 0
        %1558 = vmatpush2.bf16.msra.mxu0 0
        %1559 = vmatprep.subr.bf16.mxu0 0
        %1560 = vmatpush2.bf16.msra.mxu0 0
        %1561 = vmatprep.subr.bf16.mxu0 0
        %1562 = vmatpush2.bf16.msra.mxu0 0
        %1563 = vmatprep.subr.bf16.mxu0 0
        %1564 = vmatpush2.bf16.msra.mxu0 0
        %1565 = vmatprep.subr.bf16.mxu0 0
        %1566 = vmatpush2.bf16.msra.mxu0 0
        %1567 = vmatprep.subr.bf16.mxu0 0
        %1568 = vmatpush2.bf16.msra.mxu0 0
        %1569 = vmatprep.subr.bf16.mxu0 0
        %1570 = vmatpush2.bf16.msra.mxu0 0
        %1571 = vmatprep.mubr.bf16.mxu0 0
        %1572 = vmatmul.mubr.bf16.gmra.mxu0 %v1531
        %v1573 = vpop.f32.mrf.mxu0
        %v1574 = vadd.f32 %v1528, %v1573
        %v1575 = vpop.f32.mrf.mxu0
        %v1576 = vadd.f32 %v1528, %v1575
        %v1577 = vpop.f32.mrf.mxu0
        %v1578 = vpop.f32.mrf.mxu0
        %1579 = vdwg.mxu0
        %v1580 = vmax.f32 %v1574, 0.0
        %v1581 = vmax.f32 %v1576, 0.0
        %v1582 = vpack.c.bf16 %v1580, %v1580
        %v1583 = vpack.c.bf16 %v1581, %v1581
        %v1584 = vld [vmem:[%s1 + $0x9c] sm:$0xf]
        %v1585 = vld [vmem:[%s1 + $0xa0] sm:$0xf]
        %v1586 = vld [vmem:[%s2 + $0x138] sm:$0xff]
        %v1587 = vld [vmem:[%s2 + $0x140] sm:$0xff]
        %1589 = vset.pattern.permute.xlu0 0
        %1590 = vperm.xlu0 %1589, %v1586
        %v1591 = vpop.permute.xlu0 %1590
        %1594 = vset.pattern.permute.xlu0 0
        %1595 = vperm.xlu0 %1594, %v1587
        %v1596 = vpop.permute.xlu0 %1595
        %v1600 = vunpack.c.l.b16 %v1584
        %v1601 = vunpack.c.l.b16 %v1585
        %v1602 = vpack.c.b16 %v1601, %v1600
        %v1604 = vsel %vm974, %v1602, 0
        %v1607 = vsel %vm978, %v1582, 0
        %v1610 = vsel %vm978, %v1583, 0
        %1612 = vmatprep.subr.bf16.mxu0 0
        %1613 = vmatpush1.bf16.msra.mxu0 0
        %1614 = vmatprep.subr.bf16.mxu0 0
        %1615 = vmatpush1.bf16.msra.mxu0 0
        %1616 = vmatprep.subr.bf16.mxu0 0
        %1617 = vmatpush1.bf16.msra.mxu0 0
        %1618 = vmatprep.subr.bf16.mxu0 0
        %1619 = vmatpush1.bf16.msra.mxu0 0
        %1620 = vmatprep.subr.bf16.mxu0 0
        %1621 = vmatpush1.bf16.msra.mxu0 0
        %1622 = vmatprep.subr.bf16.mxu0 0
        %1623 = vmatpush1.bf16.msra.mxu0 0
        %1624 = vmatprep.subr.bf16.mxu0 0
        %1625 = vmatpush1.bf16.msra.mxu0 0
        %1626 = vmatprep.subr.bf16.mxu0 %v1610
        %1627 = vmatpush1.bf16.msra.mxu0 %v1607
        %1628 = vmatprep.subr.bf16.mxu0 0
        %1629 = vmatpush2.bf16.msra.mxu0 0
        %1630 = vmatprep.subr.bf16.mxu0 0
        %1631 = vmatpush2.bf16.msra.mxu0 0
        %1632 = vmatprep.subr.bf16.mxu0 0
        %1633 = vmatpush2.bf16.msra.mxu0 0
        %1634 = vmatprep.subr.bf16.mxu0 0
        %1635 = vmatpush2.bf16.msra.mxu0 0
        %1636 = vmatprep.subr.bf16.mxu0 0
        %1637 = vmatpush2.bf16.msra.mxu0 0
        %1638 = vmatprep.subr.bf16.mxu0 0
        %1639 = vmatpush2.bf16.msra.mxu0 0
        %1640 = vmatprep.subr.bf16.mxu0 0
        %1641 = vmatpush2.bf16.msra.mxu0 0
        %1642 = vmatprep.subr.bf16.mxu0 0
        %1643 = vmatpush2.bf16.msra.mxu0 0
        %1644 = vmatprep.mubr.bf16.mxu0 0
        %1645 = vmatmul.mubr.bf16.gmra.mxu0 %v1604
        %v1646 = vpop.f32.mrf.mxu0
        %v1647 = vadd.f32 %v1591, %v1646
        %v1648 = vpop.f32.mrf.mxu0
        %v1649 = vadd.f32 %v1591, %v1648
        %v1650 = vpop.f32.mrf.mxu0
        %v1651 = vadd.f32 %v1596, %v1650
        %v1652 = vpop.f32.mrf.mxu0
        %v1653 = vadd.f32 %v1596, %v1652
        %1654 = vdwg.mxu0
        %v1655 = vmax.f32 %v1647, 0.0
        %v1656 = vmax.f32 %v1649, 0.0
        %v1657 = vmax.f32 %v1651, 0.0
        %v1658 = vmax.f32 %v1653, 0.0
        %v1659 = vpack.c.bf16 %v1657, %v1655
        %v1660 = vpack.c.bf16 %v1658, %v1656
        %v1661 = vld [vmem:[%s1 + $0xa4] sm:$0xf]
        %v1662 = vld [vmem:[%s1 + $0xa8] sm:$0xf]
        %v1663 = vld [vmem:[%s2 + $0x148] sm:$0xff]
        %v1664 = vld [vmem:[%s2 + $0x150] sm:$0xff]
        %1666 = vset.pattern.permute.xlu0 0
        %1667 = vperm.xlu0 %1666, %v1663
        %v1668 = vpop.permute.xlu0 %1667
        %1671 = vset.pattern.permute.xlu0 0
        %1672 = vperm.xlu0 %1671, %v1664
        %v1673 = vpop.permute.xlu0 %1672
        %v1677 = vunpack.c.l.b16 %v1661
        %v1678 = vunpack.c.l.b16 %v1662
        %v1679 = vpack.c.b16 %v1678, %v1677
        %v1681 = vsel %vm406, %v1679, 0
        %1683 = vmatprep.subr.bf16.mxu0 0
        %1684 = vmatpush1.bf16.msra.mxu0 0
        %1685 = vmatprep.subr.bf16.mxu0 0
        %1686 = vmatpush1.bf16.msra.mxu0 0
        %1687 = vmatprep.subr.bf16.mxu0 0
        %1688 = vmatpush1.bf16.msra.mxu0 0
        %1689 = vmatprep.subr.bf16.mxu0 0
        %1690 = vmatpush1.bf16.msra.mxu0 0
        %1691 = vmatprep.subr.bf16.mxu0 0
        %1692 = vmatpush1.bf16.msra.mxu0 0
        %1693 = vmatprep.subr.bf16.mxu0 0
        %1694 = vmatpush1.bf16.msra.mxu0 0
        %1695 = vmatprep.subr.bf16.mxu0 0
        %1696 = vmatpush1.bf16.msra.mxu0 0
        %1697 = vmatprep.subr.bf16.mxu0 %v1660
        %1698 = vmatpush1.bf16.msra.mxu0 %v1659
        %1699 = vmatprep.subr.bf16.mxu0 0
        %1700 = vmatpush2.bf16.msra.mxu0 0
        %1701 = vmatprep.subr.bf16.mxu0 0
        %1702 = vmatpush2.bf16.msra.mxu0 0
        %1703 = vmatprep.subr.bf16.mxu0 0
        %1704 = vmatpush2.bf16.msra.mxu0 0
        %1705 = vmatprep.subr.bf16.mxu0 0
        %1706 = vmatpush2.bf16.msra.mxu0 0
        %1707 = vmatprep.subr.bf16.mxu0 0
        %1708 = vmatpush2.bf16.msra.mxu0 0
        %1709 = vmatprep.subr.bf16.mxu0 0
        %1710 = vmatpush2.bf16.msra.mxu0 0
        %1711 = vmatprep.subr.bf16.mxu0 0
        %1712 = vmatpush2.bf16.msra.mxu0 0
        %1713 = vmatprep.subr.bf16.mxu0 0
        %1714 = vmatpush2.bf16.msra.mxu0 0
        %1715 = vmatprep.mubr.bf16.mxu0 0
        %1716 = vmatmul.mubr.bf16.gmra.mxu0 %v1681
        %v1717 = vpop.f32.mrf.mxu0
        %v1718 = vadd.f32 %v1668, %v1717
        %v1719 = vpop.f32.mrf.mxu0
        %v1720 = vadd.f32 %v1668, %v1719
        %v1721 = vpop.f32.mrf.mxu0
        %v1722 = vadd.f32 %v1673, %v1721
        %v1723 = vpop.f32.mrf.mxu0
        %v1724 = vadd.f32 %v1673, %v1723
        %1725 = vdwg.mxu0
        %v1726 = vmax.f32 %v1718, 0.0
        %v1727 = vmax.f32 %v1720, 0.0
        %v1728 = vmax.f32 %v1722, 0.0
        %v1729 = vmax.f32 %v1724, 0.0
        %v1730 = vpack.c.bf16 %v1728, %v1726
        %v1731 = vpack.c.bf16 %v1729, %v1727
        %v1732 = vld [vmem:[%s1 + $0xac] sm:$0xf]
        %v1733 = vld [vmem:[%s1 + $0xb0] sm:$0xf]
        %v1734 = vld [vmem:[%s1 + $0xb4] sm:$0xf]
        %v1735 = vld [vmem:[%s1 + $0xb8] sm:$0xf]
        %v1736 = vld [vmem:[%s1 + $0xbc] sm:$0xf]
        %v1737 = vld [vmem:[%s1 + $0xc0] sm:$0xf]
        %v1738 = vld [vmem:[%s1 + $0xc4] sm:$0xf]
        %v1739 = vld [vmem:[%s1 + $0xc8] sm:$0xf]
        %v1740 = vld [vmem:[%s2 + $0x158] sm:$0xff]
        %v1741 = vld [vmem:[%s2 + $0x160] sm:$0xff]
        %v1742 = vld [vmem:[%s2 + $0x168] sm:$0xff]
        %v1743 = vld [vmem:[%s2 + $0x170] sm:$0xff]
        %v1744 = vld [vmem:[%s2 + $0x178] sm:$0xff]
        %v1745 = vld [vmem:[%s2 + $0x180] sm:$0xff]
        %v1746 = vld [vmem:[%s2 + $0x188] sm:$0xff]
        %v1747 = vld [vmem:[%s2 + $0x190] sm:$0xff]
        %1749 = vset.pattern.permute.xlu0 0
        %1750 = vperm.xlu0 %1749, %v1740
        %v1751 = vpop.permute.xlu0 %1750
        %1754 = vset.pattern.permute.xlu0 0
        %1755 = vperm.xlu0 %1754, %v1741
        %v1756 = vpop.permute.xlu0 %1755
        %1759 = vset.pattern.permute.xlu0 0
        %1760 = vperm.xlu0 %1759, %v1742
        %v1761 = vpop.permute.xlu0 %1760
        %1764 = vset.pattern.permute.xlu0 0
        %1765 = vperm.xlu0 %1764, %v1743
        %v1766 = vpop.permute.xlu0 %1765
        %1769 = vset.pattern.permute.xlu0 0
        %1770 = vperm.xlu0 %1769, %v1744
        %v1771 = vpop.permute.xlu0 %1770
        %1774 = vset.pattern.permute.xlu0 0
        %1775 = vperm.xlu0 %1774, %v1745
        %v1776 = vpop.permute.xlu0 %1775
        %1779 = vset.pattern.permute.xlu0 0
        %1780 = vperm.xlu0 %1779, %v1746
        %v1781 = vpop.permute.xlu0 %1780
        %1784 = vset.pattern.permute.xlu0 0
        %1785 = vperm.xlu0 %1784, %v1747
        %v1786 = vpop.permute.xlu0 %1785
        %v1796 = vunpack.c.l.b16 %v1732
        %v1797 = vunpack.c.l.b16 %v1733
        %v1798 = vunpack.c.l.b16 %v1734
        %v1799 = vunpack.c.l.b16 %v1735
        %v1800 = vunpack.c.l.b16 %v1736
        %v1801 = vunpack.c.l.b16 %v1737
        %v1802 = vunpack.c.l.b16 %v1738
        %v1803 = vunpack.c.l.b16 %v1739
        %v1804 = vpack.c.b16 %v1797, %v1796
        %v1805 = vpack.c.b16 %v1799, %v1798
        %v1806 = vpack.c.b16 %v1801, %v1800
        %v1807 = vpack.c.b16 %v1803, %v1802
        %v1809 = vsel %vm406, %v1804, 0
        %v1812 = vsel %vm406, %v1805, 0
        %v1815 = vsel %vm406, %v1806, 0
        %v1818 = vsel %vm406, %v1807, 0
        %1820 = vmatprep.subr.bf16.mxu0 0
        %1821 = vmatpush1.bf16.msra.mxu0 0
        %1822 = vmatprep.subr.bf16.mxu0 0
        %1823 = vmatpush1.bf16.msra.mxu0 0
        %1824 = vmatprep.subr.bf16.mxu0 0
        %1825 = vmatpush1.bf16.msra.mxu0 0
        %1826 = vmatprep.subr.bf16.mxu0 0
        %1827 = vmatpush1.bf16.msra.mxu0 0
        %1828 = vmatprep.subr.bf16.mxu0 0
        %1829 = vmatpush1.bf16.msra.mxu0 0
        %1830 = vmatprep.subr.bf16.mxu0 0
        %1831 = vmatpush1.bf16.msra.mxu0 0
        %1832 = vmatprep.subr.bf16.mxu0 0
        %1833 = vmatpush1.bf16.msra.mxu0 0
        %1834 = vmatprep.subr.bf16.mxu0 %v1731
        %1835 = vmatpush1.bf16.msra.mxu0 %v1730
        %1836 = vmatprep.subr.bf16.mxu0 0
        %1837 = vmatpush2.bf16.msra.mxu0 0
        %1838 = vmatprep.subr.bf16.mxu0 0
        %1839 = vmatpush2.bf16.msra.mxu0 0
        %1840 = vmatprep.subr.bf16.mxu0 0
        %1841 = vmatpush2.bf16.msra.mxu0 0
        %1842 = vmatprep.subr.bf16.mxu0 0
        %1843 = vmatpush2.bf16.msra.mxu0 0
        %1844 = vmatprep.subr.bf16.mxu0 0
        %1845 = vmatpush2.bf16.msra.mxu0 0
        %1846 = vmatprep.subr.bf16.mxu0 0
        %1847 = vmatpush2.bf16.msra.mxu0 0
        %1848 = vmatprep.subr.bf16.mxu0 0
        %1849 = vmatpush2.bf16.msra.mxu0 0
        %1850 = vmatprep.subr.bf16.mxu0 0
        %1851 = vmatpush2.bf16.msra.mxu0 0
        %1852 = vmatprep.mubr.bf16.mxu0 0
        %1853 = vmatmul.mubr.bf16.gmra.mxu0 %v1809
        %v1854 = vpop.f32.mrf.mxu0
        %v1855 = vadd.f32 %v1751, %v1854
        %v1856 = vpop.f32.mrf.mxu0
        %v1857 = vadd.f32 %v1751, %v1856
        %v1858 = vpop.f32.mrf.mxu0
        %v1859 = vadd.f32 %v1756, %v1858
        %v1860 = vpop.f32.mrf.mxu0
        %v1861 = vadd.f32 %v1756, %v1860
        %1862 = vmatprep.mubr.bf16.mxu0 0
        %1863 = vmatmul.mubr.bf16.gmra.mxu0 %v1812
        %v1864 = vpop.f32.mrf.mxu0
        %v1865 = vadd.f32 %v1761, %v1864
        %v1866 = vpop.f32.mrf.mxu0
        %v1867 = vadd.f32 %v1761, %v1866
        %v1868 = vpop.f32.mrf.mxu0
        %v1869 = vadd.f32 %v1766, %v1868
        %v1870 = vpop.f32.mrf.mxu0
        %v1871 = vadd.f32 %v1766, %v1870
        %1872 = vmatprep.mubr.bf16.mxu0 0
        %1873 = vmatmul.mubr.bf16.gmra.mxu0 %v1815
        %v1874 = vpop.f32.mrf.mxu0
        %v1875 = vadd.f32 %v1771, %v1874
        %v1876 = vpop.f32.mrf.mxu0
        %v1877 = vadd.f32 %v1771, %v1876
        %v1878 = vpop.f32.mrf.mxu0
        %v1879 = vadd.f32 %v1776, %v1878
        %v1880 = vpop.f32.mrf.mxu0
        %v1881 = vadd.f32 %v1776, %v1880
        %1882 = vmatprep.mubr.bf16.mxu0 0
        %1883 = vmatmul.mubr.bf16.gmra.mxu0 %v1818
        %v1884 = vpop.f32.mrf.mxu0
        %v1885 = vadd.f32 %v1781, %v1884
        %v1886 = vpop.f32.mrf.mxu0
        %v1887 = vadd.f32 %v1781, %v1886
        %v1888 = vpop.f32.mrf.mxu0
        %v1889 = vadd.f32 %v1786, %v1888
        %v1890 = vpop.f32.mrf.mxu0
        %v1891 = vadd.f32 %v1786, %v1890
        %1892 = vdwg.mxu0
        %v1893 = vmax.f32 %v1855, 0.0
        %v1894 = vmax.f32 %v1857, 0.0
        %v1895 = vmax.f32 %v1859, 0.0
        %v1896 = vmax.f32 %v1861, 0.0
        %v1897 = vmax.f32 %v1865, 0.0
        %v1898 = vmax.f32 %v1867, 0.0
        %v1899 = vmax.f32 %v1869, 0.0
        %v1900 = vmax.f32 %v1871, 0.0
        %v1901 = vmax.f32 %v1875, 0.0
        %v1902 = vmax.f32 %v1877, 0.0
        %v1903 = vmax.f32 %v1879, 0.0
        %v1904 = vmax.f32 %v1881, 0.0
        %v1905 = vmax.f32 %v1885, 0.0
        %v1906 = vmax.f32 %v1887, 0.0
        %v1907 = vmax.f32 %v1889, 0.0
        %v1908 = vmax.f32 %v1891, 0.0
        %v1909 = vpack.c.bf16 %v1895, %v1893
        %v1910 = vpack.c.bf16 %v1896, %v1894
        %v1911 = vpack.c.bf16 %v1899, %v1897
        %v1912 = vpack.c.bf16 %v1900, %v1898
        %v1913 = vpack.c.bf16 %v1903, %v1901
        %v1914 = vpack.c.bf16 %v1904, %v1902
        %v1915 = vpack.c.bf16 %v1907, %v1905
        %v1916 = vpack.c.bf16 %v1908, %v1906
        %v1917 = vld [vmem:[%s1 + $0xcc] sm:$0xf]
        %v1918 = vld [vmem:[%s1 + $0xd0] sm:$0xf]
        %v1919 = vld [vmem:[%s1 + $0xd4] sm:$0xf]
        %v1920 = vld [vmem:[%s1 + $0xd8] sm:$0xf]
        %v1921 = vld [vmem:[%s1 + $0xdc] sm:$0xf]
        %v1922 = vld [vmem:[%s1 + $0xe0] sm:$0xf]
        %v1923 = vld [vmem:[%s1 + $0xe4] sm:$0xf]
        %v1924 = vld [vmem:[%s1 + $0xe8] sm:$0xf]
        %v1925 = vld [vmem:[%s1 + $0xec] sm:$0xf]
        %v1926 = vld [vmem:[%s1 + $0xf0] sm:$0xf]
        %v1927 = vld [vmem:[%s1 + $0xf4] sm:$0xf]
        %v1928 = vld [vmem:[%s1 + $0xf8] sm:$0xf]
        %v1929 = vld [vmem:[%s1 + $0xfc] sm:$0xf]
        %v1930 = vld [vmem:[%s1 + $0x100] sm:$0xf]
        %v1931 = vld [vmem:[%s1 + $0x104] sm:$0xf]
        %v1932 = vld [vmem:[%s1 + $0x108] sm:$0xf]
        %v1933 = vld [vmem:[%s2 + $0x198] sm:$0xff]
        %v1934 = vld [vmem:[%s2 + $0x1a0] sm:$0xff]
        %v1935 = vld [vmem:[%s2 + $0x1a8] sm:$0xff]
        %v1936 = vld [vmem:[%s2 + $0x1b0] sm:$0xff]
        %v1937 = vld [vmem:[%s2 + $0x1b8] sm:$0xff]
        %v1938 = vld [vmem:[%s2 + $0x1c0] sm:$0xff]
        %v1939 = vld [vmem:[%s2 + $0x1c8] sm:$0xff]
        %v1940 = vld [vmem:[%s2 + $0x1d0] sm:$0xff]
        %v1941 = vld [vmem:[%s2 + $0x1d8] sm:$0xff]
        %v1942 = vld [vmem:[%s2 + $0x1e0] sm:$0xff]
        %v1943 = vld [vmem:[%s2 + $0x1e8] sm:$0xff]
        %v1944 = vld [vmem:[%s2 + $0x1f0] sm:$0xff]
        %v1945 = vld [vmem:[%s2 + $0x1f8] sm:$0xff]
        %v1946 = vld [vmem:[%s2 + $0x200] sm:$0xff]
        %v1947 = vld [vmem:[%s2 + $0x208] sm:$0xff]
        %v1948 = vld [vmem:[%s2 + $0x210] sm:$0xff]
        %1950 = vset.pattern.permute.xlu0 0
        %1951 = vperm.xlu0 %1950, %v1933
        %v1952 = vpop.permute.xlu0 %1951
        %1955 = vset.pattern.permute.xlu0 0
        %1956 = vperm.xlu0 %1955, %v1934
        %v1957 = vpop.permute.xlu0 %1956
        %1960 = vset.pattern.permute.xlu0 0
        %1961 = vperm.xlu0 %1960, %v1935
        %v1962 = vpop.permute.xlu0 %1961
        %1965 = vset.pattern.permute.xlu0 0
        %1966 = vperm.xlu0 %1965, %v1936
        %v1967 = vpop.permute.xlu0 %1966
        %1970 = vset.pattern.permute.xlu0 0
        %1971 = vperm.xlu0 %1970, %v1937
        %v1972 = vpop.permute.xlu0 %1971
        %1975 = vset.pattern.permute.xlu0 0
        %1976 = vperm.xlu0 %1975, %v1938
        %v1977 = vpop.permute.xlu0 %1976
        %1980 = vset.pattern.permute.xlu0 0
        %1981 = vperm.xlu0 %1980, %v1939
        %v1982 = vpop.permute.xlu0 %1981
        %1985 = vset.pattern.permute.xlu0 0
        %1986 = vperm.xlu0 %1985, %v1940
        %v1987 = vpop.permute.xlu0 %1986
        %1990 = vset.pattern.permute.xlu0 0
        %1991 = vperm.xlu0 %1990, %v1941
        %v1992 = vpop.permute.xlu0 %1991
        %1995 = vset.pattern.permute.xlu0 0
        %1996 = vperm.xlu0 %1995, %v1942
        %v1997 = vpop.permute.xlu0 %1996
        %2000 = vset.pattern.permute.xlu0 0
        %2001 = vperm.xlu0 %2000, %v1943
        %v2002 = vpop.permute.xlu0 %2001
        %2005 = vset.pattern.permute.xlu0 0
        %2006 = vperm.xlu0 %2005, %v1944
        %v2007 = vpop.permute.xlu0 %2006
        %2010 = vset.pattern.permute.xlu0 0
        %2011 = vperm.xlu0 %2010, %v1945
        %v2012 = vpop.permute.xlu0 %2011
        %2015 = vset.pattern.permute.xlu0 0
        %2016 = vperm.xlu0 %2015, %v1946
        %v2017 = vpop.permute.xlu0 %2016
        %2020 = vset.pattern.permute.xlu0 0
        %2021 = vperm.xlu0 %2020, %v1947
        %v2022 = vpop.permute.xlu0 %2021
        %2025 = vset.pattern.permute.xlu0 0
        %2026 = vperm.xlu0 %2025, %v1948
        %v2027 = vpop.permute.xlu0 %2026
        %v2045 = vunpack.c.l.b16 %v1917
        %v2046 = vunpack.c.l.b16 %v1918
        %v2047 = vunpack.c.l.b16 %v1919
        %v2048 = vunpack.c.l.b16 %v1920
        %v2049 = vunpack.c.l.b16 %v1921
        %v2050 = vunpack.c.l.b16 %v1922
        %v2051 = vunpack.c.l.b16 %v1923
        %v2052 = vunpack.c.l.b16 %v1924
        %v2053 = vunpack.c.l.b16 %v1925
        %v2054 = vunpack.c.l.b16 %v1926
        %v2055 = vunpack.c.l.b16 %v1927
        %v2056 = vunpack.c.l.b16 %v1928
        %v2057 = vunpack.c.l.b16 %v1929
        %v2058 = vunpack.c.l.b16 %v1930
        %v2059 = vunpack.c.l.b16 %v1931
        %v2060 = vunpack.c.l.b16 %v1932
        %v2061 = vpack.c.b16 %v2046, %v2045
        %v2062 = vpack.c.b16 %v2048, %v2047
        %v2063 = vpack.c.b16 %v2050, %v2049
        %v2064 = vpack.c.b16 %v2052, %v2051
        %v2065 = vpack.c.b16 %v2054, %v2053
        %v2066 = vpack.c.b16 %v2056, %v2055
        %v2067 = vpack.c.b16 %v2058, %v2057
        %v2068 = vpack.c.b16 %v2060, %v2059
        %v2070 = vsel %vm788, %v2061, 0
        %v2073 = vsel %vm788, %v2062, 0
        %v2076 = vsel %vm788, %v2063, 0
        %v2079 = vsel %vm788, %v2064, 0
        %v2082 = vsel %vm788, %v2065, 0
        %v2085 = vsel %vm788, %v2066, 0
        %v2088 = vsel %vm788, %v2067, 0
        %v2091 = vsel %vm788, %v2068, 0
        %2093 = vmatprep.subr.bf16.mxu0 0
        %2094 = vmatpush1.bf16.msra.mxu0 0
        %2095 = vmatprep.subr.bf16.mxu0 0
        %2096 = vmatpush1.bf16.msra.mxu0 0
        %2097 = vmatprep.subr.bf16.mxu0 0
        %2098 = vmatpush1.bf16.msra.mxu0 0
        %2099 = vmatprep.subr.bf16.mxu0 0
        %2100 = vmatpush1.bf16.msra.mxu0 0
        %2101 = vmatprep.subr.bf16.mxu0 %v1916
        %2102 = vmatpush1.bf16.msra.mxu0 %v1915
        %2103 = vmatprep.subr.bf16.mxu0 %v1914
        %2104 = vmatpush1.bf16.msra.mxu0 %v1913
        %2105 = vmatprep.subr.bf16.mxu0 %v1912
        %2106 = vmatpush1.bf16.msra.mxu0 %v1911
        %2107 = vmatprep.subr.bf16.mxu0 %v1910
        %2108 = vmatpush1.bf16.msra.mxu0 %v1909
        %2109 = vmatprep.subr.bf16.mxu0 0
        %2110 = vmatpush2.bf16.msra.mxu0 0
        %2111 = vmatprep.subr.bf16.mxu0 0
        %2112 = vmatpush2.bf16.msra.mxu0 0
        %2113 = vmatprep.subr.bf16.mxu0 0
        %2114 = vmatpush2.bf16.msra.mxu0 0
        %2115 = vmatprep.subr.bf16.mxu0 0
        %2116 = vmatpush2.bf16.msra.mxu0 0
        %2117 = vmatprep.subr.bf16.mxu0 0
        %2118 = vmatpush2.bf16.msra.mxu0 0
        %2119 = vmatprep.subr.bf16.mxu0 0
        %2120 = vmatpush2.bf16.msra.mxu0 0
        %2121 = vmatprep.subr.bf16.mxu0 0
        %2122 = vmatpush2.bf16.msra.mxu0 0
        %2123 = vmatprep.subr.bf16.mxu0 0
        %2124 = vmatpush2.bf16.msra.mxu0 0
        %2125 = vmatprep.mubr.bf16.mxu0 0
        %2126 = vmatmul.mubr.bf16.gmra.mxu0 %v2070
        %v2127 = vpop.f32.mrf.mxu0
        %v2128 = vadd.f32 %v1952, %v2127
        %v2129 = vpop.f32.mrf.mxu0
        %v2130 = vadd.f32 %v1952, %v2129
        %v2131 = vpop.f32.mrf.mxu0
        %v2132 = vadd.f32 %v1957, %v2131
        %v2133 = vpop.f32.mrf.mxu0
        %v2134 = vadd.f32 %v1957, %v2133
        %2135 = vmatprep.mubr.bf16.mxu0 0
        %2136 = vmatmul.mubr.bf16.gmra.mxu0 %v2073
        %v2137 = vpop.f32.mrf.mxu0
        %v2138 = vadd.f32 %v1962, %v2137
        %v2139 = vpop.f32.mrf.mxu0
        %v2140 = vadd.f32 %v1962, %v2139
        %v2141 = vpop.f32.mrf.mxu0
        %v2142 = vadd.f32 %v1967, %v2141
        %v2143 = vpop.f32.mrf.mxu0
        %v2144 = vadd.f32 %v1967, %v2143
        %2145 = vmatprep.mubr.bf16.mxu0 0
        %2146 = vmatmul.mubr.bf16.gmra.mxu0 %v2076
        %v2147 = vpop.f32.mrf.mxu0
        %v2148 = vadd.f32 %v1972, %v2147
        %v2149 = vpop.f32.mrf.mxu0
        %v2150 = vadd.f32 %v1972, %v2149
        %v2151 = vpop.f32.mrf.mxu0
        %v2152 = vadd.f32 %v1977, %v2151
        %v2153 = vpop.f32.mrf.mxu0
        %v2154 = vadd.f32 %v1977, %v2153
        %2155 = vmatprep.mubr.bf16.mxu0 0
        %2156 = vmatmul.mubr.bf16.gmra.mxu0 %v2079
        %v2157 = vpop.f32.mrf.mxu0
        %v2158 = vadd.f32 %v1982, %v2157
        %v2159 = vpop.f32.mrf.mxu0
        %v2160 = vadd.f32 %v1982, %v2159
        %v2161 = vpop.f32.mrf.mxu0
        %v2162 = vadd.f32 %v1987, %v2161
        %v2163 = vpop.f32.mrf.mxu0
        %v2164 = vadd.f32 %v1987, %v2163
        %2165 = vmatprep.mubr.bf16.mxu0 0
        %2166 = vmatmul.mubr.bf16.gmra.mxu0 %v2082
        %v2167 = vpop.f32.mrf.mxu0
        %v2168 = vadd.f32 %v1992, %v2167
        %v2169 = vpop.f32.mrf.mxu0
        %v2170 = vadd.f32 %v1992, %v2169
        %v2171 = vpop.f32.mrf.mxu0
        %v2172 = vadd.f32 %v1997, %v2171
        %v2173 = vpop.f32.mrf.mxu0
        %v2174 = vadd.f32 %v1997, %v2173
        %2175 = vmatprep.mubr.bf16.mxu0 0
        %2176 = vmatmul.mubr.bf16.gmra.mxu0 %v2085
        %v2177 = vpop.f32.mrf.mxu0
        %v2178 = vadd.f32 %v2002, %v2177
        %v2179 = vpop.f32.mrf.mxu0
        %v2180 = vadd.f32 %v2002, %v2179
        %v2181 = vpop.f32.mrf.mxu0
        %v2182 = vadd.f32 %v2007, %v2181
        %v2183 = vpop.f32.mrf.mxu0
        %v2184 = vadd.f32 %v2007, %v2183
        %2185 = vmatprep.mubr.bf16.mxu0 0
        %2186 = vmatmul.mubr.bf16.gmra.mxu0 %v2088
        %v2187 = vpop.f32.mrf.mxu0
        %v2188 = vadd.f32 %v2012, %v2187
        %v2189 = vpop.f32.mrf.mxu0
        %v2190 = vadd.f32 %v2012, %v2189
        %v2191 = vpop.f32.mrf.mxu0
        %v2192 = vadd.f32 %v2017, %v2191
        %v2193 = vpop.f32.mrf.mxu0
        %v2194 = vadd.f32 %v2017, %v2193
        %2195 = vmatprep.mubr.bf16.mxu0 0
        %2196 = vmatmul.mubr.bf16.gmra.mxu0 %v2091
        %v2197 = vpop.f32.mrf.mxu0
        %v2198 = vadd.f32 %v2022, %v2197
        %v2199 = vpop.f32.mrf.mxu0
        %v2200 = vadd.f32 %v2022, %v2199
        %v2201 = vpop.f32.mrf.mxu0
        %v2202 = vadd.f32 %v2027, %v2201
        %v2203 = vpop.f32.mrf.mxu0
        %v2204 = vadd.f32 %v2027, %v2203
        %2205 = vdwg.mxu0
        %v2206 = vmax.f32 %v2128, 0.0
        %v2207 = vmax.f32 %v2130, 0.0
        %v2208 = vmax.f32 %v2132, 0.0
        %v2209 = vmax.f32 %v2134, 0.0
        %v2210 = vmax.f32 %v2138, 0.0
        %v2211 = vmax.f32 %v2140, 0.0
        %v2212 = vmax.f32 %v2142, 0.0
        %v2213 = vmax.f32 %v2144, 0.0
        %v2214 = vmax.f32 %v2148, 0.0
        %v2215 = vmax.f32 %v2150, 0.0
        %v2216 = vmax.f32 %v2152, 0.0
        %v2217 = vmax.f32 %v2154, 0.0
        %v2218 = vmax.f32 %v2158, 0.0
        %v2219 = vmax.f32 %v2160, 0.0
        %v2220 = vmax.f32 %v2162, 0.0
        %v2221 = vmax.f32 %v2164, 0.0
        %v2222 = vmax.f32 %v2168, 0.0
        %v2223 = vmax.f32 %v2170, 0.0
        %v2224 = vmax.f32 %v2172, 0.0
        %v2225 = vmax.f32 %v2174, 0.0
        %v2226 = vmax.f32 %v2178, 0.0
        %v2227 = vmax.f32 %v2180, 0.0
        %v2228 = vmax.f32 %v2182, 0.0
        %v2229 = vmax.f32 %v2184, 0.0
        %v2230 = vmax.f32 %v2188, 0.0
        %v2231 = vmax.f32 %v2190, 0.0
        %v2232 = vmax.f32 %v2192, 0.0
        %v2233 = vmax.f32 %v2194, 0.0
        %v2234 = vmax.f32 %v2198, 0.0
        %v2235 = vmax.f32 %v2200, 0.0
        %v2236 = vmax.f32 %v2202, 0.0
        %v2237 = vmax.f32 %v2204, 0.0
        %v2238 = vpack.c.bf16 %v2208, %v2206
        %v2239 = vpack.c.bf16 %v2209, %v2207
        %v2240 = vpack.c.bf16 %v2212, %v2210
        %v2241 = vpack.c.bf16 %v2213, %v2211
        %v2242 = vpack.c.bf16 %v2216, %v2214
        %v2243 = vpack.c.bf16 %v2217, %v2215
        %v2244 = vpack.c.bf16 %v2220, %v2218
        %v2245 = vpack.c.bf16 %v2221, %v2219
        %v2246 = vpack.c.bf16 %v2224, %v2222
        %v2247 = vpack.c.bf16 %v2225, %v2223
        %v2248 = vpack.c.bf16 %v2228, %v2226
        %v2249 = vpack.c.bf16 %v2229, %v2227
        %v2250 = vpack.c.bf16 %v2232, %v2230
        %v2251 = vpack.c.bf16 %v2233, %v2231
        %v2252 = vpack.c.bf16 %v2236, %v2234
        %v2253 = vpack.c.bf16 %v2237, %v2235
        %v2254 = vld [vmem:[%s1 + $0x10c] sm:$0xf]
        %v2255 = vld [vmem:[%s1 + $0x110] sm:$0xf]
        %v2256 = vld [vmem:[%s2 + $0x218] sm:$0xff]
        %v2257 = vld [vmem:[%s2 + $0x220] sm:$0xff]
        %2259 = vset.pattern.permute.xlu0 0
        %2260 = vperm.xlu0 %2259, %v2256
        %v2261 = vpop.permute.xlu0 %2260
        %2264 = vset.pattern.permute.xlu0 0
        %2265 = vperm.xlu0 %2264, %v2257
        %v2266 = vpop.permute.xlu0 %2265
        %v2270 = vunpack.c.l.b16 %v2254
        %v2271 = vunpack.c.l.b16 %v2255
        %v2272 = vpack.c.b16 %v2271, %v2270
        %2274 = vmatprep.subr.bf16.mxu0 %v2253
        %2275 = vmatpush1.bf16.msra.mxu0 %v2252
        %2276 = vmatprep.subr.bf16.mxu0 %v2251
        %2277 = vmatpush1.bf16.msra.mxu0 %v2250
        %2278 = vmatprep.subr.bf16.mxu0 %v2249
        %2279 = vmatpush1.bf16.msra.mxu0 %v2248
        %2280 = vmatprep.subr.bf16.mxu0 %v2247
        %2281 = vmatpush1.bf16.msra.mxu0 %v2246
        %2282 = vmatprep.subr.bf16.mxu0 %v2245
        %2283 = vmatpush1.bf16.msra.mxu0 %v2244
        %2284 = vmatprep.subr.bf16.mxu0 %v2243
        %2285 = vmatpush1.bf16.msra.mxu0 %v2242
        %2286 = vmatprep.subr.bf16.mxu0 %v2241
        %2287 = vmatpush1.bf16.msra.mxu0 %v2240
        %2288 = vmatprep.subr.bf16.mxu0 %v2239
        %2289 = vmatpush1.bf16.msra.mxu0 %v2238
        %2290 = vmatprep.subr.bf16.mxu0 0
        %2291 = vmatpush2.bf16.msra.mxu0 0
        %2292 = vmatprep.subr.bf16.mxu0 0
        %2293 = vmatpush2.bf16.msra.mxu0 0
        %2294 = vmatprep.subr.bf16.mxu0 0
        %2295 = vmatpush2.bf16.msra.mxu0 0
        %2296 = vmatprep.subr.bf16.mxu0 0
        %2297 = vmatpush2.bf16.msra.mxu0 0
        %2298 = vmatprep.subr.bf16.mxu0 0
        %2299 = vmatpush2.bf16.msra.mxu0 0
        %2300 = vmatprep.subr.bf16.mxu0 0
        %2301 = vmatpush2.bf16.msra.mxu0 0
        %2302 = vmatprep.subr.bf16.mxu0 0
        %2303 = vmatpush2.bf16.msra.mxu0 0
        %2304 = vmatprep.subr.bf16.mxu0 0
        %2305 = vmatpush2.bf16.msra.mxu0 0
        %2306 = vmatprep.mubr.bf16.mxu0 0
        %2307 = vmatmul.mubr.bf16.gmra.mxu0 %v2272
        %v2308 = vpop.f32.mrf.mxu0
        %v2309 = vadd.f32 %v2261, %v2308
        %v2310 = vpop.f32.mrf.mxu0
        %v2311 = vadd.f32 %v2261, %v2310
        %v2312 = vpop.f32.mrf.mxu0
        %v2313 = vadd.f32 %v2266, %v2312
        %v2314 = vpop.f32.mrf.mxu0
        %v2315 = vadd.f32 %v2266, %v2314
        %2316 = vdwg.mxu0
        %v2317 = vpack.c.bf16 %v2313, %v2309
        %v2318 = vpack.c.bf16 %v2315, %v2311
        %v2319 = vld [vmem:[%s1 + $0x114] sm:$0xf]
        %v2320 = vld [vmem:[%s1 + $0x118] sm:$0xf]
        %v2321 = vld [vmem:[%s1 + $0x11c] sm:$0xf]
        %v2322 = vld [vmem:[%s1 + $0x120] sm:$0xf]
        %v2323 = vld [vmem:[%s1 + $0x124] sm:$0xf]
        %v2324 = vld [vmem:[%s1 + $0x128] sm:$0xf]
        %v2325 = vld [vmem:[%s1 + $0x12c] sm:$0xf]
        %v2326 = vld [vmem:[%s1 + $0x130] sm:$0xf]
        %v2327 = vld [vmem:[%s1 + $0x134] sm:$0xf]
        %v2328 = vld [vmem:[%s1 + $0x138] sm:$0xf]
        %v2329 = vld [vmem:[%s1 + $0x13c] sm:$0xf]
        %v2330 = vld [vmem:[%s1 + $0x140] sm:$0xf]
        %v2331 = vld [vmem:[%s1 + $0x144] sm:$0xf]
        %v2332 = vld [vmem:[%s1 + $0x148] sm:$0xf]
        %v2333 = vld [vmem:[%s1 + $0x14c] sm:$0xf]
        %v2334 = vld [vmem:[%s1 + $0x150] sm:$0xf]
        %v2335 = vld [vmem:[%s2 + $0x228] sm:$0xff]
        %v2336 = vld [vmem:[%s2 + $0x230] sm:$0xff]
        %v2337 = vld [vmem:[%s2 + $0x238] sm:$0xff]
        %v2338 = vld [vmem:[%s2 + $0x240] sm:$0xff]
        %v2339 = vld [vmem:[%s2 + $0x248] sm:$0xff]
        %v2340 = vld [vmem:[%s2 + $0x250] sm:$0xff]
        %v2341 = vld [vmem:[%s2 + $0x258] sm:$0xff]
        %v2342 = vld [vmem:[%s2 + $0x260] sm:$0xff]
        %v2343 = vld [vmem:[%s2 + $0x268] sm:$0xff]
        %v2344 = vld [vmem:[%s2 + $0x270] sm:$0xff]
        %v2345 = vld [vmem:[%s2 + $0x278] sm:$0xff]
        %v2346 = vld [vmem:[%s2 + $0x280] sm:$0xff]
        %v2347 = vld [vmem:[%s2 + $0x288] sm:$0xff]
        %v2348 = vld [vmem:[%s2 + $0x290] sm:$0xff]
        %v2349 = vld [vmem:[%s2 + $0x298] sm:$0xff]
        %v2350 = vld [vmem:[%s2 + $0x2a0] sm:$0xff]
        %2352 = vset.pattern.permute.xlu0 0
        %2353 = vperm.xlu0 %2352, %v2335
        %v2354 = vpop.permute.xlu0 %2353
        %2357 = vset.pattern.permute.xlu0 0
        %2358 = vperm.xlu0 %2357, %v2336
        %v2359 = vpop.permute.xlu0 %2358
        %2362 = vset.pattern.permute.xlu0 0
        %2363 = vperm.xlu0 %2362, %v2337
        %v2364 = vpop.permute.xlu0 %2363
        %2367 = vset.pattern.permute.xlu0 0
        %2368 = vperm.xlu0 %2367, %v2338
        %v2369 = vpop.permute.xlu0 %2368
        %2372 = vset.pattern.permute.xlu0 0
        %2373 = vperm.xlu0 %2372, %v2339
        %v2374 = vpop.permute.xlu0 %2373
        %2377 = vset.pattern.permute.xlu0 0
        %2378 = vperm.xlu0 %2377, %v2340
        %v2379 = vpop.permute.xlu0 %2378
        %2382 = vset.pattern.permute.xlu0 0
        %2383 = vperm.xlu0 %2382, %v2341
        %v2384 = vpop.permute.xlu0 %2383
        %2387 = vset.pattern.permute.xlu0 0
        %2388 = vperm.xlu0 %2387, %v2342
        %v2389 = vpop.permute.xlu0 %2388
        %2392 = vset.pattern.permute.xlu0 0
        %2393 = vperm.xlu0 %2392, %v2343
        %v2394 = vpop.permute.xlu0 %2393
        %2397 = vset.pattern.permute.xlu0 0
        %2398 = vperm.xlu0 %2397, %v2344
        %v2399 = vpop.permute.xlu0 %2398
        %2402 = vset.pattern.permute.xlu0 0
        %2403 = vperm.xlu0 %2402, %v2345
        %v2404 = vpop.permute.xlu0 %2403
        %2407 = vset.pattern.permute.xlu0 0
        %2408 = vperm.xlu0 %2407, %v2346
        %v2409 = vpop.permute.xlu0 %2408
        %2412 = vset.pattern.permute.xlu0 0
        %2413 = vperm.xlu0 %2412, %v2347
        %v2414 = vpop.permute.xlu0 %2413
        %2417 = vset.pattern.permute.xlu0 0
        %2418 = vperm.xlu0 %2417, %v2348
        %v2419 = vpop.permute.xlu0 %2418
        %2422 = vset.pattern.permute.xlu0 0
        %2423 = vperm.xlu0 %2422, %v2349
        %v2424 = vpop.permute.xlu0 %2423
        %2427 = vset.pattern.permute.xlu0 0
        %2428 = vperm.xlu0 %2427, %v2350
        %v2429 = vpop.permute.xlu0 %2428
        %v2447 = vunpack.c.l.b16 %v2319
        %v2448 = vunpack.c.l.b16 %v2320
        %v2449 = vunpack.c.l.b16 %v2321
        %v2450 = vunpack.c.l.b16 %v2322
        %v2451 = vunpack.c.l.b16 %v2323
        %v2452 = vunpack.c.l.b16 %v2324
        %v2453 = vunpack.c.l.b16 %v2325
        %v2454 = vunpack.c.l.b16 %v2326
        %v2455 = vunpack.c.l.b16 %v2327
        %v2456 = vunpack.c.l.b16 %v2328
        %v2457 = vunpack.c.l.b16 %v2329
        %v2458 = vunpack.c.l.b16 %v2330
        %v2459 = vunpack.c.l.b16 %v2331
        %v2460 = vunpack.c.l.b16 %v2332
        %v2461 = vunpack.c.l.b16 %v2333
        %v2462 = vunpack.c.l.b16 %v2334
        %v2463 = vpack.c.b16 %v2448, %v2447
        %v2464 = vpack.c.b16 %v2450, %v2449
        %v2465 = vpack.c.b16 %v2452, %v2451
        %v2466 = vpack.c.b16 %v2454, %v2453
        %v2467 = vpack.c.b16 %v2456, %v2455
        %v2468 = vpack.c.b16 %v2458, %v2457
        %v2469 = vpack.c.b16 %v2460, %v2459
        %v2470 = vpack.c.b16 %v2462, %v2461
        %v2472 = vsel %vm406, %v2463, 0
        %v2475 = vsel %vm406, %v2464, 0
        %v2478 = vsel %vm406, %v2465, 0
        %v2481 = vsel %vm406, %v2466, 0
        %v2484 = vsel %vm406, %v2467, 0
        %v2487 = vsel %vm406, %v2468, 0
        %v2490 = vsel %vm406, %v2469, 0
        %v2493 = vsel %vm406, %v2470, 0
        %2495 = vmatprep.subr.bf16.mxu0 0
        %2496 = vmatpush1.bf16.msra.mxu0 0
        %2497 = vmatprep.subr.bf16.mxu0 0
        %2498 = vmatpush1.bf16.msra.mxu0 0
        %2499 = vmatprep.subr.bf16.mxu0 0
        %2500 = vmatpush1.bf16.msra.mxu0 0
        %2501 = vmatprep.subr.bf16.mxu0 0
        %2502 = vmatpush1.bf16.msra.mxu0 0
        %2503 = vmatprep.subr.bf16.mxu0 0
        %2504 = vmatpush1.bf16.msra.mxu0 0
        %2505 = vmatprep.subr.bf16.mxu0 0
        %2506 = vmatpush1.bf16.msra.mxu0 0
        %2507 = vmatprep.subr.bf16.mxu0 0
        %2508 = vmatpush1.bf16.msra.mxu0 0
        %2509 = vmatprep.subr.bf16.mxu0 %v2318
        %2510 = vmatpush1.bf16.msra.mxu0 %v2317
        %2511 = vmatprep.subr.bf16.mxu0 0
        %2512 = vmatpush2.bf16.msra.mxu0 0
        %2513 = vmatprep.subr.bf16.mxu0 0
        %2514 = vmatpush2.bf16.msra.mxu0 0
        %2515 = vmatprep.subr.bf16.mxu0 0
        %2516 = vmatpush2.bf16.msra.mxu0 0
        %2517 = vmatprep.subr.bf16.mxu0 0
        %2518 = vmatpush2.bf16.msra.mxu0 0
        %2519 = vmatprep.subr.bf16.mxu0 0
        %2520 = vmatpush2.bf16.msra.mxu0 0
        %2521 = vmatprep.subr.bf16.mxu0 0
        %2522 = vmatpush2.bf16.msra.mxu0 0
        %2523 = vmatprep.subr.bf16.mxu0 0
        %2524 = vmatpush2.bf16.msra.mxu0 0
        %2525 = vmatprep.subr.bf16.mxu0 0
        %2526 = vmatpush2.bf16.msra.mxu0 0
        %2527 = vmatprep.mubr.bf16.mxu0 0
        %2528 = vmatmul.mubr.bf16.gmra.mxu0 %v2472
        %v2529 = vpop.f32.mrf.mxu0
        %v2530 = vadd.f32 %v2354, %v2529
        %v2531 = vpop.f32.mrf.mxu0
        %v2532 = vadd.f32 %v2354, %v2531
        %v2533 = vpop.f32.mrf.mxu0
        %v2534 = vadd.f32 %v2359, %v2533
        %v2535 = vpop.f32.mrf.mxu0
        %v2536 = vadd.f32 %v2359, %v2535
        %2537 = vmatprep.mubr.bf16.mxu0 0
        %2538 = vmatmul.mubr.bf16.gmra.mxu0 %v2475
        %v2539 = vpop.f32.mrf.mxu0
        %v2540 = vadd.f32 %v2364, %v2539
        %v2541 = vpop.f32.mrf.mxu0
        %v2542 = vadd.f32 %v2364, %v2541
        %v2543 = vpop.f32.mrf.mxu0
        %v2544 = vadd.f32 %v2369, %v2543
        %v2545 = vpop.f32.mrf.mxu0
        %v2546 = vadd.f32 %v2369, %v2545
        %2547 = vmatprep.mubr.bf16.mxu0 0
        %2548 = vmatmul.mubr.bf16.gmra.mxu0 %v2478
        %v2549 = vpop.f32.mrf.mxu0
        %v2550 = vadd.f32 %v2374, %v2549
        %v2551 = vpop.f32.mrf.mxu0
        %v2552 = vadd.f32 %v2374, %v2551
        %v2553 = vpop.f32.mrf.mxu0
        %v2554 = vadd.f32 %v2379, %v2553
        %v2555 = vpop.f32.mrf.mxu0
        %v2556 = vadd.f32 %v2379, %v2555
        %2557 = vmatprep.mubr.bf16.mxu0 0
        %2558 = vmatmul.mubr.bf16.gmra.mxu0 %v2481
        %v2559 = vpop.f32.mrf.mxu0
        %v2560 = vadd.f32 %v2384, %v2559
        %v2561 = vpop.f32.mrf.mxu0
        %v2562 = vadd.f32 %v2384, %v2561
        %v2563 = vpop.f32.mrf.mxu0
        %v2564 = vadd.f32 %v2389, %v2563
        %v2565 = vpop.f32.mrf.mxu0
        %v2566 = vadd.f32 %v2389, %v2565
        %2567 = vmatprep.mubr.bf16.mxu0 0
        %2568 = vmatmul.mubr.bf16.gmra.mxu0 %v2484
        %v2569 = vpop.f32.mrf.mxu0
        %v2570 = vadd.f32 %v2394, %v2569
        %v2571 = vpop.f32.mrf.mxu0
        %v2572 = vadd.f32 %v2394, %v2571
        %v2573 = vpop.f32.mrf.mxu0
        %v2574 = vadd.f32 %v2399, %v2573
        %v2575 = vpop.f32.mrf.mxu0
        %v2576 = vadd.f32 %v2399, %v2575
        %2577 = vmatprep.mubr.bf16.mxu0 0
        %2578 = vmatmul.mubr.bf16.gmra.mxu0 %v2487
        %v2579 = vpop.f32.mrf.mxu0
        %v2580 = vadd.f32 %v2404, %v2579
        %v2581 = vpop.f32.mrf.mxu0
        %v2582 = vadd.f32 %v2404, %v2581
        %v2583 = vpop.f32.mrf.mxu0
        %v2584 = vadd.f32 %v2409, %v2583
        %v2585 = vpop.f32.mrf.mxu0
        %v2586 = vadd.f32 %v2409, %v2585
        %2587 = vmatprep.mubr.bf16.mxu0 0
        %2588 = vmatmul.mubr.bf16.gmra.mxu0 %v2490
        %v2589 = vpop.f32.mrf.mxu0
        %v2590 = vadd.f32 %v2414, %v2589
        %v2591 = vpop.f32.mrf.mxu0
        %v2592 = vadd.f32 %v2414, %v2591
        %v2593 = vpop.f32.mrf.mxu0
        %v2594 = vadd.f32 %v2419, %v2593
        %v2595 = vpop.f32.mrf.mxu0
        %v2596 = vadd.f32 %v2419, %v2595
        %2597 = vmatprep.mubr.bf16.mxu0 0
        %2598 = vmatmul.mubr.bf16.gmra.mxu0 %v2493
        %v2599 = vpop.f32.mrf.mxu0
        %v2600 = vadd.f32 %v2424, %v2599
        %v2601 = vpop.f32.mrf.mxu0
        %v2602 = vadd.f32 %v2424, %v2601
        %v2603 = vpop.f32.mrf.mxu0
        %v2604 = vadd.f32 %v2429, %v2603
        %v2605 = vpop.f32.mrf.mxu0
        %v2606 = vadd.f32 %v2429, %v2605
        %2607 = vdwg.mxu0
        %v2608 = vmax.f32 %v2530, 0.0
        %v2609 = vmax.f32 %v2532, 0.0
        %v2610 = vmax.f32 %v2534, 0.0
        %v2611 = vmax.f32 %v2536, 0.0
        %v2612 = vmax.f32 %v2540, 0.0
        %v2613 = vmax.f32 %v2542, 0.0
        %v2614 = vmax.f32 %v2544, 0.0
        %v2615 = vmax.f32 %v2546, 0.0
        %v2616 = vmax.f32 %v2550, 0.0
        %v2617 = vmax.f32 %v2552, 0.0
        %v2618 = vmax.f32 %v2554, 0.0
        %v2619 = vmax.f32 %v2556, 0.0
        %v2620 = vmax.f32 %v2560, 0.0
        %v2621 = vmax.f32 %v2562, 0.0
        %v2622 = vmax.f32 %v2564, 0.0
        %v2623 = vmax.f32 %v2566, 0.0
        %v2624 = vmax.f32 %v2570, 0.0
        %v2625 = vmax.f32 %v2572, 0.0
        %v2626 = vmax.f32 %v2574, 0.0
        %v2627 = vmax.f32 %v2576, 0.0
        %v2628 = vmax.f32 %v2580, 0.0
        %v2629 = vmax.f32 %v2582, 0.0
        %v2630 = vmax.f32 %v2584, 0.0
        %v2631 = vmax.f32 %v2586, 0.0
        %v2632 = vmax.f32 %v2590, 0.0
        %v2633 = vmax.f32 %v2592, 0.0
        %v2634 = vmax.f32 %v2594, 0.0
        %v2635 = vmax.f32 %v2596, 0.0
        %v2636 = vmax.f32 %v2600, 0.0
        %v2637 = vmax.f32 %v2602, 0.0
        %v2638 = vmax.f32 %v2604, 0.0
        %v2639 = vmax.f32 %v2606, 0.0
        %v2640 = vpack.c.bf16 %v2610, %v2608
        %v2641 = vpack.c.bf16 %v2611, %v2609
        %v2642 = vpack.c.bf16 %v2614, %v2612
        %v2643 = vpack.c.bf16 %v2615, %v2613
        %v2644 = vpack.c.bf16 %v2618, %v2616
        %v2645 = vpack.c.bf16 %v2619, %v2617
        %v2646 = vpack.c.bf16 %v2622, %v2620
        %v2647 = vpack.c.bf16 %v2623, %v2621
        %v2648 = vpack.c.bf16 %v2626, %v2624
        %v2649 = vpack.c.bf16 %v2627, %v2625
        %v2650 = vpack.c.bf16 %v2630, %v2628
        %v2651 = vpack.c.bf16 %v2631, %v2629
        %v2652 = vpack.c.bf16 %v2634, %v2632
        %v2653 = vpack.c.bf16 %v2635, %v2633
        %v2654 = vpack.c.bf16 %v2638, %v2636
        %v2655 = vpack.c.bf16 %v2639, %v2637
        %v2656 = vld [vmem:[%s1 + $0x154] sm:$0xf]
        %v2657 = vld [vmem:[%s1 + $0x158] sm:$0xf]
        %v2658 = vld [vmem:[%s1 + $0x15c] sm:$0xf]
        %v2659 = vld [vmem:[%s1 + $0x160] sm:$0xf]
        %v2660 = vld [vmem:[%s1 + $0x164] sm:$0xf]
        %v2661 = vld [vmem:[%s1 + $0x168] sm:$0xf]
        %v2662 = vld [vmem:[%s1 + $0x16c] sm:$0xf]
        %v2663 = vld [vmem:[%s1 + $0x170] sm:$0xf]
        %v2664 = vld [vmem:[%s2 + $0x2a8] sm:$0xff]
        %v2665 = vld [vmem:[%s2 + $0x2b0] sm:$0xff]
        %v2666 = vld [vmem:[%s2 + $0x2b8] sm:$0xff]
        %v2667 = vld [vmem:[%s2 + $0x2c0] sm:$0xff]
        %v2668 = vld [vmem:[%s2 + $0x2c8] sm:$0xff]
        %v2669 = vld [vmem:[%s2 + $0x2d0] sm:$0xff]
        %v2670 = vld [vmem:[%s2 + $0x2d8] sm:$0xff]
        %v2671 = vld [vmem:[%s2 + $0x2e0] sm:$0xff]
        %2673 = vset.pattern.permute.xlu0 0
        %2674 = vperm.xlu0 %2673, %v2664
        %v2675 = vpop.permute.xlu0 %2674
        %2678 = vset.pattern.permute.xlu0 0
        %2679 = vperm.xlu0 %2678, %v2665
        %v2680 = vpop.permute.xlu0 %2679
        %2683 = vset.pattern.permute.xlu0 0
        %2684 = vperm.xlu0 %2683, %v2666
        %v2685 = vpop.permute.xlu0 %2684
        %2688 = vset.pattern.permute.xlu0 0
        %2689 = vperm.xlu0 %2688, %v2667
        %v2690 = vpop.permute.xlu0 %2689
        %2693 = vset.pattern.permute.xlu0 0
        %2694 = vperm.xlu0 %2693, %v2668
        %v2695 = vpop.permute.xlu0 %2694
        %2698 = vset.pattern.permute.xlu0 0
        %2699 = vperm.xlu0 %2698, %v2669
        %v2700 = vpop.permute.xlu0 %2699
        %2703 = vset.pattern.permute.xlu0 0
        %2704 = vperm.xlu0 %2703, %v2670
        %v2705 = vpop.permute.xlu0 %2704
        %2708 = vset.pattern.permute.xlu0 0
        %2709 = vperm.xlu0 %2708, %v2671
        %v2710 = vpop.permute.xlu0 %2709
        %v2720 = vunpack.c.l.b16 %v2656
        %v2721 = vunpack.c.l.b16 %v2657
        %v2722 = vunpack.c.l.b16 %v2658
        %v2723 = vunpack.c.l.b16 %v2659
        %v2724 = vunpack.c.l.b16 %v2660
        %v2725 = vunpack.c.l.b16 %v2661
        %v2726 = vunpack.c.l.b16 %v2662
        %v2727 = vunpack.c.l.b16 %v2663
        %v2728 = vpack.c.b16 %v2721, %v2720
        %v2729 = vpack.c.b16 %v2723, %v2722
        %v2730 = vpack.c.b16 %v2725, %v2724
        %v2731 = vpack.c.b16 %v2727, %v2726
        %2736 = vmatprep.subr.bf16.mxu0 %v2655
        %2737 = vmatpush1.bf16.msra.mxu0 %v2654
        %2738 = vmatprep.subr.bf16.mxu0 %v2653
        %2739 = vmatpush1.bf16.msra.mxu0 %v2652
        %2740 = vmatprep.subr.bf16.mxu0 %v2651
        %2741 = vmatpush1.bf16.msra.mxu0 %v2650
        %2742 = vmatprep.subr.bf16.mxu0 %v2649
        %2743 = vmatpush1.bf16.msra.mxu0 %v2648
        %2744 = vmatprep.subr.bf16.mxu0 %v2647
        %2745 = vmatpush1.bf16.msra.mxu0 %v2646
        %2746 = vmatprep.subr.bf16.mxu0 %v2645
        %2747 = vmatpush1.bf16.msra.mxu0 %v2644
        %2748 = vmatprep.subr.bf16.mxu0 %v2643
        %2749 = vmatpush1.bf16.msra.mxu0 %v2642
        %2750 = vmatprep.subr.bf16.mxu0 %v2641
        %2751 = vmatpush1.bf16.msra.mxu0 %v2640
        %2752 = vmatprep.subr.bf16.mxu0 0
        %2753 = vmatpush2.bf16.msra.mxu0 0
        %2754 = vmatprep.subr.bf16.mxu0 0
        %2755 = vmatpush2.bf16.msra.mxu0 0
        %2756 = vmatprep.subr.bf16.mxu0 0
        %2757 = vmatpush2.bf16.msra.mxu0 0
        %2758 = vmatprep.subr.bf16.mxu0 0
        %2759 = vmatpush2.bf16.msra.mxu0 0
        %2760 = vmatprep.subr.bf16.mxu0 0
        %2761 = vmatpush2.bf16.msra.mxu0 0
        %2762 = vmatprep.subr.bf16.mxu0 0
        %2763 = vmatpush2.bf16.msra.mxu0 0
        %2764 = vmatprep.subr.bf16.mxu0 0
        %2765 = vmatpush2.bf16.msra.mxu0 0
        %2766 = vmatprep.subr.bf16.mxu0 0
        %2767 = vmatpush2.bf16.msra.mxu0 0
        %2768 = vmatprep.mubr.bf16.mxu0 0
        %2769 = vmatmul.mubr.bf16.gmra.mxu0 %v2728
        %v2770 = vpop.f32.mrf.mxu0
        %v2771 = vadd.f32 %v2675, %v2770
        %v2772 = vpop.f32.mrf.mxu0
        %v2773 = vadd.f32 %v2675, %v2772
        %v2774 = vpop.f32.mrf.mxu0
        %v2775 = vadd.f32 %v2680, %v2774
        %v2776 = vpop.f32.mrf.mxu0
        %v2777 = vadd.f32 %v2680, %v2776
        %2778 = vmatprep.mubr.bf16.mxu0 0
        %2779 = vmatmul.mubr.bf16.gmra.mxu0 %v2729
        %v2780 = vpop.f32.mrf.mxu0
        %v2781 = vadd.f32 %v2685, %v2780
        %v2782 = vpop.f32.mrf.mxu0
        %v2783 = vadd.f32 %v2685, %v2782
        %v2784 = vpop.f32.mrf.mxu0
        %v2785 = vadd.f32 %v2690, %v2784
        %v2786 = vpop.f32.mrf.mxu0
        %v2787 = vadd.f32 %v2690, %v2786
        %2788 = vmatprep.mubr.bf16.mxu0 0
        %2789 = vmatmul.mubr.bf16.gmra.mxu0 %v2730
        %v2790 = vpop.f32.mrf.mxu0
        %v2791 = vadd.f32 %v2695, %v2790
        %v2792 = vpop.f32.mrf.mxu0
        %v2793 = vadd.f32 %v2695, %v2792
        %v2794 = vpop.f32.mrf.mxu0
        %v2795 = vadd.f32 %v2700, %v2794
        %v2796 = vpop.f32.mrf.mxu0
        %v2797 = vadd.f32 %v2700, %v2796
        %2798 = vmatprep.mubr.bf16.mxu0 0
        %2799 = vmatmul.mubr.bf16.gmra.mxu0 %v2731
        %v2800 = vpop.f32.mrf.mxu0
        %v2801 = vadd.f32 %v2705, %v2800
        %v2802 = vpop.f32.mrf.mxu0
        %v2803 = vadd.f32 %v2705, %v2802
        %v2804 = vpop.f32.mrf.mxu0
        %v2805 = vadd.f32 %v2710, %v2804
        %v2806 = vpop.f32.mrf.mxu0
        %v2807 = vadd.f32 %v2710, %v2806
        %2808 = vdwg.mxu0
        %v2809 = vmax.f32 %v2771, 0.0
        %v2810 = vmax.f32 %v2773, 0.0
        %v2811 = vmax.f32 %v2775, 0.0
        %v2812 = vmax.f32 %v2777, 0.0
        %v2813 = vmax.f32 %v2781, 0.0
        %v2814 = vmax.f32 %v2783, 0.0
        %v2815 = vmax.f32 %v2785, 0.0
        %v2816 = vmax.f32 %v2787, 0.0
        %v2817 = vmax.f32 %v2791, 0.0
        %v2818 = vmax.f32 %v2793, 0.0
        %v2819 = vmax.f32 %v2795, 0.0
        %v2820 = vmax.f32 %v2797, 0.0
        %v2821 = vmax.f32 %v2801, 0.0
        %v2822 = vmax.f32 %v2803, 0.0
        %v2823 = vmax.f32 %v2805, 0.0
        %v2824 = vmax.f32 %v2807, 0.0
        %v2825 = vpack.c.bf16 %v2811, %v2809
        %v2826 = vpack.c.bf16 %v2812, %v2810
        %v2827 = vpack.c.bf16 %v2815, %v2813
        %v2828 = vpack.c.bf16 %v2816, %v2814
        %v2829 = vpack.c.bf16 %v2819, %v2817
        %v2830 = vpack.c.bf16 %v2820, %v2818
        %v2831 = vpack.c.bf16 %v2823, %v2821
        %v2832 = vpack.c.bf16 %v2824, %v2822
        %v2833 = vld [vmem:[%s1 + $0x174] sm:$0xf]
        %v2834 = vld [vmem:[%s1 + $0x178] sm:$0xf]
        %v2835 = vld [vmem:[%s2 + $0x2e8] sm:$0xff]
        %v2836 = vld [vmem:[%s2 + $0x2f0] sm:$0xff]
        %2838 = vset.pattern.permute.xlu0 0
        %2839 = vperm.xlu0 %2838, %v2835
        %v2840 = vpop.permute.xlu0 %2839
        %2843 = vset.pattern.permute.xlu0 0
        %2844 = vperm.xlu0 %2843, %v2836
        %v2845 = vpop.permute.xlu0 %2844
        %v2849 = vunpack.c.l.b16 %v2833
        %v2850 = vunpack.c.l.b16 %v2834
        %v2851 = vpack.c.b16 %v2850, %v2849
        %v2853 = vsel %vm788, %v2851, 0
        %2855 = vmatprep.subr.bf16.mxu0 0
        %2856 = vmatpush1.bf16.msra.mxu0 0
        %2857 = vmatprep.subr.bf16.mxu0 0
        %2858 = vmatpush1.bf16.msra.mxu0 0
        %2859 = vmatprep.subr.bf16.mxu0 0
        %2860 = vmatpush1.bf16.msra.mxu0 0
        %2861 = vmatprep.subr.bf16.mxu0 0
        %2862 = vmatpush1.bf16.msra.mxu0 0
        %2863 = vmatprep.subr.bf16.mxu0 %v2832
        %2864 = vmatpush1.bf16.msra.mxu0 %v2831
        %2865 = vmatprep.subr.bf16.mxu0 %v2830
        %2866 = vmatpush1.bf16.msra.mxu0 %v2829
        %2867 = vmatprep.subr.bf16.mxu0 %v2828
        %2868 = vmatpush1.bf16.msra.mxu0 %v2827
        %2869 = vmatprep.subr.bf16.mxu0 %v2826
        %2870 = vmatpush1.bf16.msra.mxu0 %v2825
        %2871 = vmatprep.subr.bf16.mxu0 0
        %2872 = vmatpush2.bf16.msra.mxu0 0
        %2873 = vmatprep.subr.bf16.mxu0 0
        %2874 = vmatpush2.bf16.msra.mxu0 0
        %2875 = vmatprep.subr.bf16.mxu0 0
        %2876 = vmatpush2.bf16.msra.mxu0 0
        %2877 = vmatprep.subr.bf16.mxu0 0
        %2878 = vmatpush2.bf16.msra.mxu0 0
        %2879 = vmatprep.subr.bf16.mxu0 0
        %2880 = vmatpush2.bf16.msra.mxu0 0
        %2881 = vmatprep.subr.bf16.mxu0 0
        %2882 = vmatpush2.bf16.msra.mxu0 0
        %2883 = vmatprep.subr.bf16.mxu0 0
        %2884 = vmatpush2.bf16.msra.mxu0 0
        %2885 = vmatprep.subr.bf16.mxu0 0
        %2886 = vmatpush2.bf16.msra.mxu0 0
        %2887 = vmatprep.mubr.bf16.mxu0 0
        %2888 = vmatmul.mubr.bf16.gmra.mxu0 %v2853
        %v2889 = vpop.f32.mrf.mxu0
        %v2890 = vadd.f32 %v2840, %v2889
        %v2891 = vpop.f32.mrf.mxu0
        %v2892 = vadd.f32 %v2840, %v2891
        %v2893 = vpop.f32.mrf.mxu0
        %v2894 = vadd.f32 %v2845, %v2893
        %v2895 = vpop.f32.mrf.mxu0
        %v2896 = vadd.f32 %v2845, %v2895
        %2897 = vdwg.mxu0
        %v2898 = vmax.f32 %v2890, 0.0
        %v2899 = vmax.f32 %v2892, 0.0
        %v2900 = vmax.f32 %v2894, 0.0
        %v2901 = vmax.f32 %v2896, 0.0
        %v2902 = vpack.c.bf16 %v2900, %v2898
        %v2903 = vpack.c.bf16 %v2901, %v2899
        %v2904 = vld [vmem:[%s1 + $0x17c] sm:$0xf]
        %v2905 = vld [vmem:[%s1 + $0x180] sm:$0xf]
        %v2906 = vld [vmem:[%s2 + $0x2f8] sm:$0xff]
        %v2907 = vld [vmem:[%s2 + $0x300] sm:$0xff]
        %2909 = vset.pattern.permute.xlu0 0
        %2910 = vperm.xlu0 %2909, %v2906
        %v2911 = vpop.permute.xlu0 %2910
        %2914 = vset.pattern.permute.xlu0 0
        %2915 = vperm.xlu0 %2914, %v2907
        %v2916 = vpop.permute.xlu0 %2915
        %v2920 = vunpack.c.l.b16 %v2904
        %v2921 = vunpack.c.l.b16 %v2905
        %v2922 = vpack.c.b16 %v2921, %v2920
        %v2924 = vsel %vm406, %v2922, 0
        %2926 = vmatprep.subr.bf16.mxu0 0
        %2927 = vmatpush1.bf16.msra.mxu0 0
        %2928 = vmatprep.subr.bf16.mxu0 0
        %2929 = vmatpush1.bf16.msra.mxu0 0
        %2930 = vmatprep.subr.bf16.mxu0 0
        %2931 = vmatpush1.bf16.msra.mxu0 0
        %2932 = vmatprep.subr.bf16.mxu0 0
        %2933 = vmatpush1.bf16.msra.mxu0 0
        %2934 = vmatprep.subr.bf16.mxu0 0
        %2935 = vmatpush1.bf16.msra.mxu0 0
        %2936 = vmatprep.subr.bf16.mxu0 0
        %2937 = vmatpush1.bf16.msra.mxu0 0
        %2938 = vmatprep.subr.bf16.mxu0 0
        %2939 = vmatpush1.bf16.msra.mxu0 0
        %2940 = vmatprep.subr.bf16.mxu0 %v2903
        %2941 = vmatpush1.bf16.msra.mxu0 %v2902
        %2942 = vmatprep.subr.bf16.mxu0 0
        %2943 = vmatpush2.bf16.msra.mxu0 0
        %2944 = vmatprep.subr.bf16.mxu0 0
        %2945 = vmatpush2.bf16.msra.mxu0 0
        %2946 = vmatprep.subr.bf16.mxu0 0
        %2947 = vmatpush2.bf16.msra.mxu0 0
        %2948 = vmatprep.subr.bf16.mxu0 0
        %2949 = vmatpush2.bf16.msra.mxu0 0
        %2950 = vmatprep.subr.bf16.mxu0 0
        %2951 = vmatpush2.bf16.msra.mxu0 0
        %2952 = vmatprep.subr.bf16.mxu0 0
        %2953 = vmatpush2.bf16.msra.mxu0 0
        %2954 = vmatprep.subr.bf16.mxu0 0
        %2955 = vmatpush2.bf16.msra.mxu0 0
        %2956 = vmatprep.subr.bf16.mxu0 0
        %2957 = vmatpush2.bf16.msra.mxu0 0
        %2958 = vmatprep.mubr.bf16.mxu0 0
        %2959 = vmatmul.mubr.bf16.gmra.mxu0 %v2924
        %v2960 = vpop.f32.mrf.mxu0
        %v2961 = vadd.f32 %v2911, %v2960
        %v2962 = vpop.f32.mrf.mxu0
        %v2963 = vadd.f32 %v2911, %v2962
        %v2964 = vpop.f32.mrf.mxu0
        %v2965 = vadd.f32 %v2916, %v2964
        %v2966 = vpop.f32.mrf.mxu0
        %v2967 = vadd.f32 %v2916, %v2966
        %2968 = vdwg.mxu0
        %v2969 = vmax.f32 %v2961, 0.0
        %v2970 = vmax.f32 %v2963, 0.0
        %v2971 = vmax.f32 %v2965, 0.0
        %v2972 = vmax.f32 %v2967, 0.0
        %v2973 = vpack.c.bf16 %v2971, %v2969
        %v2974 = vpack.c.bf16 %v2972, %v2970
        %v2975 = vld [vmem:[%s1 + $0x184] sm:$0xf]
        %v2976 = vld [vmem:[%s2 + $0x308] sm:$0xff]
        %2978 = vset.pattern.permute.xlu0 0
        %2979 = vperm.xlu0 %2978, %v2976
        %v2980 = vpop.permute.xlu0 %2979
        %v2983 = vsel %vm406, %v2975, 0
        %2985 = vmatprep.subr.bf16.mxu0 0
        %2986 = vmatpush1.bf16.msra.mxu0 0
        %2987 = vmatprep.subr.bf16.mxu0 0
        %2988 = vmatpush1.bf16.msra.mxu0 0
        %2989 = vmatprep.subr.bf16.mxu0 0
        %2990 = vmatpush1.bf16.msra.mxu0 0
        %2991 = vmatprep.subr.bf16.mxu0 0
        %2992 = vmatpush1.bf16.msra.mxu0 0
        %2993 = vmatprep.subr.bf16.mxu0 0
        %2994 = vmatpush1.bf16.msra.mxu0 0
        %2995 = vmatprep.subr.bf16.mxu0 0
        %2996 = vmatpush1.bf16.msra.mxu0 0
        %2997 = vmatprep.subr.bf16.mxu0 0
        %2998 = vmatpush1.bf16.msra.mxu0 0
        %2999 = vmatprep.subr.bf16.mxu0 %v2974
        %3000 = vmatpush1.bf16.msra.mxu0 %v2973
        %3001 = vmatprep.subr.bf16.mxu0 0
        %3002 = vmatpush2.bf16.msra.mxu0 0
        %3003 = vmatprep.subr.bf16.mxu0 0
        %3004 = vmatpush2.bf16.msra.mxu0 0
        %3005 = vmatprep.subr.bf16.mxu0 0
        %3006 = vmatpush2.bf16.msra.mxu0 0
        %3007 = vmatprep.subr.bf16.mxu0 0
        %3008 = vmatpush2.bf16.msra.mxu0 0
        %3009 = vmatprep.subr.bf16.mxu0 0
        %3010 = vmatpush2.bf16.msra.mxu0 0
        %3011 = vmatprep.subr.bf16.mxu0 0
        %3012 = vmatpush2.bf16.msra.mxu0 0
        %3013 = vmatprep.subr.bf16.mxu0 0
        %3014 = vmatpush2.bf16.msra.mxu0 0
        %3015 = vmatprep.subr.bf16.mxu0 0
        %3016 = vmatpush2.bf16.msra.mxu0 0
        %3017 = vmatprep.mubr.bf16.mxu0 0
        %3018 = vmatmul.mubr.bf16.gmra.mxu0 %v2983
        %v3019 = vpop.f32.mrf.mxu0
        %v3020 = vadd.f32 %v2980, %v3019
        %v3021 = vpop.f32.mrf.mxu0
        %v3022 = vadd.f32 %v2980, %v3021
        %v3023 = vpop.f32.mrf.mxu0
        %v3024 = vpop.f32.mrf.mxu0
        %3025 = vdwg.mxu0
        %v3026 = vmax.f32 %v3020, 0.0
        %v3027 = vmax.f32 %v3022, 0.0
        %v3028 = vpack.c.bf16 %v3026, %v3026
        %v3029 = vpack.c.bf16 %v3027, %v3027
        %v3030 = vld [vmem:[%s1 + $0x188] sm:$0xf]
        %v3031 = vld [vmem:[%s2 + $0x310] sm:$0xff]
        %3033 = vset.pattern.permute.xlu0 0
        %3034 = vperm.xlu0 %3033, %v3031
        %v3035 = vpop.permute.xlu0 %3034
        %v3038 = vsel %vm974, %v3030, 0
        %v3041 = vsel %vm978, %v3028, 0
        %v3044 = vsel %vm978, %v3029, 0
        %3046 = vmatprep.subr.bf16.mxu0 0
        %3047 = vmatpush1.bf16.msra.mxu0 0
        %3048 = vmatprep.subr.bf16.mxu0 0
        %3049 = vmatpush1.bf16.msra.mxu0 0
        %3050 = vmatprep.subr.bf16.mxu0 0
        %3051 = vmatpush1.bf16.msra.mxu0 0
        %3052 = vmatprep.subr.bf16.mxu0 0
        %3053 = vmatpush1.bf16.msra.mxu0 0
        %3054 = vmatprep.subr.bf16.mxu0 0
        %3055 = vmatpush1.bf16.msra.mxu0 0
        %3056 = vmatprep.subr.bf16.mxu0 0
        %3057 = vmatpush1.bf16.msra.mxu0 0
        %3058 = vmatprep.subr.bf16.mxu0 0
        %3059 = vmatpush1.bf16.msra.mxu0 0
        %3060 = vmatprep.subr.bf16.mxu0 %v3044
        %3061 = vmatpush1.bf16.msra.mxu0 %v3041
        %3062 = vmatprep.subr.bf16.mxu0 0
        %3063 = vmatpush2.bf16.msra.mxu0 0
        %3064 = vmatprep.subr.bf16.mxu0 0
        %3065 = vmatpush2.bf16.msra.mxu0 0
        %3066 = vmatprep.subr.bf16.mxu0 0
        %3067 = vmatpush2.bf16.msra.mxu0 0
        %3068 = vmatprep.subr.bf16.mxu0 0
        %3069 = vmatpush2.bf16.msra.mxu0 0
        %3070 = vmatprep.subr.bf16.mxu0 0
        %3071 = vmatpush2.bf16.msra.mxu0 0
        %3072 = vmatprep.subr.bf16.mxu0 0
        %3073 = vmatpush2.bf16.msra.mxu0 0
        %3074 = vmatprep.subr.bf16.mxu0 0
        %3075 = vmatpush2.bf16.msra.mxu0 0
        %3076 = vmatprep.subr.bf16.mxu0 0
        %3077 = vmatpush2.bf16.msra.mxu0 0
        %3078 = vmatprep.mubr.bf16.mxu0 0
        %3079 = vmatmul.mubr.bf16.gmra.mxu0 %v3038
        %v3080 = vpop.f32.mrf.mxu0
        %v3081 = vadd.f32 %v3035, %v3080
        %v3082 = vpop.f32.mrf.mxu0
        %v3083 = vadd.f32 %v3035, %v3082
        %v3084 = vpop.f32.mrf.mxu0
        %v3085 = vpop.f32.mrf.mxu0
        %3086 = vdwg.mxu0
        %v3087 = vmax.f32 %v3081, 0.0
        %v3088 = vmax.f32 %v3083, 0.0
        %v3089 = vpack.c.bf16 %v3087, %v3087
        %v3090 = vpack.c.bf16 %v3088, %v3088
        %v3091 = vld [vmem:[%s1 + $0x18c] sm:$0xf]
        %v3092 = vld [vmem:[%s2 + $0x318] sm:$0xff]
        %3094 = vset.pattern.permute.xlu0 0
        %3095 = vperm.xlu0 %3094, %v3092
        %v3096 = vpop.permute.xlu0 %3095
        %v3099 = vsel %vm974, %v3091, 0
        %v3102 = vsel %vm978, %v3089, 0
        %v3105 = vsel %vm978, %v3090, 0
        %3107 = vmatprep.subr.bf16.mxu0 0
        %3108 = vmatpush1.bf16.msra.mxu0 0
        %3109 = vmatprep.subr.bf16.mxu0 0
        %3110 = vmatpush1.bf16.msra.mxu0 0
        %3111 = vmatprep.subr.bf16.mxu0 0
        %3112 = vmatpush1.bf16.msra.mxu0 0
        %3113 = vmatprep.subr.bf16.mxu0 0
        %3114 = vmatpush1.bf16.msra.mxu0 0
        %3115 = vmatprep.subr.bf16.mxu0 0
        %3116 = vmatpush1.bf16.msra.mxu0 0
        %3117 = vmatprep.subr.bf16.mxu0 0
        %3118 = vmatpush1.bf16.msra.mxu0 0
        %3119 = vmatprep.subr.bf16.mxu0 0
        %3120 = vmatpush1.bf16.msra.mxu0 0
        %3121 = vmatprep.subr.bf16.mxu0 %v3105
        %3122 = vmatpush1.bf16.msra.mxu0 %v3102
        %3123 = vmatprep.subr.bf16.mxu0 0
        %3124 = vmatpush2.bf16.msra.mxu0 0
        %3125 = vmatprep.subr.bf16.mxu0 0
        %3126 = vmatpush2.bf16.msra.mxu0 0
        %3127 = vmatprep.subr.bf16.mxu0 0
        %3128 = vmatpush2.bf16.msra.mxu0 0
        %3129 = vmatprep.subr.bf16.mxu0 0
        %3130 = vmatpush2.bf16.msra.mxu0 0
        %3131 = vmatprep.subr.bf16.mxu0 0
        %3132 = vmatpush2.bf16.msra.mxu0 0
        %3133 = vmatprep.subr.bf16.mxu0 0
        %3134 = vmatpush2.bf16.msra.mxu0 0
        %3135 = vmatprep.subr.bf16.mxu0 0
        %3136 = vmatpush2.bf16.msra.mxu0 0
        %3137 = vmatprep.subr.bf16.mxu0 0
        %3138 = vmatpush2.bf16.msra.mxu0 0
        %3139 = vmatprep.mubr.bf16.mxu0 0
        %3140 = vmatmul.mubr.bf16.gmra.mxu0 %v3099
        %v3141 = vpop.f32.mrf.mxu0
        %v3142 = vadd.f32 %v3096, %v3141
        %v3143 = vpop.f32.mrf.mxu0
        %v3144 = vadd.f32 %v3096, %v3143
        %v3145 = vpop.f32.mrf.mxu0
        %v3146 = vpop.f32.mrf.mxu0
        %3147 = vdwg.mxu0
        %v3148 = vmax.f32 %v3142, 0.0
        %v3149 = vmax.f32 %v3144, 0.0
        %v3150 = vpack.c.bf16 %v3148, %v3148
        %v3151 = vpack.c.bf16 %v3149, %v3149
        %v3152 = vld [vmem:[%s1 + $0x190] sm:$0x3]
        %v3153 = vld [vmem:[%s2 + $0x320] sm:$0xf]
        %3155 = vset.pattern.permute.xlu0 0
        %3156 = vperm.xlu0 %3155, %v3153
        %v3157 = vpop.permute.xlu0 %3156
        %v3160 = vsel %vm974, %v3152, 0
        %v3163 = vsel %vm978, %v3150, 0
        %v3166 = vsel %vm978, %v3151, 0
        %3168 = vmatprep.subr.bf16.mxu0 0
        %3169 = vmatpush1.bf16.msra.mxu0 0
        %3170 = vmatprep.subr.bf16.mxu0 0
        %3171 = vmatpush1.bf16.msra.mxu0 0
        %3172 = vmatprep.subr.bf16.mxu0 0
        %3173 = vmatpush1.bf16.msra.mxu0 0
        %3174 = vmatprep.subr.bf16.mxu0 0
        %3175 = vmatpush1.bf16.msra.mxu0 0
        %3176 = vmatprep.subr.bf16.mxu0 0
        %3177 = vmatpush1.bf16.msra.mxu0 0
        %3178 = vmatprep.subr.bf16.mxu0 0
        %3179 = vmatpush1.bf16.msra.mxu0 0
        %3180 = vmatprep.subr.bf16.mxu0 0
        %3181 = vmatpush1.bf16.msra.mxu0 0
        %3182 = vmatprep.subr.bf16.mxu0 %v3166
        %3183 = vmatpush1.bf16.msra.mxu0 %v3163
        %3184 = vmatprep.subr.bf16.mxu0 0
        %3185 = vmatpush2.bf16.msra.mxu0 0
        %3186 = vmatprep.subr.bf16.mxu0 0
        %3187 = vmatpush2.bf16.msra.mxu0 0
        %3188 = vmatprep.subr.bf16.mxu0 0
        %3189 = vmatpush2.bf16.msra.mxu0 0
        %3190 = vmatprep.subr.bf16.mxu0 0
        %3191 = vmatpush2.bf16.msra.mxu0 0
        %3192 = vmatprep.subr.bf16.mxu0 0
        %3193 = vmatpush2.bf16.msra.mxu0 0
        %3194 = vmatprep.subr.bf16.mxu0 0
        %3195 = vmatpush2.bf16.msra.mxu0 0
        %3196 = vmatprep.subr.bf16.mxu0 0
        %3197 = vmatpush2.bf16.msra.mxu0 0
        %3198 = vmatprep.subr.bf16.mxu0 0
        %3199 = vmatpush2.bf16.msra.mxu0 0
        %3200 = vmatprep.mubr.bf16.mxu0 0
        %3201 = vmatmul.mubr.bf16.gmra.mxu0 %v3160
        %v3202 = vpop.f32.mrf.mxu0
        %v3203 = vadd.f32 %v3157, %v3202
        %v3204 = vpop.f32.mrf.mxu0
        %v3205 = vadd.f32 %v3157, %v3204
        %v3206 = vpop.f32.mrf.mxu0
        %v3207 = vpop.f32.mrf.mxu0
        %3208 = vdwg.mxu0
        %v3209 = vmax.f32 %v3203, 0.0
        %v3210 = vmax.f32 %v3205, 0.0
        %v3211 = vpack.c.bf16 %v3209, %v3209
        %v3212 = vpack.c.bf16 %v3210, %v3210
        %v3213 = vld [vmem:[%s1 + $0x194] sm:$0x3]
        %v3214 = vld [vmem:[%s2 + $0x328] sm:$0xf]
        %3216 = vset.pattern.permute.xlu0 0
        %3217 = vperm.xlu0 %3216, %v3214
        %v3218 = vpop.permute.xlu0 %3217
        %v3221 = vsel %vm1159, %v3213, 0
        %v3224 = vsel %vm1163, %v3211, 0
        %v3227 = vsel %vm1163, %v3212, 0
        %3229 = vmatprep.subr.bf16.mxu0 0
        %3230 = vmatpush1.bf16.msra.mxu0 0
        %3231 = vmatprep.subr.bf16.mxu0 0
        %3232 = vmatpush1.bf16.msra.mxu0 0
        %3233 = vmatprep.subr.bf16.mxu0 0
        %3234 = vmatpush1.bf16.msra.mxu0 0
        %3235 = vmatprep.subr.bf16.mxu0 0
        %3236 = vmatpush1.bf16.msra.mxu0 0
        %3237 = vmatprep.subr.bf16.mxu0 0
        %3238 = vmatpush1.bf16.msra.mxu0 0
        %3239 = vmatprep.subr.bf16.mxu0 0
        %3240 = vmatpush1.bf16.msra.mxu0 0
        %3241 = vmatprep.subr.bf16.mxu0 0
        %3242 = vmatpush1.bf16.msra.mxu0 0
        %3243 = vmatprep.subr.bf16.mxu0 %v3227
        %3244 = vmatpush1.bf16.msra.mxu0 %v3224
        %3245 = vmatprep.subr.bf16.mxu0 0
        %3246 = vmatpush2.bf16.msra.mxu0 0
        %3247 = vmatprep.subr.bf16.mxu0 0
        %3248 = vmatpush2.bf16.msra.mxu0 0
        %3249 = vmatprep.subr.bf16.mxu0 0
        %3250 = vmatpush2.bf16.msra.mxu0 0
        %3251 = vmatprep.subr.bf16.mxu0 0
        %3252 = vmatpush2.bf16.msra.mxu0 0
        %3253 = vmatprep.subr.bf16.mxu0 0
        %3254 = vmatpush2.bf16.msra.mxu0 0
        %3255 = vmatprep.subr.bf16.mxu0 0
        %3256 = vmatpush2.bf16.msra.mxu0 0
        %3257 = vmatprep.subr.bf16.mxu0 0
        %3258 = vmatpush2.bf16.msra.mxu0 0
        %3259 = vmatprep.subr.bf16.mxu0 0
        %3260 = vmatpush2.bf16.msra.mxu0 0
        %3261 = vmatprep.mubr.bf16.mxu0 0
        %3262 = vmatmul.mubr.bf16.gmra.mxu0 %v3221
        %v3263 = vpop.f32.mrf.mxu0
        %v3264 = vadd.f32 %v3218, %v3263
        %v3265 = vpop.f32.mrf.mxu0
        %v3266 = vadd.f32 %v3218, %v3265
        %v3267 = vpop.f32.mrf.mxu0
        %v3268 = vpop.f32.mrf.mxu0
        %3269 = vdwg.mxu0
        %v3270 = vmax.f32 %v3264, 0.0
        %v3271 = vmax.f32 %v3266, 0.0
        %v3272 = vpack.c.bf16 %v3270, %v3270
        %v3273 = vpack.c.bf16 %v3271, %v3271
        %v3274 = vld [vmem:[%s1 + $0x198] sm:$0x3]
        %v3275 = vld [vmem:[%s2 + $0x330] sm:$0xf]
        %3277 = vset.pattern.permute.xlu0 0
        %3278 = vperm.xlu0 %3277, %v3275
        %v3279 = vpop.permute.xlu0 %3278
        %v3282 = vsel %vm1159, %v3274, 0
        %v3285 = vsel %vm1163, %v3272, 0
        %v3288 = vsel %vm1163, %v3273, 0
        %3290 = vmatprep.subr.bf16.mxu0 0
        %3291 = vmatpush1.bf16.msra.mxu0 0
        %3292 = vmatprep.subr.bf16.mxu0 0
        %3293 = vmatpush1.bf16.msra.mxu0 0
        %3294 = vmatprep.subr.bf16.mxu0 0
        %3295 = vmatpush1.bf16.msra.mxu0 0
        %3296 = vmatprep.subr.bf16.mxu0 0
        %3297 = vmatpush1.bf16.msra.mxu0 0
        %3298 = vmatprep.subr.bf16.mxu0 0
        %3299 = vmatpush1.bf16.msra.mxu0 0
        %3300 = vmatprep.subr.bf16.mxu0 0
        %3301 = vmatpush1.bf16.msra.mxu0 0
        %3302 = vmatprep.subr.bf16.mxu0 0
        %3303 = vmatpush1.bf16.msra.mxu0 0
        %3304 = vmatprep.subr.bf16.mxu0 %v3288
        %3305 = vmatpush1.bf16.msra.mxu0 %v3285
        %3306 = vmatprep.subr.bf16.mxu0 0
        %3307 = vmatpush2.bf16.msra.mxu0 0
        %3308 = vmatprep.subr.bf16.mxu0 0
        %3309 = vmatpush2.bf16.msra.mxu0 0
        %3310 = vmatprep.subr.bf16.mxu0 0
        %3311 = vmatpush2.bf16.msra.mxu0 0
        %3312 = vmatprep.subr.bf16.mxu0 0
        %3313 = vmatpush2.bf16.msra.mxu0 0
        %3314 = vmatprep.subr.bf16.mxu0 0
        %3315 = vmatpush2.bf16.msra.mxu0 0
        %3316 = vmatprep.subr.bf16.mxu0 0
        %3317 = vmatpush2.bf16.msra.mxu0 0
        %3318 = vmatprep.subr.bf16.mxu0 0
        %3319 = vmatpush2.bf16.msra.mxu0 0
        %3320 = vmatprep.subr.bf16.mxu0 0
        %3321 = vmatpush2.bf16.msra.mxu0 0
        %3322 = vmatprep.mubr.bf16.mxu0 0
        %3323 = vmatmul.mubr.bf16.gmra.mxu0 %v3282
        %v3324 = vpop.f32.mrf.mxu0
        %v3325 = vadd.f32 %v3279, %v3324
        %v3326 = vpop.f32.mrf.mxu0
        %v3327 = vadd.f32 %v3279, %v3326
        %v3328 = vpop.f32.mrf.mxu0
        %v3329 = vpop.f32.mrf.mxu0
        %3330 = vdwg.mxu0
        %v3333 = vcombine.low %v3325, %v3327
        %s3335 = scalar_lea.vmem %s225, 8 [#allocation2]
        %3336 = vst [vmem:[%s3335] sm:$0xff] %v3333
        %v3337 = vpack.c.bf16 %v3325, %v3325
        %v3338 = vpack.c.bf16 %v3327, %v3327
        %v3339 = vld [vmem:[%s1 + $0x19c] sm:$0x3]
        %v3340 = vld [vmem:[%s2 + $0x338] sm:$0xf]
        %3342 = vset.pattern.permute.xlu0 0
        %3343 = vperm.xlu0 %3342, %v3340
        %v3344 = vpop.permute.xlu0 %3343
        %v3347 = vsel %vm1159, %v3339, 0
        %v3350 = vsel %vm1163, %v3337, 0
        %v3353 = vsel %vm1163, %v3338, 0
        %3355 = vmatprep.subr.bf16.mxu0 0
        %3356 = vmatpush1.bf16.msra.mxu0 0
        %3357 = vmatprep.subr.bf16.mxu0 0
        %3358 = vmatpush1.bf16.msra.mxu0 0
        %3359 = vmatprep.subr.bf16.mxu0 0
        %3360 = vmatpush1.bf16.msra.mxu0 0
        %3361 = vmatprep.subr.bf16.mxu0 0
        %3362 = vmatpush1.bf16.msra.mxu0 0
        %3363 = vmatprep.subr.bf16.mxu0 0
        %3364 = vmatpush1.bf16.msra.mxu0 0
        %3365 = vmatprep.subr.bf16.mxu0 0
        %3366 = vmatpush1.bf16.msra.mxu0 0
        %3367 = vmatprep.subr.bf16.mxu0 0
        %3368 = vmatpush1.bf16.msra.mxu0 0
        %3369 = vmatprep.subr.bf16.mxu0 %v3353
        %3370 = vmatpush1.bf16.msra.mxu0 %v3350
        %3371 = vmatprep.subr.bf16.mxu0 0
        %3372 = vmatpush2.bf16.msra.mxu0 0
        %3373 = vmatprep.subr.bf16.mxu0 0
        %3374 = vmatpush2.bf16.msra.mxu0 0
        %3375 = vmatprep.subr.bf16.mxu0 0
        %3376 = vmatpush2.bf16.msra.mxu0 0
        %3377 = vmatprep.subr.bf16.mxu0 0
        %3378 = vmatpush2.bf16.msra.mxu0 0
        %3379 = vmatprep.subr.bf16.mxu0 0
        %3380 = vmatpush2.bf16.msra.mxu0 0
        %3381 = vmatprep.subr.bf16.mxu0 0
        %3382 = vmatpush2.bf16.msra.mxu0 0
        %3383 = vmatprep.subr.bf16.mxu0 0
        %3384 = vmatpush2.bf16.msra.mxu0 0
        %3385 = vmatprep.subr.bf16.mxu0 0
        %3386 = vmatpush2.bf16.msra.mxu0 0
        %3387 = vmatprep.mubr.bf16.mxu0 0
        %3388 = vmatmul.mubr.bf16.gmra.mxu0 %v3347
        %v3389 = vpop.f32.mrf.mxu0
        %v3390 = vadd.f32 %v3344, %v3389
        %v3391 = vpop.f32.mrf.mxu0
        %v3392 = vadd.f32 %v3344, %v3391
        %v3393 = vpop.f32.mrf.mxu0
        %v3394 = vpop.f32.mrf.mxu0
        %3395 = vdwg.mxu0
        %v3396 = vmax.f32 %v3390, 0.0
        %v3397 = vmax.f32 %v3392, 0.0
        %v3398 = vpack.c.bf16 %v3396, %v3396
        %v3399 = vpack.c.bf16 %v3397, %v3397
        %v3400 = vld [vmem:[%s1 + $0x1a0] sm:$0x3]
        %v3401 = vld [vmem:[%s2 + $0x340] sm:$0xf]
        %3403 = vset.pattern.permute.xlu0 0
        %3404 = vperm.xlu0 %3403, %v3401
        %v3405 = vpop.permute.xlu0 %3404
        %v3408 = vsel %vm1159, %v3400, 0
        %v3411 = vsel %vm1163, %v3398, 0
        %v3414 = vsel %vm1163, %v3399, 0
        %3416 = vmatprep.subr.bf16.mxu0 0
        %3417 = vmatpush1.bf16.msra.mxu0 0
        %3418 = vmatprep.subr.bf16.mxu0 0
        %3419 = vmatpush1.bf16.msra.mxu0 0
        %3420 = vmatprep.subr.bf16.mxu0 0
        %3421 = vmatpush1.bf16.msra.mxu0 0
        %3422 = vmatprep.subr.bf16.mxu0 0
        %3423 = vmatpush1.bf16.msra.mxu0 0
        %3424 = vmatprep.subr.bf16.mxu0 0
        %3425 = vmatpush1.bf16.msra.mxu0 0
        %3426 = vmatprep.subr.bf16.mxu0 0
        %3427 = vmatpush1.bf16.msra.mxu0 0
        %3428 = vmatprep.subr.bf16.mxu0 0
        %3429 = vmatpush1.bf16.msra.mxu0 0
        %3430 = vmatprep.subr.bf16.mxu0 %v3414
        %3431 = vmatpush1.bf16.msra.mxu0 %v3411
        %3432 = vmatprep.subr.bf16.mxu0 0
        %3433 = vmatpush2.bf16.msra.mxu0 0
        %3434 = vmatprep.subr.bf16.mxu0 0
        %3435 = vmatpush2.bf16.msra.mxu0 0
        %3436 = vmatprep.subr.bf16.mxu0 0
        %3437 = vmatpush2.bf16.msra.mxu0 0
        %3438 = vmatprep.subr.bf16.mxu0 0
        %3439 = vmatpush2.bf16.msra.mxu0 0
        %3440 = vmatprep.subr.bf16.mxu0 0
        %3441 = vmatpush2.bf16.msra.mxu0 0
        %3442 = vmatprep.subr.bf16.mxu0 0
        %3443 = vmatpush2.bf16.msra.mxu0 0
        %3444 = vmatprep.subr.bf16.mxu0 0
        %3445 = vmatpush2.bf16.msra.mxu0 0
        %3446 = vmatprep.subr.bf16.mxu0 0
        %3447 = vmatpush2.bf16.msra.mxu0 0
        %3448 = vmatprep.mubr.bf16.mxu0 0
        %3449 = vmatmul.mubr.bf16.gmra.mxu0 %v3408
        %v3450 = vpop.f32.mrf.mxu0
        %v3451 = vadd.f32 %v3405, %v3450
        %v3452 = vpop.f32.mrf.mxu0
        %v3453 = vadd.f32 %v3405, %v3452
        %v3454 = vpop.f32.mrf.mxu0
        %v3455 = vpop.f32.mrf.mxu0
        %3456 = vdwg.mxu0
        %v3457 = vmax.f32 %v3451, 0.0
        %v3458 = vmax.f32 %v3453, 0.0
        %v3459 = vpack.c.bf16 %v3457, %v3457
        %v3460 = vpack.c.bf16 %v3458, %v3458
        %v3461 = vld [vmem:[%s1 + $0x1a4] sm:$0xf]
        %v3462 = vld [vmem:[%s2 + $0x348] sm:$0xff]
        %3464 = vset.pattern.permute.xlu0 0
        %3465 = vperm.xlu0 %3464, %v3462
        %v3466 = vpop.permute.xlu0 %3465
        %v3469 = vsel %vm1159, %v3461, 0
        %v3472 = vsel %vm1163, %v3459, 0
        %v3475 = vsel %vm1163, %v3460, 0
        %3477 = vmatprep.subr.bf16.mxu0 0
        %3478 = vmatpush1.bf16.msra.mxu0 0
        %3479 = vmatprep.subr.bf16.mxu0 0
        %3480 = vmatpush1.bf16.msra.mxu0 0
        %3481 = vmatprep.subr.bf16.mxu0 0
        %3482 = vmatpush1.bf16.msra.mxu0 0
        %3483 = vmatprep.subr.bf16.mxu0 0
        %3484 = vmatpush1.bf16.msra.mxu0 0
        %3485 = vmatprep.subr.bf16.mxu0 0
        %3486 = vmatpush1.bf16.msra.mxu0 0
        %3487 = vmatprep.subr.bf16.mxu0 0
        %3488 = vmatpush1.bf16.msra.mxu0 0
        %3489 = vmatprep.subr.bf16.mxu0 0
        %3490 = vmatpush1.bf16.msra.mxu0 0
        %3491 = vmatprep.subr.bf16.mxu0 %v3475
        %3492 = vmatpush1.bf16.msra.mxu0 %v3472
        %3493 = vmatprep.subr.bf16.mxu0 0
        %3494 = vmatpush2.bf16.msra.mxu0 0
        %3495 = vmatprep.subr.bf16.mxu0 0
        %3496 = vmatpush2.bf16.msra.mxu0 0
        %3497 = vmatprep.subr.bf16.mxu0 0
        %3498 = vmatpush2.bf16.msra.mxu0 0
        %3499 = vmatprep.subr.bf16.mxu0 0
        %3500 = vmatpush2.bf16.msra.mxu0 0
        %3501 = vmatprep.subr.bf16.mxu0 0
        %3502 = vmatpush2.bf16.msra.mxu0 0
        %3503 = vmatprep.subr.bf16.mxu0 0
        %3504 = vmatpush2.bf16.msra.mxu0 0
        %3505 = vmatprep.subr.bf16.mxu0 0
        %3506 = vmatpush2.bf16.msra.mxu0 0
        %3507 = vmatprep.subr.bf16.mxu0 0
        %3508 = vmatpush2.bf16.msra.mxu0 0
        %3509 = vmatprep.mubr.bf16.mxu0 0
        %3510 = vmatmul.mubr.bf16.gmra.mxu0 %v3469
        %v3511 = vpop.f32.mrf.mxu0
        %v3512 = vadd.f32 %v3466, %v3511
        %v3513 = vpop.f32.mrf.mxu0
        %v3514 = vadd.f32 %v3466, %v3513
        %v3515 = vpop.f32.mrf.mxu0
        %v3516 = vpop.f32.mrf.mxu0
        %3517 = vdwg.mxu0
        %v3518 = vmax.f32 %v3512, 0.0
        %v3519 = vmax.f32 %v3514, 0.0
        %v3520 = vpack.c.bf16 %v3518, %v3518
        %v3521 = vpack.c.bf16 %v3519, %v3519
        %v3522 = vld [vmem:[%s1 + $0x1a8] sm:$0xf]
        %v3523 = vld [vmem:[%s2 + $0x350] sm:$0xff]
        %3525 = vset.pattern.permute.xlu0 0
        %3526 = vperm.xlu0 %3525, %v3523
        %v3527 = vpop.permute.xlu0 %3526
        %v3530 = vsel %vm974, %v3522, 0
        %v3533 = vsel %vm978, %v3520, 0
        %v3536 = vsel %vm978, %v3521, 0
        %3538 = vmatprep.subr.bf16.mxu0 0
        %3539 = vmatpush1.bf16.msra.mxu0 0
        %3540 = vmatprep.subr.bf16.mxu0 0
        %3541 = vmatpush1.bf16.msra.mxu0 0
        %3542 = vmatprep.subr.bf16.mxu0 0
        %3543 = vmatpush1.bf16.msra.mxu0 0
        %3544 = vmatprep.subr.bf16.mxu0 0
        %3545 = vmatpush1.bf16.msra.mxu0 0
        %3546 = vmatprep.subr.bf16.mxu0 0
        %3547 = vmatpush1.bf16.msra.mxu0 0
        %3548 = vmatprep.subr.bf16.mxu0 0
        %3549 = vmatpush1.bf16.msra.mxu0 0
        %3550 = vmatprep.subr.bf16.mxu0 0
        %3551 = vmatpush1.bf16.msra.mxu0 0
        %3552 = vmatprep.subr.bf16.mxu0 %v3536
        %3553 = vmatpush1.bf16.msra.mxu0 %v3533
        %3554 = vmatprep.subr.bf16.mxu0 0
        %3555 = vmatpush2.bf16.msra.mxu0 0
        %3556 = vmatprep.subr.bf16.mxu0 0
        %3557 = vmatpush2.bf16.msra.mxu0 0
        %3558 = vmatprep.subr.bf16.mxu0 0
        %3559 = vmatpush2.bf16.msra.mxu0 0
        %3560 = vmatprep.subr.bf16.mxu0 0
        %3561 = vmatpush2.bf16.msra.mxu0 0
        %3562 = vmatprep.subr.bf16.mxu0 0
        %3563 = vmatpush2.bf16.msra.mxu0 0
        %3564 = vmatprep.subr.bf16.mxu0 0
        %3565 = vmatpush2.bf16.msra.mxu0 0
        %3566 = vmatprep.subr.bf16.mxu0 0
        %3567 = vmatpush2.bf16.msra.mxu0 0
        %3568 = vmatprep.subr.bf16.mxu0 0
        %3569 = vmatpush2.bf16.msra.mxu0 0
        %3570 = vmatprep.mubr.bf16.mxu0 0
        %3571 = vmatmul.mubr.bf16.gmra.mxu0 %v3530
        %v3572 = vpop.f32.mrf.mxu0
        %v3573 = vadd.f32 %v3527, %v3572
        %v3574 = vpop.f32.mrf.mxu0
        %v3575 = vadd.f32 %v3527, %v3574
        %v3576 = vpop.f32.mrf.mxu0
        %v3577 = vpop.f32.mrf.mxu0
        %3578 = vdwg.mxu0
        %v3579 = vmax.f32 %v3573, 0.0
        %v3580 = vmax.f32 %v3575, 0.0
        %v3581 = vpack.c.bf16 %v3579, %v3579
        %v3582 = vpack.c.bf16 %v3580, %v3580
        %v3583 = vld [vmem:[%s1 + $0x1ac] sm:$0xf]
        %v3584 = vld [vmem:[%s2 + $0x358] sm:$0xff]
        %3586 = vset.pattern.permute.xlu0 0
        %3587 = vperm.xlu0 %3586, %v3584
        %v3588 = vpop.permute.xlu0 %3587
        %v3591 = vsel %vm974, %v3583, 0
        %v3594 = vsel %vm978, %v3581, 0
        %v3597 = vsel %vm978, %v3582, 0
        %3599 = vmatprep.subr.bf16.mxu0 0
        %3600 = vmatpush1.bf16.msra.mxu0 0
        %3601 = vmatprep.subr.bf16.mxu0 0
        %3602 = vmatpush1.bf16.msra.mxu0 0
        %3603 = vmatprep.subr.bf16.mxu0 0
        %3604 = vmatpush1.bf16.msra.mxu0 0
        %3605 = vmatprep.subr.bf16.mxu0 0
        %3606 = vmatpush1.bf16.msra.mxu0 0
        %3607 = vmatprep.subr.bf16.mxu0 0
        %3608 = vmatpush1.bf16.msra.mxu0 0
        %3609 = vmatprep.subr.bf16.mxu0 0
        %3610 = vmatpush1.bf16.msra.mxu0 0
        %3611 = vmatprep.subr.bf16.mxu0 0
        %3612 = vmatpush1.bf16.msra.mxu0 0
        %3613 = vmatprep.subr.bf16.mxu0 %v3597
        %3614 = vmatpush1.bf16.msra.mxu0 %v3594
        %3615 = vmatprep.subr.bf16.mxu0 0
        %3616 = vmatpush2.bf16.msra.mxu0 0
        %3617 = vmatprep.subr.bf16.mxu0 0
        %3618 = vmatpush2.bf16.msra.mxu0 0
        %3619 = vmatprep.subr.bf16.mxu0 0
        %3620 = vmatpush2.bf16.msra.mxu0 0
        %3621 = vmatprep.subr.bf16.mxu0 0
        %3622 = vmatpush2.bf16.msra.mxu0 0
        %3623 = vmatprep.subr.bf16.mxu0 0
        %3624 = vmatpush2.bf16.msra.mxu0 0
        %3625 = vmatprep.subr.bf16.mxu0 0
        %3626 = vmatpush2.bf16.msra.mxu0 0
        %3627 = vmatprep.subr.bf16.mxu0 0
        %3628 = vmatpush2.bf16.msra.mxu0 0
        %3629 = vmatprep.subr.bf16.mxu0 0
        %3630 = vmatpush2.bf16.msra.mxu0 0
        %3631 = vmatprep.mubr.bf16.mxu0 0
        %3632 = vmatmul.mubr.bf16.gmra.mxu0 %v3591
        %v3633 = vpop.f32.mrf.mxu0
        %v3634 = vadd.f32 %v3588, %v3633
        %v3635 = vpop.f32.mrf.mxu0
        %v3636 = vadd.f32 %v3588, %v3635
        %v3637 = vpop.f32.mrf.mxu0
        %v3638 = vpop.f32.mrf.mxu0
        %3639 = vdwg.mxu0
        %v3640 = vmax.f32 %v3634, 0.0
        %v3641 = vmax.f32 %v3636, 0.0
        %v3642 = vpack.c.bf16 %v3640, %v3640
        %v3643 = vpack.c.bf16 %v3641, %v3641
        %v3644 = vld [vmem:[%s1 + $0x1b0] sm:$0xf]
        %v3645 = vld [vmem:[%s1 + $0x1b4] sm:$0xf]
        %v3646 = vld [vmem:[%s2 + $0x360] sm:$0xff]
        %v3647 = vld [vmem:[%s2 + $0x368] sm:$0xff]
        %3649 = vset.pattern.permute.xlu0 0
        %3650 = vperm.xlu0 %3649, %v3646
        %v3651 = vpop.permute.xlu0 %3650
        %3654 = vset.pattern.permute.xlu0 0
        %3655 = vperm.xlu0 %3654, %v3647
        %v3656 = vpop.permute.xlu0 %3655
        %v3660 = vunpack.c.l.b16 %v3644
        %v3661 = vunpack.c.l.b16 %v3645
        %v3662 = vpack.c.b16 %v3661, %v3660
        %v3664 = vsel %vm974, %v3662, 0
        %v3667 = vsel %vm978, %v3642, 0
        %v3670 = vsel %vm978, %v3643, 0
        %3672 = vmatprep.subr.bf16.mxu0 0
        %3673 = vmatpush1.bf16.msra.mxu0 0
        %3674 = vmatprep.subr.bf16.mxu0 0
        %3675 = vmatpush1.bf16.msra.mxu0 0
        %3676 = vmatprep.subr.bf16.mxu0 0
        %3677 = vmatpush1.bf16.msra.mxu0 0
        %3678 = vmatprep.subr.bf16.mxu0 0
        %3679 = vmatpush1.bf16.msra.mxu0 0
        %3680 = vmatprep.subr.bf16.mxu0 0
        %3681 = vmatpush1.bf16.msra.mxu0 0
        %3682 = vmatprep.subr.bf16.mxu0 0
        %3683 = vmatpush1.bf16.msra.mxu0 0
        %3684 = vmatprep.subr.bf16.mxu0 0
        %3685 = vmatpush1.bf16.msra.mxu0 0
        %3686 = vmatprep.subr.bf16.mxu0 %v3670
        %3687 = vmatpush1.bf16.msra.mxu0 %v3667
        %3688 = vmatprep.subr.bf16.mxu0 0
        %3689 = vmatpush2.bf16.msra.mxu0 0
        %3690 = vmatprep.subr.bf16.mxu0 0
        %3691 = vmatpush2.bf16.msra.mxu0 0
        %3692 = vmatprep.subr.bf16.mxu0 0
        %3693 = vmatpush2.bf16.msra.mxu0 0
        %3694 = vmatprep.subr.bf16.mxu0 0
        %3695 = vmatpush2.bf16.msra.mxu0 0
        %3696 = vmatprep.subr.bf16.mxu0 0
        %3697 = vmatpush2.bf16.msra.mxu0 0
        %3698 = vmatprep.subr.bf16.mxu0 0
        %3699 = vmatpush2.bf16.msra.mxu0 0
        %3700 = vmatprep.subr.bf16.mxu0 0
        %3701 = vmatpush2.bf16.msra.mxu0 0
        %3702 = vmatprep.subr.bf16.mxu0 0
        %3703 = vmatpush2.bf16.msra.mxu0 0
        %3704 = vmatprep.mubr.bf16.mxu0 0
        %3705 = vmatmul.mubr.bf16.gmra.mxu0 %v3664
        %v3706 = vpop.f32.mrf.mxu0
        %v3707 = vadd.f32 %v3651, %v3706
        %v3708 = vpop.f32.mrf.mxu0
        %v3709 = vadd.f32 %v3651, %v3708
        %v3710 = vpop.f32.mrf.mxu0
        %v3711 = vadd.f32 %v3656, %v3710
        %v3712 = vpop.f32.mrf.mxu0
        %v3713 = vadd.f32 %v3656, %v3712
        %3714 = vdwg.mxu0
        %v3715 = vmax.f32 %v3707, 0.0
        %v3716 = vmax.f32 %v3709, 0.0
        %v3717 = vmax.f32 %v3711, 0.0
        %v3718 = vmax.f32 %v3713, 0.0
        %v3719 = vpack.c.bf16 %v3717, %v3715
        %v3720 = vpack.c.bf16 %v3718, %v3716
        %v3721 = vld [vmem:[%s1 + $0x1b8] sm:$0xf]
        %v3722 = vld [vmem:[%s1 + $0x1bc] sm:$0xf]
        %v3723 = vld [vmem:[%s2 + $0x370] sm:$0xff]
        %v3724 = vld [vmem:[%s2 + $0x378] sm:$0xff]
        %3726 = vset.pattern.permute.xlu0 0
        %3727 = vperm.xlu0 %3726, %v3723
        %v3728 = vpop.permute.xlu0 %3727
        %3731 = vset.pattern.permute.xlu0 0
        %3732 = vperm.xlu0 %3731, %v3724
        %v3733 = vpop.permute.xlu0 %3732
        %v3737 = vunpack.c.l.b16 %v3721
        %v3738 = vunpack.c.l.b16 %v3722
        %v3739 = vpack.c.b16 %v3738, %v3737
        %v3741 = vsel %vm406, %v3739, 0
        %3743 = vmatprep.subr.bf16.mxu0 0
        %3744 = vmatpush1.bf16.msra.mxu0 0
        %3745 = vmatprep.subr.bf16.mxu0 0
        %3746 = vmatpush1.bf16.msra.mxu0 0
        %3747 = vmatprep.subr.bf16.mxu0 0
        %3748 = vmatpush1.bf16.msra.mxu0 0
        %3749 = vmatprep.subr.bf16.mxu0 0
        %3750 = vmatpush1.bf16.msra.mxu0 0
        %3751 = vmatprep.subr.bf16.mxu0 0
        %3752 = vmatpush1.bf16.msra.mxu0 0
        %3753 = vmatprep.subr.bf16.mxu0 0
        %3754 = vmatpush1.bf16.msra.mxu0 0
        %3755 = vmatprep.subr.bf16.mxu0 0
        %3756 = vmatpush1.bf16.msra.mxu0 0
        %3757 = vmatprep.subr.bf16.mxu0 %v3720
        %3758 = vmatpush1.bf16.msra.mxu0 %v3719
        %3759 = vmatprep.subr.bf16.mxu0 0
        %3760 = vmatpush2.bf16.msra.mxu0 0
        %3761 = vmatprep.subr.bf16.mxu0 0
        %3762 = vmatpush2.bf16.msra.mxu0 0
        %3763 = vmatprep.subr.bf16.mxu0 0
        %3764 = vmatpush2.bf16.msra.mxu0 0
        %3765 = vmatprep.subr.bf16.mxu0 0
        %3766 = vmatpush2.bf16.msra.mxu0 0
        %3767 = vmatprep.subr.bf16.mxu0 0
        %3768 = vmatpush2.bf16.msra.mxu0 0
        %3769 = vmatprep.subr.bf16.mxu0 0
        %3770 = vmatpush2.bf16.msra.mxu0 0
        %3771 = vmatprep.subr.bf16.mxu0 0
        %3772 = vmatpush2.bf16.msra.mxu0 0
        %3773 = vmatprep.subr.bf16.mxu0 0
        %3774 = vmatpush2.bf16.msra.mxu0 0
        %3775 = vmatprep.mubr.bf16.mxu0 0
        %3776 = vmatmul.mubr.bf16.gmra.mxu0 %v3741
        %v3777 = vpop.f32.mrf.mxu0
        %v3778 = vadd.f32 %v3728, %v3777
        %v3779 = vpop.f32.mrf.mxu0
        %v3780 = vadd.f32 %v3728, %v3779
        %v3781 = vpop.f32.mrf.mxu0
        %v3782 = vadd.f32 %v3733, %v3781
        %v3783 = vpop.f32.mrf.mxu0
        %v3784 = vadd.f32 %v3733, %v3783
        %3785 = vdwg.mxu0
        %v3786 = vmax.f32 %v3778, 0.0
        %v3787 = vmax.f32 %v3780, 0.0
        %v3788 = vmax.f32 %v3782, 0.0
        %v3789 = vmax.f32 %v3784, 0.0
        %v3790 = vpack.c.bf16 %v3788, %v3786
        %v3791 = vpack.c.bf16 %v3789, %v3787
        %v3792 = vld [vmem:[%s1 + $0x1c0] sm:$0xf]
        %v3793 = vld [vmem:[%s1 + $0x1c4] sm:$0xf]
        %v3794 = vld [vmem:[%s1 + $0x1c8] sm:$0xf]
        %v3795 = vld [vmem:[%s1 + $0x1cc] sm:$0xf]
        %v3796 = vld [vmem:[%s1 + $0x1d0] sm:$0xf]
        %v3797 = vld [vmem:[%s1 + $0x1d4] sm:$0xf]
        %v3798 = vld [vmem:[%s1 + $0x1d8] sm:$0xf]
        %v3799 = vld [vmem:[%s1 + $0x1dc] sm:$0xf]
        %v3800 = vld [vmem:[%s2 + $0x380] sm:$0xff]
        %v3801 = vld [vmem:[%s2 + $0x388] sm:$0xff]
        %v3802 = vld [vmem:[%s2 + $0x390] sm:$0xff]
        %v3803 = vld [vmem:[%s2 + $0x398] sm:$0xff]
        %v3804 = vld [vmem:[%s2 + $0x3a0] sm:$0xff]
        %v3805 = vld [vmem:[%s2 + $0x3a8] sm:$0xff]
        %v3806 = vld [vmem:[%s2 + $0x3b0] sm:$0xff]
        %v3807 = vld [vmem:[%s2 + $0x3b8] sm:$0xff]
        %3809 = vset.pattern.permute.xlu0 0
        %3810 = vperm.xlu0 %3809, %v3800
        %v3811 = vpop.permute.xlu0 %3810
        %3814 = vset.pattern.permute.xlu0 0
        %3815 = vperm.xlu0 %3814, %v3801
        %v3816 = vpop.permute.xlu0 %3815
        %3819 = vset.pattern.permute.xlu0 0
        %3820 = vperm.xlu0 %3819, %v3802
        %v3821 = vpop.permute.xlu0 %3820
        %3824 = vset.pattern.permute.xlu0 0
        %3825 = vperm.xlu0 %3824, %v3803
        %v3826 = vpop.permute.xlu0 %3825
        %3829 = vset.pattern.permute.xlu0 0
        %3830 = vperm.xlu0 %3829, %v3804
        %v3831 = vpop.permute.xlu0 %3830
        %3834 = vset.pattern.permute.xlu0 0
        %3835 = vperm.xlu0 %3834, %v3805
        %v3836 = vpop.permute.xlu0 %3835
        %3839 = vset.pattern.permute.xlu0 0
        %3840 = vperm.xlu0 %3839, %v3806
        %v3841 = vpop.permute.xlu0 %3840
        %3844 = vset.pattern.permute.xlu0 0
        %3845 = vperm.xlu0 %3844, %v3807
        %v3846 = vpop.permute.xlu0 %3845
        %v3856 = vunpack.c.l.b16 %v3792
        %v3857 = vunpack.c.l.b16 %v3793
        %v3858 = vunpack.c.l.b16 %v3794
        %v3859 = vunpack.c.l.b16 %v3795
        %v3860 = vunpack.c.l.b16 %v3796
        %v3861 = vunpack.c.l.b16 %v3797
        %v3862 = vunpack.c.l.b16 %v3798
        %v3863 = vunpack.c.l.b16 %v3799
        %v3864 = vpack.c.b16 %v3857, %v3856
        %v3865 = vpack.c.b16 %v3859, %v3858
        %v3866 = vpack.c.b16 %v3861, %v3860
        %v3867 = vpack.c.b16 %v3863, %v3862
        %v3869 = vsel %vm406, %v3864, 0
        %v3872 = vsel %vm406, %v3865, 0
        %v3875 = vsel %vm406, %v3866, 0
        %v3878 = vsel %vm406, %v3867, 0
        %3880 = vmatprep.subr.bf16.mxu0 0
        %3881 = vmatpush1.bf16.msra.mxu0 0
        %3882 = vmatprep.subr.bf16.mxu0 0
        %3883 = vmatpush1.bf16.msra.mxu0 0
        %3884 = vmatprep.subr.bf16.mxu0 0
        %3885 = vmatpush1.bf16.msra.mxu0 0
        %3886 = vmatprep.subr.bf16.mxu0 0
        %3887 = vmatpush1.bf16.msra.mxu0 0
        %3888 = vmatprep.subr.bf16.mxu0 0
        %3889 = vmatpush1.bf16.msra.mxu0 0
        %3890 = vmatprep.subr.bf16.mxu0 0
        %3891 = vmatpush1.bf16.msra.mxu0 0
        %3892 = vmatprep.subr.bf16.mxu0 0
        %3893 = vmatpush1.bf16.msra.mxu0 0
        %3894 = vmatprep.subr.bf16.mxu0 %v3791
        %3895 = vmatpush1.bf16.msra.mxu0 %v3790
        %3896 = vmatprep.subr.bf16.mxu0 0
        %3897 = vmatpush2.bf16.msra.mxu0 0
        %3898 = vmatprep.subr.bf16.mxu0 0
        %3899 = vmatpush2.bf16.msra.mxu0 0
        %3900 = vmatprep.subr.bf16.mxu0 0
        %3901 = vmatpush2.bf16.msra.mxu0 0
        %3902 = vmatprep.subr.bf16.mxu0 0
        %3903 = vmatpush2.bf16.msra.mxu0 0
        %3904 = vmatprep.subr.bf16.mxu0 0
        %3905 = vmatpush2.bf16.msra.mxu0 0
        %3906 = vmatprep.subr.bf16.mxu0 0
        %3907 = vmatpush2.bf16.msra.mxu0 0
        %3908 = vmatprep.subr.bf16.mxu0 0
        %3909 = vmatpush2.bf16.msra.mxu0 0
        %3910 = vmatprep.subr.bf16.mxu0 0
        %3911 = vmatpush2.bf16.msra.mxu0 0
        %3912 = vmatprep.mubr.bf16.mxu0 0
        %3913 = vmatmul.mubr.bf16.gmra.mxu0 %v3869
        %v3914 = vpop.f32.mrf.mxu0
        %v3915 = vadd.f32 %v3811, %v3914
        %v3916 = vpop.f32.mrf.mxu0
        %v3917 = vadd.f32 %v3811, %v3916
        %v3918 = vpop.f32.mrf.mxu0
        %v3919 = vadd.f32 %v3816, %v3918
        %v3920 = vpop.f32.mrf.mxu0
        %v3921 = vadd.f32 %v3816, %v3920
        %3922 = vmatprep.mubr.bf16.mxu0 0
        %3923 = vmatmul.mubr.bf16.gmra.mxu0 %v3872
        %v3924 = vpop.f32.mrf.mxu0
        %v3925 = vadd.f32 %v3821, %v3924
        %v3926 = vpop.f32.mrf.mxu0
        %v3927 = vadd.f32 %v3821, %v3926
        %v3928 = vpop.f32.mrf.mxu0
        %v3929 = vadd.f32 %v3826, %v3928
        %v3930 = vpop.f32.mrf.mxu0
        %v3931 = vadd.f32 %v3826, %v3930
        %3932 = vmatprep.mubr.bf16.mxu0 0
        %3933 = vmatmul.mubr.bf16.gmra.mxu0 %v3875
        %v3934 = vpop.f32.mrf.mxu0
        %v3935 = vadd.f32 %v3831, %v3934
        %v3936 = vpop.f32.mrf.mxu0
        %v3937 = vadd.f32 %v3831, %v3936
        %v3938 = vpop.f32.mrf.mxu0
        %v3939 = vadd.f32 %v3836, %v3938
        %v3940 = vpop.f32.mrf.mxu0
        %v3941 = vadd.f32 %v3836, %v3940
        %3942 = vmatprep.mubr.bf16.mxu0 0
        %3943 = vmatmul.mubr.bf16.gmra.mxu0 %v3878
        %v3944 = vpop.f32.mrf.mxu0
        %v3945 = vadd.f32 %v3841, %v3944
        %v3946 = vpop.f32.mrf.mxu0
        %v3947 = vadd.f32 %v3841, %v3946
        %v3948 = vpop.f32.mrf.mxu0
        %v3949 = vadd.f32 %v3846, %v3948
        %v3950 = vpop.f32.mrf.mxu0
        %v3951 = vadd.f32 %v3846, %v3950
        %3952 = vdwg.mxu0
        %v3953 = vmax.f32 %v3915, 0.0
        %v3954 = vmax.f32 %v3917, 0.0
        %v3955 = vmax.f32 %v3919, 0.0
        %v3956 = vmax.f32 %v3921, 0.0
        %v3957 = vmax.f32 %v3925, 0.0
        %v3958 = vmax.f32 %v3927, 0.0
        %v3959 = vmax.f32 %v3929, 0.0
        %v3960 = vmax.f32 %v3931, 0.0
        %v3961 = vmax.f32 %v3935, 0.0
        %v3962 = vmax.f32 %v3937, 0.0
        %v3963 = vmax.f32 %v3939, 0.0
        %v3964 = vmax.f32 %v3941, 0.0
        %v3965 = vmax.f32 %v3945, 0.0
        %v3966 = vmax.f32 %v3947, 0.0
        %v3967 = vmax.f32 %v3949, 0.0
        %v3968 = vmax.f32 %v3951, 0.0
        %v3969 = vpack.c.bf16 %v3955, %v3953
        %v3970 = vpack.c.bf16 %v3956, %v3954
        %v3971 = vpack.c.bf16 %v3959, %v3957
        %v3972 = vpack.c.bf16 %v3960, %v3958
        %v3973 = vpack.c.bf16 %v3963, %v3961
        %v3974 = vpack.c.bf16 %v3964, %v3962
        %v3975 = vpack.c.bf16 %v3967, %v3965
        %v3976 = vpack.c.bf16 %v3968, %v3966
        %v3977 = vld [vmem:[%s1 + $0x1e0] sm:$0xf]
        %v3978 = vld [vmem:[%s1 + $0x1e4] sm:$0xf]
        %v3979 = vld [vmem:[%s1 + $0x1e8] sm:$0xf]
        %v3980 = vld [vmem:[%s1 + $0x1ec] sm:$0xf]
        %v3981 = vld [vmem:[%s1 + $0x1f0] sm:$0xf]
        %v3982 = vld [vmem:[%s1 + $0x1f4] sm:$0xf]
        %v3983 = vld [vmem:[%s1 + $0x1f8] sm:$0xf]
        %v3984 = vld [vmem:[%s1 + $0x1fc] sm:$0xf]
        %v3985 = vld [vmem:[%s1 + $0x200] sm:$0xf]
        %v3986 = vld [vmem:[%s1 + $0x204] sm:$0xf]
        %v3987 = vld [vmem:[%s1 + $0x208] sm:$0xf]
        %v3988 = vld [vmem:[%s1 + $0x20c] sm:$0xf]
        %v3989 = vld [vmem:[%s1 + $0x210] sm:$0xf]
        %v3990 = vld [vmem:[%s1 + $0x214] sm:$0xf]
        %v3991 = vld [vmem:[%s1 + $0x218] sm:$0xf]
        %v3992 = vld [vmem:[%s1 + $0x21c] sm:$0xf]
        %v3993 = vld [vmem:[%s2 + $0x3c0] sm:$0xff]
        %v3994 = vld [vmem:[%s2 + $0x3c8] sm:$0xff]
        %v3995 = vld [vmem:[%s2 + $0x3d0] sm:$0xff]
        %v3996 = vld [vmem:[%s2 + $0x3d8] sm:$0xff]
        %v3997 = vld [vmem:[%s2 + $0x3e0] sm:$0xff]
        %v3998 = vld [vmem:[%s2 + $0x3e8] sm:$0xff]
        %v3999 = vld [vmem:[%s2 + $0x3f0] sm:$0xff]
        %v4000 = vld [vmem:[%s2 + $0x3f8] sm:$0xff]
        %v4001 = vld [vmem:[%s2 + $0x400] sm:$0xff]
        %v4002 = vld [vmem:[%s2 + $0x408] sm:$0xff]
        %v4003 = vld [vmem:[%s2 + $0x410] sm:$0xff]
        %v4004 = vld [vmem:[%s2 + $0x418] sm:$0xff]
        %v4005 = vld [vmem:[%s2 + $0x420] sm:$0xff]
        %v4006 = vld [vmem:[%s2 + $0x428] sm:$0xff]
        %v4007 = vld [vmem:[%s2 + $0x430] sm:$0xff]
        %v4008 = vld [vmem:[%s2 + $0x438] sm:$0xff]
        %4010 = vset.pattern.permute.xlu0 0
        %4011 = vperm.xlu0 %4010, %v3993
        %v4012 = vpop.permute.xlu0 %4011
        %4015 = vset.pattern.permute.xlu0 0
        %4016 = vperm.xlu0 %4015, %v3994
        %v4017 = vpop.permute.xlu0 %4016
        %4020 = vset.pattern.permute.xlu0 0
        %4021 = vperm.xlu0 %4020, %v3995
        %v4022 = vpop.permute.xlu0 %4021
        %4025 = vset.pattern.permute.xlu0 0
        %4026 = vperm.xlu0 %4025, %v3996
        %v4027 = vpop.permute.xlu0 %4026
        %4030 = vset.pattern.permute.xlu0 0
        %4031 = vperm.xlu0 %4030, %v3997
        %v4032 = vpop.permute.xlu0 %4031
        %4035 = vset.pattern.permute.xlu0 0
        %4036 = vperm.xlu0 %4035, %v3998
        %v4037 = vpop.permute.xlu0 %4036
        %4040 = vset.pattern.permute.xlu0 0
        %4041 = vperm.xlu0 %4040, %v3999
        %v4042 = vpop.permute.xlu0 %4041
        %4045 = vset.pattern.permute.xlu0 0
        %4046 = vperm.xlu0 %4045, %v4000
        %v4047 = vpop.permute.xlu0 %4046
        %4050 = vset.pattern.permute.xlu0 0
        %4051 = vperm.xlu0 %4050, %v4001
        %v4052 = vpop.permute.xlu0 %4051
        %4055 = vset.pattern.permute.xlu0 0
        %4056 = vperm.xlu0 %4055, %v4002
        %v4057 = vpop.permute.xlu0 %4056
        %4060 = vset.pattern.permute.xlu0 0
        %4061 = vperm.xlu0 %4060, %v4003
        %v4062 = vpop.permute.xlu0 %4061
        %4065 = vset.pattern.permute.xlu0 0
        %4066 = vperm.xlu0 %4065, %v4004
        %v4067 = vpop.permute.xlu0 %4066
        %4070 = vset.pattern.permute.xlu0 0
        %4071 = vperm.xlu0 %4070, %v4005
        %v4072 = vpop.permute.xlu0 %4071
        %4075 = vset.pattern.permute.xlu0 0
        %4076 = vperm.xlu0 %4075, %v4006
        %v4077 = vpop.permute.xlu0 %4076
        %4080 = vset.pattern.permute.xlu0 0
        %4081 = vperm.xlu0 %4080, %v4007
        %v4082 = vpop.permute.xlu0 %4081
        %4085 = vset.pattern.permute.xlu0 0
        %4086 = vperm.xlu0 %4085, %v4008
        %v4087 = vpop.permute.xlu0 %4086
        %v4105 = vunpack.c.l.b16 %v3977
        %v4106 = vunpack.c.l.b16 %v3978
        %v4107 = vunpack.c.l.b16 %v3979
        %v4108 = vunpack.c.l.b16 %v3980
        %v4109 = vunpack.c.l.b16 %v3981
        %v4110 = vunpack.c.l.b16 %v3982
        %v4111 = vunpack.c.l.b16 %v3983
        %v4112 = vunpack.c.l.b16 %v3984
        %v4113 = vunpack.c.l.b16 %v3985
        %v4114 = vunpack.c.l.b16 %v3986
        %v4115 = vunpack.c.l.b16 %v3987
        %v4116 = vunpack.c.l.b16 %v3988
        %v4117 = vunpack.c.l.b16 %v3989
        %v4118 = vunpack.c.l.b16 %v3990
        %v4119 = vunpack.c.l.b16 %v3991
        %v4120 = vunpack.c.l.b16 %v3992
        %v4121 = vpack.c.b16 %v4106, %v4105
        %v4122 = vpack.c.b16 %v4108, %v4107
        %v4123 = vpack.c.b16 %v4110, %v4109
        %v4124 = vpack.c.b16 %v4112, %v4111
        %v4125 = vpack.c.b16 %v4114, %v4113
        %v4126 = vpack.c.b16 %v4116, %v4115
        %v4127 = vpack.c.b16 %v4118, %v4117
        %v4128 = vpack.c.b16 %v4120, %v4119
        %v4130 = vsel %vm788, %v4121, 0
        %v4133 = vsel %vm788, %v4122, 0
        %v4136 = vsel %vm788, %v4123, 0
        %v4139 = vsel %vm788, %v4124, 0
        %v4142 = vsel %vm788, %v4125, 0
        %v4145 = vsel %vm788, %v4126, 0
        %v4148 = vsel %vm788, %v4127, 0
        %v4151 = vsel %vm788, %v4128, 0
        %4153 = vmatprep.subr.bf16.mxu0 0
        %4154 = vmatpush1.bf16.msra.mxu0 0
        %4155 = vmatprep.subr.bf16.mxu0 0
        %4156 = vmatpush1.bf16.msra.mxu0 0
        %4157 = vmatprep.subr.bf16.mxu0 0
        %4158 = vmatpush1.bf16.msra.mxu0 0
        %4159 = vmatprep.subr.bf16.mxu0 0
        %4160 = vmatpush1.bf16.msra.mxu0 0
        %4161 = vmatprep.subr.bf16.mxu0 %v3976
        %4162 = vmatpush1.bf16.msra.mxu0 %v3975
        %4163 = vmatprep.subr.bf16.mxu0 %v3974
        %4164 = vmatpush1.bf16.msra.mxu0 %v3973
        %4165 = vmatprep.subr.bf16.mxu0 %v3972
        %4166 = vmatpush1.bf16.msra.mxu0 %v3971
        %4167 = vmatprep.subr.bf16.mxu0 %v3970
        %4168 = vmatpush1.bf16.msra.mxu0 %v3969
        %4169 = vmatprep.subr.bf16.mxu0 0
        %4170 = vmatpush2.bf16.msra.mxu0 0
        %4171 = vmatprep.subr.bf16.mxu0 0
        %4172 = vmatpush2.bf16.msra.mxu0 0
        %4173 = vmatprep.subr.bf16.mxu0 0
        %4174 = vmatpush2.bf16.msra.mxu0 0
        %4175 = vmatprep.subr.bf16.mxu0 0
        %4176 = vmatpush2.bf16.msra.mxu0 0
        %4177 = vmatprep.subr.bf16.mxu0 0
        %4178 = vmatpush2.bf16.msra.mxu0 0
        %4179 = vmatprep.subr.bf16.mxu0 0
        %4180 = vmatpush2.bf16.msra.mxu0 0
        %4181 = vmatprep.subr.bf16.mxu0 0
        %4182 = vmatpush2.bf16.msra.mxu0 0
        %4183 = vmatprep.subr.bf16.mxu0 0
        %4184 = vmatpush2.bf16.msra.mxu0 0
        %4185 = vmatprep.mubr.bf16.mxu0 0
        %4186 = vmatmul.mubr.bf16.gmra.mxu0 %v4130
        %v4187 = vpop.f32.mrf.mxu0
        %v4188 = vadd.f32 %v4012, %v4187
        %v4189 = vpop.f32.mrf.mxu0
        %v4190 = vadd.f32 %v4012, %v4189
        %v4191 = vpop.f32.mrf.mxu0
        %v4192 = vadd.f32 %v4017, %v4191
        %v4193 = vpop.f32.mrf.mxu0
        %v4194 = vadd.f32 %v4017, %v4193
        %4195 = vmatprep.mubr.bf16.mxu0 0
        %4196 = vmatmul.mubr.bf16.gmra.mxu0 %v4133
        %v4197 = vpop.f32.mrf.mxu0
        %v4198 = vadd.f32 %v4022, %v4197
        %v4199 = vpop.f32.mrf.mxu0
        %v4200 = vadd.f32 %v4022, %v4199
        %v4201 = vpop.f32.mrf.mxu0
        %v4202 = vadd.f32 %v4027, %v4201
        %v4203 = vpop.f32.mrf.mxu0
        %v4204 = vadd.f32 %v4027, %v4203
        %4205 = vmatprep.mubr.bf16.mxu0 0
        %4206 = vmatmul.mubr.bf16.gmra.mxu0 %v4136
        %v4207 = vpop.f32.mrf.mxu0
        %v4208 = vadd.f32 %v4032, %v4207
        %v4209 = vpop.f32.mrf.mxu0
        %v4210 = vadd.f32 %v4032, %v4209
        %v4211 = vpop.f32.mrf.mxu0
        %v4212 = vadd.f32 %v4037, %v4211
        %v4213 = vpop.f32.mrf.mxu0
        %v4214 = vadd.f32 %v4037, %v4213
        %4215 = vmatprep.mubr.bf16.mxu0 0
        %4216 = vmatmul.mubr.bf16.gmra.mxu0 %v4139
        %v4217 = vpop.f32.mrf.mxu0
        %v4218 = vadd.f32 %v4042, %v4217
        %v4219 = vpop.f32.mrf.mxu0
        %v4220 = vadd.f32 %v4042, %v4219
        %v4221 = vpop.f32.mrf.mxu0
        %v4222 = vadd.f32 %v4047, %v4221
        %v4223 = vpop.f32.mrf.mxu0
        %v4224 = vadd.f32 %v4047, %v4223
        %4225 = vmatprep.mubr.bf16.mxu0 0
        %4226 = vmatmul.mubr.bf16.gmra.mxu0 %v4142
        %v4227 = vpop.f32.mrf.mxu0
        %v4228 = vadd.f32 %v4052, %v4227
        %v4229 = vpop.f32.mrf.mxu0
        %v4230 = vadd.f32 %v4052, %v4229
        %v4231 = vpop.f32.mrf.mxu0
        %v4232 = vadd.f32 %v4057, %v4231
        %v4233 = vpop.f32.mrf.mxu0
        %v4234 = vadd.f32 %v4057, %v4233
        %4235 = vmatprep.mubr.bf16.mxu0 0
        %4236 = vmatmul.mubr.bf16.gmra.mxu0 %v4145
        %v4237 = vpop.f32.mrf.mxu0
        %v4238 = vadd.f32 %v4062, %v4237
        %v4239 = vpop.f32.mrf.mxu0
        %v4240 = vadd.f32 %v4062, %v4239
        %v4241 = vpop.f32.mrf.mxu0
        %v4242 = vadd.f32 %v4067, %v4241
        %v4243 = vpop.f32.mrf.mxu0
        %v4244 = vadd.f32 %v4067, %v4243
        %4245 = vmatprep.mubr.bf16.mxu0 0
        %4246 = vmatmul.mubr.bf16.gmra.mxu0 %v4148
        %v4247 = vpop.f32.mrf.mxu0
        %v4248 = vadd.f32 %v4072, %v4247
        %v4249 = vpop.f32.mrf.mxu0
        %v4250 = vadd.f32 %v4072, %v4249
        %v4251 = vpop.f32.mrf.mxu0
        %v4252 = vadd.f32 %v4077, %v4251
        %v4253 = vpop.f32.mrf.mxu0
        %v4254 = vadd.f32 %v4077, %v4253
        %4255 = vmatprep.mubr.bf16.mxu0 0
        %4256 = vmatmul.mubr.bf16.gmra.mxu0 %v4151
        %v4257 = vpop.f32.mrf.mxu0
        %v4258 = vadd.f32 %v4082, %v4257
        %v4259 = vpop.f32.mrf.mxu0
        %v4260 = vadd.f32 %v4082, %v4259
        %v4261 = vpop.f32.mrf.mxu0
        %v4262 = vadd.f32 %v4087, %v4261
        %v4263 = vpop.f32.mrf.mxu0
        %v4264 = vadd.f32 %v4087, %v4263
        %4265 = vdwg.mxu0
        %v4266 = vmax.f32 %v4188, 0.0
        %v4267 = vmax.f32 %v4190, 0.0
        %v4268 = vmax.f32 %v4192, 0.0
        %v4269 = vmax.f32 %v4194, 0.0
        %v4270 = vmax.f32 %v4198, 0.0
        %v4271 = vmax.f32 %v4200, 0.0
        %v4272 = vmax.f32 %v4202, 0.0
        %v4273 = vmax.f32 %v4204, 0.0
        %v4274 = vmax.f32 %v4208, 0.0
        %v4275 = vmax.f32 %v4210, 0.0
        %v4276 = vmax.f32 %v4212, 0.0
        %v4277 = vmax.f32 %v4214, 0.0
        %v4278 = vmax.f32 %v4218, 0.0
        %v4279 = vmax.f32 %v4220, 0.0
        %v4280 = vmax.f32 %v4222, 0.0
        %v4281 = vmax.f32 %v4224, 0.0
        %v4282 = vmax.f32 %v4228, 0.0
        %v4283 = vmax.f32 %v4230, 0.0
        %v4284 = vmax.f32 %v4232, 0.0
        %v4285 = vmax.f32 %v4234, 0.0
        %v4286 = vmax.f32 %v4238, 0.0
        %v4287 = vmax.f32 %v4240, 0.0
        %v4288 = vmax.f32 %v4242, 0.0
        %v4289 = vmax.f32 %v4244, 0.0
        %v4290 = vmax.f32 %v4248, 0.0
        %v4291 = vmax.f32 %v4250, 0.0
        %v4292 = vmax.f32 %v4252, 0.0
        %v4293 = vmax.f32 %v4254, 0.0
        %v4294 = vmax.f32 %v4258, 0.0
        %v4295 = vmax.f32 %v4260, 0.0
        %v4296 = vmax.f32 %v4262, 0.0
        %v4297 = vmax.f32 %v4264, 0.0
        %v4298 = vpack.c.bf16 %v4268, %v4266
        %v4299 = vpack.c.bf16 %v4269, %v4267
        %v4300 = vpack.c.bf16 %v4272, %v4270
        %v4301 = vpack.c.bf16 %v4273, %v4271
        %v4302 = vpack.c.bf16 %v4276, %v4274
        %v4303 = vpack.c.bf16 %v4277, %v4275
        %v4304 = vpack.c.bf16 %v4280, %v4278
        %v4305 = vpack.c.bf16 %v4281, %v4279
        %v4306 = vpack.c.bf16 %v4284, %v4282
        %v4307 = vpack.c.bf16 %v4285, %v4283
        %v4308 = vpack.c.bf16 %v4288, %v4286
        %v4309 = vpack.c.bf16 %v4289, %v4287
        %v4310 = vpack.c.bf16 %v4292, %v4290
        %v4311 = vpack.c.bf16 %v4293, %v4291
        %v4312 = vpack.c.bf16 %v4296, %v4294
        %v4313 = vpack.c.bf16 %v4297, %v4295
        %v4314 = vld [vmem:[%s1 + $0x220] sm:$0xf]
        %v4315 = vld [vmem:[%s1 + $0x224] sm:$0xf]
        %v4316 = vld [vmem:[%s2 + $0x440] sm:$0xff]
        %v4317 = vld [vmem:[%s2 + $0x448] sm:$0xff]
        %4319 = vset.pattern.permute.xlu0 0
        %4320 = vperm.xlu0 %4319, %v4316
        %v4321 = vpop.permute.xlu0 %4320
        %4324 = vset.pattern.permute.xlu0 0
        %4325 = vperm.xlu0 %4324, %v4317
        %v4326 = vpop.permute.xlu0 %4325
        %v4330 = vunpack.c.l.b16 %v4314
        %v4331 = vunpack.c.l.b16 %v4315
        %v4332 = vpack.c.b16 %v4331, %v4330
        %4334 = vmatprep.subr.bf16.mxu0 %v4313
        %4335 = vmatpush1.bf16.msra.mxu0 %v4312
        %4336 = vmatprep.subr.bf16.mxu0 %v4311
        %4337 = vmatpush1.bf16.msra.mxu0 %v4310
        %4338 = vmatprep.subr.bf16.mxu0 %v4309
        %4339 = vmatpush1.bf16.msra.mxu0 %v4308
        %4340 = vmatprep.subr.bf16.mxu0 %v4307
        %4341 = vmatpush1.bf16.msra.mxu0 %v4306
        %4342 = vmatprep.subr.bf16.mxu0 %v4305
        %4343 = vmatpush1.bf16.msra.mxu0 %v4304
        %4344 = vmatprep.subr.bf16.mxu0 %v4303
        %4345 = vmatpush1.bf16.msra.mxu0 %v4302
        %4346 = vmatprep.subr.bf16.mxu0 %v4301
        %4347 = vmatpush1.bf16.msra.mxu0 %v4300
        %4348 = vmatprep.subr.bf16.mxu0 %v4299
        %4349 = vmatpush1.bf16.msra.mxu0 %v4298
        %4350 = vmatprep.subr.bf16.mxu0 0
        %4351 = vmatpush2.bf16.msra.mxu0 0
        %4352 = vmatprep.subr.bf16.mxu0 0
        %4353 = vmatpush2.bf16.msra.mxu0 0
        %4354 = vmatprep.subr.bf16.mxu0 0
        %4355 = vmatpush2.bf16.msra.mxu0 0
        %4356 = vmatprep.subr.bf16.mxu0 0
        %4357 = vmatpush2.bf16.msra.mxu0 0
        %4358 = vmatprep.subr.bf16.mxu0 0
        %4359 = vmatpush2.bf16.msra.mxu0 0
        %4360 = vmatprep.subr.bf16.mxu0 0
        %4361 = vmatpush2.bf16.msra.mxu0 0
        %4362 = vmatprep.subr.bf16.mxu0 0
        %4363 = vmatpush2.bf16.msra.mxu0 0
        %4364 = vmatprep.subr.bf16.mxu0 0
        %4365 = vmatpush2.bf16.msra.mxu0 0
        %4366 = vmatprep.mubr.bf16.mxu0 0
        %4367 = vmatmul.mubr.bf16.gmra.mxu0 %v4332
        %v4368 = vpop.f32.mrf.mxu0
        %v4369 = vadd.f32 %v4321, %v4368
        %v4370 = vpop.f32.mrf.mxu0
        %v4371 = vadd.f32 %v4321, %v4370
        %v4372 = vpop.f32.mrf.mxu0
        %v4373 = vadd.f32 %v4326, %v4372
        %v4374 = vpop.f32.mrf.mxu0
        %v4375 = vadd.f32 %v4326, %v4374
        %4376 = vdwg.mxu0
        %4377 = vst [vmem:[%s244] sm:$0xff] %v4369
        %4378 = vst [vmem:[%s244 + $0x8] sm:$0xff] %v4371
        %4379 = vst [vmem:[%s244 + $0x10] sm:$0xff] %v4373
        %4380 = vst [vmem:[%s244 + $0x18] sm:$0xff] %v4375
        %s4381 = smul.u32 2, %s21
        %p4382 = scmp.lt.s32.totalorder %s20, 1
        %s4383 = scalar_select %p4382, %s20, 1
        %p4384 = scmp.lt.s32.totalorder %s4381, 1
        %s4385 = scalar_select %p4384, %s4381, 1
        %s4386 = smul.addr %s4383, 4
        %s4387 = sadd.s32 %s4385, %s4386
        %s4388 = smul.addr %s4387, 8
        %s4389 = scalar_lea.vmem %s3, %s4388
        %s4390 = sand.u32 %s136, 1
        %s4391 = sand.u32 %s136, 1
        %s4392 = smul.addr %s4391, 16
        %s4393 = scalar_lea.vmem [#allocation2], %s4392
        // Predicated region
        $region33: #{tlr_bm_net_forward.1} parent=31 // pred_check
          %p4394 = pneg %p118
        $region34: #{tlr_bm_net_forward.1} parent=31 // pred_check_branch
          %4396 = sbr.rel (%p4394) target = $region36
        $region35: #{tlr_bm_net_forward.1} parent=31 // pred_region
          %s4397 = smul.u32 2, %s21
        $region36: #{tlr_bm_net_forward.1} parent=31 // pred_fallthru
          _
        // Predicated region
        $region37: #{tlr_bm_net_forward.1} parent=31 // pred_check
          %p4398 = pneg %p146
        $region38: #{tlr_bm_net_forward.1} parent=31 // pred_check_branch
          %4400 = sbr.rel (%p4398) target = $region40
        $region39: #{tlr_bm_net_forward.1} parent=31 // pred_region
          %s4401 = smul.u32 2, %s21
          %s4402 = smul.addr %s20, 2
          %s4403 = sadd.s32 %s4401, %s4402
          %s4404 = smul.addr %s4403, 4
          %s4405 = scalar_lea.vmem %s4, %s4404
          // Predicated region
          $region41: #{tlr_bm_net_forward.1} parent=39 // pred_check
            _
          $region42: #{tlr_bm_net_forward.1} parent=39 // pred_check_branch
            %4407 = sbr.rel (0) target = $region44
          $region43: #{tlr_bm_net_forward.1} parent=39 // pred_region
            // Predicated region
            $region45: #{tlr_bm_net_forward.1} parent=43 // pred_check
              _
            $region46: #{tlr_bm_net_forward.1} parent=43 // pred_check_branch
              %4409 = sbr.rel (0) target = $region48
            $region47: #{tlr_bm_net_forward.1} parent=43 // pred_region
              // Predicated region
              $region60: #{tlr_bm_net_forward.1} parent=47 // pred_check
                _
              $region61: #{tlr_bm_net_forward.1} parent=47 // pred_check_branch
                %4427 = sbr.rel (0) target = $region63
              $region62: #{tlr_bm_net_forward.1} parent=47 // pred_region
                loop: start=0, step=1, limit=1
                $region64: #{tlr_bm_net_forward.1} parent=62 // loop_pre_header
                  _
                $region65: #{tlr_bm_net_forward.1} parent=62 // loop_header
                  %s4429 = sphi 0, %s4433
                  %p4430 = scmp.ge.s32.totalorder %s4429, 1
                  %s4434 = sphi %s4393, %s4393
                  %s4435 = sphi %s4405, %s4405
                $region66: #{tlr_bm_net_forward.1} parent=62 // loop_header_branch
                  %4432 = sbr.rel (%p4430) target = $region70
                $region67: #{tlr_bm_net_forward.1} parent=62 // loop_body
                  %v4436 = vld [vmem:[%s4434] sm:$0xff]
                  %4437 = vst [vmem:[%s4435] sm:$0xff] %v4436
                  %v4438 = vld [vmem:[%s4434 + $0x8] sm:$0xff]
                  %4439 = vst [vmem:[%s4435 + $0x10] sm:$0xff] %v4438
                $region68: #{tlr_bm_net_forward.1} parent=62 // loop_footer
                  %s4433 = sadd.s32 1, %s4429
                $region69: #{tlr_bm_net_forward.1} parent=62 // loop_footer_branch
                  %4428 = sbr.rel target = $region65
                $region70: #{tlr_bm_net_forward.1} parent=62 // loop_exit
                  _
              $region63: #{tlr_bm_net_forward.1} parent=47 // pred_fallthru
                _
              // Predicated region
              $region71: #{tlr_bm_net_forward.1} parent=47 // pred_check
                _
              $region72: #{tlr_bm_net_forward.1} parent=47 // pred_check_branch
                %4441 = sbr.rel target = $region74
              $region73: #{tlr_bm_net_forward.1} parent=47 // pred_region
                _
              $region74: #{tlr_bm_net_forward.1} parent=47 // pred_fallthru
                _
            $region48: #{tlr_bm_net_forward.1} parent=43 // pred_fallthru
              _
            // Predicated region
            $region49: #{tlr_bm_net_forward.1} parent=43 // pred_check
              _
            $region50: #{tlr_bm_net_forward.1} parent=43 // pred_check_branch
              %4411 = sbr.rel target = $region52
            $region51: #{tlr_bm_net_forward.1} parent=43 // pred_region
              %s4413 = ssub.s32 256, 1
              loop: start=0, step=1, limit=1
              $region53: #{tlr_bm_net_forward.1} parent=51 // loop_pre_header
                _
              $region54: #{tlr_bm_net_forward.1} parent=51 // loop_header
                %s4415 = sphi 0, %s4419
                %p4416 = scmp.ge.s32.totalorder %s4415, 1
                %s4420 = sphi %s4393, %s4393
                %s4421 = sphi %s4405, %s4405
              $region55: #{tlr_bm_net_forward.1} parent=51 // loop_header_branch
                %4418 = sbr.rel (%p4416) target = $region59
              $region56: #{tlr_bm_net_forward.1} parent=51 // loop_body
                %v4422 = vld [vmem:[%s4420] sm:%s4413]
                %4423 = vst [vmem:[%s4421] sm:%s4413] %v4422
                %v4424 = vld [vmem:[%s4420 + $0x8] sm:%s4413]
                %4425 = vst [vmem:[%s4421 + $0x10] sm:%s4413] %v4424
              $region57: #{tlr_bm_net_forward.1} parent=51 // loop_footer
                %s4419 = sadd.s32 1, %s4415
              $region58: #{tlr_bm_net_forward.1} parent=51 // loop_footer_branch
                %4414 = sbr.rel target = $region54
              $region59: #{tlr_bm_net_forward.1} parent=51 // loop_exit
                _
            $region52: #{tlr_bm_net_forward.1} parent=43 // pred_fallthru
              _
          $region44: #{tlr_bm_net_forward.1} parent=39 // pred_fallthru
            _
          %4442 = vnop
        $region40: #{tlr_bm_net_forward.1} parent=31 // pred_fallthru
          _
      $region32: #{tlr_bm_net_forward.1} parent=5 // pred_fallthru
        _
      %p4443 = scmp.le.s32.totalorder 2, %s11
      // Predicated region
      $region75: #{tlr_bm_net_forward.1} parent=5 // pred_check
        %p4444 = pneg %p4443
      $region76: #{tlr_bm_net_forward.1} parent=5 // pred_check_branch
        %4446 = sbr.rel (%p4444) target = $region78
      $region77: #{tlr_bm_net_forward.1} parent=5 // pred_region
        %s4447 = ssub.s32 %s11, 2
        // Predicated region
        $region79: #{tlr_bm_net_forward.1} parent=77 // pred_check
          %p4448 = pneg %p124
        $region80: #{tlr_bm_net_forward.1} parent=77 // pred_check_branch
          %4450 = sbr.rel (%p4448) target = $region82
        $region81: #{tlr_bm_net_forward.1} parent=77 // pred_region
          %s4451 = smul.u32 2, %s23
          %p4452 = scmp.lt.s32.totalorder %s22, 1
          %s4453 = scalar_select %p4452, %s22, 1
          %p4454 = scmp.lt.s32.totalorder %s4451, 1
          %s4455 = scalar_select %p4454, %s4451, 1
          %s4456 = smul.addr %s4453, 4
          %s4457 = sadd.s32 %s4455, %s4456
          %s4458 = smul.addr %s4457, 8
          %s4459 = scalar_lea.vmem %s3, %s4458
        $region82: #{tlr_bm_net_forward.1} parent=77 // pred_fallthru
          _
        // Predicated region
        $region83: #{tlr_bm_net_forward.1} parent=77 // pred_check
          %p4460 = pneg %p152
        $region84: #{tlr_bm_net_forward.1} parent=77 // pred_check_branch
          %4462 = sbr.rel (%p4460) target = $region86
        $region85: #{tlr_bm_net_forward.1} parent=77 // pred_region
          %s4463 = sand.u32 %s137, 1
          %s4464 = sand.u32 %s137, 1
          %s4465 = smul.addr %s4464, 16
          %s4466 = scalar_lea.vmem [#allocation2], %s4465
        $region86: #{tlr_bm_net_forward.1} parent=77 // pred_fallthru
          _
      $region78: #{tlr_bm_net_forward.1} parent=5 // pred_fallthru
        _
    $region6: #{tlr_bm_net_forward.1} parent=1 // loop_footer
      %s15 = sadd.s32 1, %s11
    $region7: #{tlr_bm_net_forward.1} parent=1 // loop_footer_branch
      %10 = sbr.rel target = $region3
    $region8: #{tlr_bm_net_forward.1} parent=1 // loop_exit
      _

</llo_original>
